<compile_context>
chip_gen: v7x
topology: tpu7x:2x2x1
jax: 0.10.0
libtpu: 0.0.40
codegen_flags: <defaults>
</compile_context>

<pallas_src>
import functools
import numpy as np

import jax
import jax.numpy as jnp
from jax.experimental import pallas as pl
from jax.experimental.pallas import tpu as pltpu


# ----------------------------------------------------------------------------
# Pallas kernels
# ----------------------------------------------------------------------------
def _chain_mlp_kernel(x_ref, *refs, acts):
    """Chained dense layers kept entirely in VMEM/vregs: y = actN(...act1(x@W1+b1)...)."""
    o_ref = refs[-1]
    wb = refs[:-1]
    h = x_ref[...]
    for idx, act in enumerate(acts):
        w = wb[2 * idx][...]
        b = wb[2 * idx + 1][...]
        h = jnp.dot(h, w, preferred_element_type=jnp.float32) + b
        if act == "relu":
            h = jnp.maximum(h, 0.0)
        elif act == "leaky_relu":
            h = jnp.where(h > 0, h, 0.01 * h)
    o_ref[...] = h


def mlp_pallas(x, weights, biases, acts):
    """Fused multi-layer dense stack in a single Pallas call (shapes are tiny)."""
    M = x.shape[0]
    N = weights[-1].shape[1]
    args = [x]
    in_specs = [pl.BlockSpec(x.shape, lambda i: (0, 0))]
    for w, b in zip(weights, biases):
        args += [w, b]
        in_specs += [pl.BlockSpec(w.shape, lambda i: (0, 0)),
                     pl.BlockSpec(b.shape, lambda i: (0, 0))]
    kernel = functools.partial(_chain_mlp_kernel, acts=tuple(acts))
    return pl.pallas_call(
        kernel,
        out_shape=jax.ShapeDtypeStruct((M, N), jnp.float32),
        grid=(1,),
        in_specs=in_specs,
        out_specs=pl.BlockSpec((M, N), lambda i: (0, 0)),
    )(*args)


def _graph_block_kernel(xg_ref, wm_ref, bm_ref, bns_ref, bnb_ref, mask_ref, eye_ref,
                        wt_ref, bt_ref, o_ref):
    """One MPNN block per grid step; ALL of its graphs processed with batched matmuls."""
    x = xg_ref[...]                                  # (G, M, D)
    G, M, D = x.shape
    Dout = bt_ref.shape[-1]
    eye = eye_ref[...]                               # (M, M) constant
    mask = mask_ref[0]                               # (M, M) decay mask of this block

    x2 = x.reshape(G * M, D)
    # Dot_Graph_Construction_weights: linear map then per-graph dot-product adjacency
    h = (jnp.dot(x2, wm_ref[0], preferred_element_type=jnp.float32) + bm_ref[0]).reshape(G, M, D)
    adj = jnp.einsum('gme,gne->gmn', h, h, preferred_element_type=jnp.float32)

    a = adj - 1e8 * eye                              # mask self-loops before leaky_relu
    a = jnp.where(a > 0, a, 0.01 * a)                # leaky_relu
    a = a - jnp.max(a, axis=-1, keepdims=True)       # softmax(dim=-1)
    e = jnp.exp(a)
    a = e * pl.reciprocal(jnp.sum(e, axis=-1, keepdims=True), approx=True)
    a = a * mask + eye                               # (softmax + I) * mask, diag(mask)==1

    # eval-mode BatchNorm on node features, then 1-hop message passing + output map
    xbn = (x2 * bns_ref[0] + bnb_ref[0]).reshape(G, M, D)
    agg = jnp.einsum('gmn,gnd->gmd', a, xbn, preferred_element_type=jnp.float32)
    y = jnp.dot(agg.reshape(G * M, D), wt_ref[0], preferred_element_type=jnp.float32) + bt_ref[0]
    y = jnp.where(y > 0, y, 0.01 * y)                # leaky_relu
    # TODO(synk): last dim (Dout=8) < 128 lanes -> masked store; total traffic is ~3KB so
    #             a lane-dense reshape would cost more in relayout than it saves here.
    o_ref[0] = y.reshape(G, M, Dout)


def graph_blocks_pallas(xg, wm, bm, bns, bnb, mask, eye, wt, bt):
    """Fused graph-construction + GCN propagation for `nb` MPNN blocks in one launch.

    xg: (G, M, D) shared node features; block-specific params carry a leading nb axis.
    Returns (nb, G, M, Dout)."""
    nb = wm.shape[0]
    G, M, D = xg.shape
    Dout = wt.shape[-1]
    return pl.pallas_call(
        _graph_block_kernel,
        out_shape=jax.ShapeDtypeStruct((nb, G, M, Dout), jnp.float32),
        grid=(nb,),
        in_specs=[
            pl.BlockSpec((G, M, D), lambda g: (0, 0, 0)),
            pl.BlockSpec((1, D, D), lambda g: (g, 0, 0)),
            pl.BlockSpec((1, 1, D), lambda g: (g, 0, 0)),
            pl.BlockSpec((1, 1, D), lambda g: (g, 0, 0)),
            pl.BlockSpec((1, 1, D), lambda g: (g, 0, 0)),
            pl.BlockSpec((1, M, M), lambda g: (g, 0, 0)),
            pl.BlockSpec((M, M), lambda g: (0, 0)),
            pl.BlockSpec((1, D, Dout), lambda g: (g, 0, 0)),
            pl.BlockSpec((1, 1, Dout), lambda g: (g, 0, 0)),
        ],
        out_specs=pl.BlockSpec((1, G, M, Dout), lambda g: (g, 0, 0, 0)),
        compiler_params=pltpu.CompilerParams(dimension_semantics=("parallel",)),
    )(xg, wm, bm, bns, bnb, mask, eye, wt, bt)


# ----------------------------------------------------------------------------
# Host-side helpers (init-time / outside the jitted forward)
# ----------------------------------------------------------------------------
def fft_for_period(x, k=2):
    """Host-side (called once per input batch, OUTSIDE the jitted forward)."""
    xf = jnp.fft.rfft(x, axis=1)
    amp = jnp.abs(xf)
    frequency_list = amp.mean(axis=0).mean(axis=-1)
    frequency_list = frequency_list.at[0].set(0.0)
    _, top_list = jax.lax.top_k(frequency_list, k)
    top_list = np.asarray(jax.device_get(top_list))
    top_list = np.maximum(top_list, 1)       # guard against divide-by-zero on degenerate spectra
    period = x.shape[1] // top_list
    scale_weight = amp.mean(axis=-1)[:, top_list]
    return period, scale_weight


def conv1d_to_matrix(w, L):
    """Block-Toeplitz matrix of a Conv1d(stride=1, padding=K//2, bias=False) acting on
    channel-major flattened vectors: in index ci*L+li, out index co*L+lo."""
    Cout, Cin, K = w.shape
    pad = K // 2
    T = np.zeros((Cin * L, Cout * L), np.float32)
    for co in range(Cout):
        for ci in range(Cin):
            for lo in range(L):
                for k in range(K):
                    li = lo + k - pad
                    if 0 <= li < L:
                        T[ci * L + li, co * L + lo] = w[co, ci, k]
    return T


def make_positional_encoding(d_model, max_len=5000):
    position = np.arange(max_len, dtype=np.float32)[:, None]
    div_term = np.exp(np.arange(0, d_model, 2, dtype=np.float32) * (-np.log(10000.0) / d_model))
    pe = np.zeros((max_len, d_model), np.float32)
    pe[:, 0::2] = np.sin(position * div_term)
    pe[:, 1::2] = np.cos(position * div_term)
    return jnp.asarray(pe[:, None, :])   # (max_len, 1, d_model)


def decay_mask(window, n_inner, decay):
    ti = np.repeat(np.arange(window), n_inner)
    diff = np.abs(ti[:, None] - ti[None, :]).astype(np.float32)
    return jnp.asarray(decay ** diff, jnp.float32)


# ----------------------------------------------------------------------------
# Model blocks (plain-JAX glue is shape plumbing only; all dense math is in Pallas)
# ----------------------------------------------------------------------------
def make_windows(x, window, stride):
    bs, T, N, D = x.shape
    nw = (T - window) // stride + 1
    wins = jnp.stack([x[:, i * stride:i * stride + window] for i in range(nw)], axis=1)
    return wins.reshape(bs * nw, window * N, D), nw


def pool_block(out_b, bs, nw, window, N, pool_choice):
    Dout = out_b.shape[-1]
    o = out_b.reshape(bs, nw, window, N, Dout)
    return jnp.mean(o, axis=2) if pool_choice == 0 else jnp.max(o, axis=2)


def model_forward(x_enc, x_mark_enc, x_dec, x_mark_dec, params, cfg, scale):
    """Pure, jittable forward. `scale` is the (host-known) FFT-derived period."""
    x_enc = x_enc.astype(jnp.float32)
    bs, _, num_nodes = x_enc.shape

    if cfg["seq_len"] % scale != 0:
        # TODO(synk): original PyTorch leaves A_input undefined on this branch (bug);
        #             use the zero-padded input as clearly intended.
        length = (cfg["seq_len"] // scale + 1) * scale
        padding = jnp.zeros((bs, length - cfg["seq_len"], num_nodes), x_enc.dtype)
        A_input = jnp.concatenate([x_enc, padding], axis=1)
    else:
        length = cfg["seq_len"]
        A_input = x_enc
    scale_num = length // scale

    A_input = A_input.reshape(bs, scale_num, scale, num_nodes)
    A_flat = A_input.reshape(bs * scale_num * num_nodes, scale)       # Cin=1 patches

    # nonlin_map (1D-CNN as Toeplitz matmuls) + nonlin_map2 (Linear+BN) — ONE fused kernel
    # TODO(synk): Feature_extractor_1DCNN_HAR_SSC reconstructed as two 'same' Conv+BN+ReLU.
    A_ = mlp_pallas(
        A_flat,
        [params["fe_T1"], params["fe_T2"], params["nl2_w"]],
        [params["fe_b1"], params["fe_b2"], params["nl2_b"]],
        ["relu", "relu", None],
    )                                                                  # (Nb, 2*hidden)
    A_ = A_.reshape(bs, scale_num, num_nodes, -1)

    # positional encoding (sinusoidal, eval-mode dropout = identity)
    X_ = A_ + params["pe"][:scale_num]
    X_ = X_.reshape(bs, num_nodes, scale_num, -1)                      # (bs, T, N, D)
    N = scale_num

    # TODO(synk): GraphConvpoolMPNN_block_v6 reconstructed following FC-STGNN
    #             (windowed spatio-temporal graph + 1-hop MPNN + pooling).
    same_cfg = (cfg["moving_window"][0] == cfg["moving_window"][1]
                and cfg["stride"][0] == cfg["stride"][1])
    feats = []
    if same_cfg:
        window, stride = cfg["moving_window"][0], cfg["stride"][0]
        xg, nw = make_windows(X_, window, stride)
        mask = decay_mask(window, N, cfg["decay"])
        mask_all = jnp.stack([mask, mask], axis=0)
        eye = jnp.eye(window * N, dtype=jnp.float32)
        out = graph_blocks_pallas(xg, params["mp_wm"], params["mp_bm"], params["mp_bns"],
                                  params["mp_bnb"], mask_all, eye,
                                  params["mp_wt"], params["mp_bt"])    # (2, G, M, Dout)
        for i in range(2):
            feats.append(pool_block(out[i], bs, nw, window, N,
                                    cfg["pooling_choice"]).reshape(bs, -1))
    else:
        for i in range(2):
            window, stride = cfg["moving_window"][i], cfg["stride"][i]
            xg, nw = make_windows(X_, window, stride)
            mask = decay_mask(window, N, cfg["decay"])[None]
            eye = jnp.eye(window * N, dtype=jnp.float32)
            out = graph_blocks_pallas(xg, params["mp_wm"][i:i + 1], params["mp_bm"][i:i + 1],
                                      params["mp_bns"][i:i + 1], params["mp_bnb"][i:i + 1],
                                      mask, eye, params["mp_wt"][i:i + 1],
                                      params["mp_bt"][i:i + 1])
            feats.append(pool_block(out[0], bs, nw, window, N,
                                    cfg["pooling_choice"]).reshape(bs, -1))

    features = jnp.concatenate(feats, axis=-1)

    # fused 4-layer FC head
    return mlp_pallas(
        features,
        [params["fc1_w"], params["fc2_w"], params["fc3_w"], params["fc4_w"]],
        [params["fc1_b"], params["fc2_b"], params["fc3_b"], params["fc4_b"]],
        ["relu", "relu", "relu", None],
    )


# ----------------------------------------------------------------------------
# Deterministic parameter init (eval-mode BN folded, biases pre-reshaped to (1, N))
# ----------------------------------------------------------------------------
def init_params(cfg, conv_out, fc_in):
    key = jax.random.PRNGKey(0)
    keys = jax.random.split(key, 20)
    f32 = jnp.float32
    H, LO, HD = cfg["lstmhidden_dim"], cfg["lstmout_dim"], cfg["hidden_dim"]
    K = cfg["conv_kernel"]
    d2 = 2 * HD
    L = conv_out

    def w(k, shape, s=0.1):
        return (s * jax.random.normal(k, shape)).astype(f32)

    # eval-mode BN with running_mean=0, running_var=1, gamma=1, beta=0
    def bn(dim):
        g = np.ones((dim,), np.float32) / np.sqrt(1.0 + 1e-5)
        s = np.zeros((dim,), np.float32)
        return g, s

    p = {}
    # feature extractor: convs -> block-Toeplitz matrices with BN folded in
    w1 = np.asarray(w(keys[0], (H, 1, K)))
    w2 = np.asarray(w(keys[1], (LO, H, K)))
    g1, s1 = bn(H)
    g2, s2 = bn(LO)
    p["fe_T1"] = jnp.asarray(conv1d_to_matrix(w1, L) * np.repeat(g1, L)[None, :])
    p["fe_b1"] = jnp.asarray(np.repeat(s1, L)[None, :])
    p["fe_T2"] = jnp.asarray(conv1d_to_matrix(w2, L) * np.repeat(g2, L)[None, :])
    p["fe_b2"] = jnp.asarray(np.repeat(s2, L)[None, :])

    # nonlin_map2: Linear + BatchNorm1d folded
    g3, s3 = bn(d2)
    nl2_w = np.asarray(w(keys[2], (LO * conv_out, d2)))
    nl2_b = np.zeros((d2,), np.float32)
    p["nl2_w"] = jnp.asarray(nl2_w * g3[None, :])
    p["nl2_b"] = jnp.asarray((nl2_b * g3 + s3)[None, :])

    p["pe"] = make_positional_encoding(d2)

    # MPNN blocks: parameters stacked along a leading block axis (indexed by grid step)
    wm, bm, bns, bnb, wt, bt = [], [], [], [], [], []
    for i in range(2):
        wm.append(w(keys[3 + 4 * i], (d2, d2)))
        bm.append(jnp.zeros((1, d2), f32))
        g, s = bn(d2)
        bns.append(jnp.asarray(g)[None, :])
        bnb.append(jnp.asarray(s)[None, :])
        wt.append(w(keys[4 + 4 * i], (d2, HD)))
        bt.append(jnp.zeros((1, HD), f32))
    p["mp_wm"] = jnp.stack(wm)
    p["mp_bm"] = jnp.stack(bm)
    p["mp_bns"] = jnp.stack(bns)
    p["mp_bnb"] = jnp.stack(bnb)
    p["mp_wt"] = jnp.stack(wt)
    p["mp_bt"] = jnp.stack(bt)

    p["fc1_w"] = w(keys[12], (fc_in, d2)); p["fc1_b"] = jnp.zeros((1, d2), f32)
    p["fc2_w"] = w(keys[13], (d2, d2));    p["fc2_b"] = jnp.zeros((1, d2), f32)
    p["fc3_w"] = w(keys[14], (d2, HD));    p["fc3_b"] = jnp.zeros((1, HD), f32)
    p["fc4_w"] = w(keys[15], (HD, cfg["n_class"]))
    p["fc4_b"] = jnp.zeros((1, cfg["n_class"]), f32)
    return p


# ----------------------------------------------------------------------------
if __name__ == "__main__":
    cfg = dict(
        seq_len=16, num_nodes=4, top_k=2,
        lstmhidden_dim=8, lstmout_dim=8, conv_kernel=3,
        hidden_dim=8, moving_window=[2, 2], stride=[1, 1],
        decay=0.7, pooling_choice=0, n_class=5, num_windows=6,
    )
    bs = 2

    # deterministic input with a dominant frequency at bin 4 -> scale = seq_len // 4 = 4
    key = jax.random.PRNGKey(0)
    k1, k2 = jax.random.split(key)
    t = jnp.arange(cfg["seq_len"], dtype=jnp.float32)
    base = jnp.sin(2.0 * jnp.pi * 4.0 * t / cfg["seq_len"])
    x_enc = (base[None, :, None] * (1.0 + 0.1 * jax.random.normal(k1, (bs, 1, cfg["num_nodes"])))
             + 0.05 * jax.random.normal(k2, (bs, cfg["seq_len"], cfg["num_nodes"]))).astype(jnp.float32)
    x_mark_enc = jnp.zeros((bs, cfg["seq_len"], 1), jnp.float32)   # unused in forward
    x_dec = jnp.zeros((bs, cfg["seq_len"], cfg["num_nodes"]), jnp.float32)
    x_mark_dec = jnp.zeros((bs, cfg["seq_len"], 1), jnp.float32)

    # FFT-derived static sizes, computed ONCE on host (outside the jitted forward)
    period, _ = fft_for_period(x_enc, cfg["top_k"])
    scale = int(period[0])
    length = cfg["seq_len"] if cfg["seq_len"] % scale == 0 else (cfg["seq_len"] // scale + 1) * scale
    scale_num = length // scale
    conv_out = scale                       # 'same' convs keep the patch length
    nw_total = sum((cfg["num_nodes"] - w) // s + 1
                   for w, s in zip(cfg["moving_window"], cfg["stride"]))
    fc_in = cfg["hidden_dim"] * nw_total * scale_num
    assert fc_in == cfg["hidden_dim"] * cfg["num_windows"] * cfg["num_nodes"], "config mismatch"

    params = init_params(cfg, conv_out, fc_in)

    fwd = jax.jit(functools.partial(model_forward, cfg=cfg, scale=scale))
    out = fwd(x_enc, x_mark_enc, x_dec, x_mark_dec, params)
    out = jax.block_until_ready(out)
    assert out.shape == (bs, cfg["n_class"]) and bool(jnp.all(jnp.isfinite(out)))
    print("KERNEL_OK")
</pallas_src>

<mosaic_0001>
module attributes {stable_mosaic.version = 11 : i64} {
  func.func @_graph_block_kernel(%arg0: i32, %arg1: memref<6x8x16xf32, #tpu.memory_space<vmem>>, %arg2: memref<1x16x16xf32, #tpu.memory_space<vmem>>, %arg3: memref<1x1x16xf32, #tpu.memory_space<vmem>>, %arg4: memref<1x1x16xf32, #tpu.memory_space<vmem>>, %arg5: memref<1x1x16xf32, #tpu.memory_space<vmem>>, %arg6: memref<1x8x8xf32, #tpu.memory_space<vmem>>, %arg7: memref<8x8xf32, #tpu.memory_space<vmem>>, %arg8: memref<1x16x8xf32, #tpu.memory_space<vmem>>, %arg9: memref<1x1x8xf32, #tpu.memory_space<vmem>>, %arg10: memref<1x6x8x8xf32, #tpu.memory_space<vmem>>) attributes {dimension_semantics = [#tpu.dimension_semantics<parallel>], iteration_bounds = array<i64: 2>, scalar_prefetch = 0 : i64, scratch_operands = 0 : i64, tpu.core_type = #tpu.core_type<tc>, window_params = [{pipeline_mode = #tpu.pipeline_mode<synchronous>, transform_indices = @transform_0, window_bounds = array<i64: 6, 8, 16>}, {transform_indices = @transform_1, window_bounds = array<i64: 1, 16, 16>}, {transform_indices = @transform_2, window_bounds = array<i64: 1, 1, 16>}, {transform_indices = @transform_3, window_bounds = array<i64: 1, 1, 16>}, {transform_indices = @transform_4, window_bounds = array<i64: 1, 1, 16>}, {transform_indices = @transform_5, window_bounds = array<i64: 1, 8, 8>}, {pipeline_mode = #tpu.pipeline_mode<synchronous>, transform_indices = @transform_6, window_bounds = array<i64: 8, 8>}, {transform_indices = @transform_7, window_bounds = array<i64: 1, 16, 8>}, {transform_indices = @transform_8, window_bounds = array<i64: 1, 1, 8>}, {transform_indices = @transform_9, window_bounds = array<i64: 1, 6, 8, 8>}]} {
    %c0 = arith.constant 0 : index
    %c0_0 = arith.constant 0 : index
    %c0_1 = arith.constant 0 : index
    %0 = vector.load %arg1[%c0, %c0_0, %c0_1] : memref<6x8x16xf32, #tpu.memory_space<vmem>>, vector<6x8x16xf32>
    %c0_2 = arith.constant 0 : index
    %c0_3 = arith.constant 0 : index
    %1 = vector.load %arg7[%c0_2, %c0_3] : memref<8x8xf32, #tpu.memory_space<vmem>>, vector<8x8xf32>
    %c0_4 = arith.constant 0 : index
    %c0_5 = arith.constant 0 : index
    %c0_6 = arith.constant 0 : index
    %2 = vector.load %arg6[%c0_4, %c0_5, %c0_6] : memref<1x8x8xf32, #tpu.memory_space<vmem>>, vector<1x8x8xf32>
    %3 = vector.shape_cast %2 : vector<1x8x8xf32> to vector<8x8xf32>
    %4 = vector.shape_cast %0 : vector<6x8x16xf32> to vector<48x16xf32>
    %c0_7 = arith.constant 0 : index
    %c0_8 = arith.constant 0 : index
    %c0_9 = arith.constant 0 : index
    %5 = vector.load %arg2[%c0_7, %c0_8, %c0_9] : memref<1x16x16xf32, #tpu.memory_space<vmem>>, vector<1x16x16xf32>
    %6 = vector.shape_cast %5 : vector<1x16x16xf32> to vector<16x16xf32>
    %cst = arith.constant dense<0.000000e+00> : vector<48x16xf32>
    %7 = tpu.matmul %4, %6, %cst {dimension_numbers = #tpu.dot_dimension_numbers<[1], [0], [0], [1], [0, 0, 1, 1], [], []>} : vector<48x16xf32>, vector<16x16xf32>, vector<48x16xf32> -> vector<48x16xf32>
    %c0_10 = arith.constant 0 : index
    %c0_11 = arith.constant 0 : index
    %c0_12 = arith.constant 0 : index
    %8 = vector.load %arg3[%c0_10, %c0_11, %c0_12] : memref<1x1x16xf32, #tpu.memory_space<vmem>>, vector<1x1x16xf32>
    %9 = vector.shape_cast %8 : vector<1x1x16xf32> to vector<1x16xf32>
    %10 = vector.broadcast %9 : vector<1x16xf32> to vector<48x16xf32>
    %11 = arith.addf %7, %10 : vector<48x16xf32>
    %12 = vector.shape_cast %11 : vector<48x16xf32> to vector<6x8x16xf32>
    "tpu.trace_start"() <{level = 10 : i32, message = "gme,gne->gmn"}> : () -> ()
    %cst_13 = arith.constant dense<0.000000e+00> : vector<6x8x8xf32>
    %13 = tpu.matmul %12, %12, %cst_13 {dimension_numbers = #tpu.dot_dimension_numbers<[2], [2], [1], [1], [0, 0, 0, 1, 1, 1], [0], [0]>} : vector<6x8x16xf32>, vector<6x8x16xf32>, vector<6x8x8xf32> -> vector<6x8x8xf32>
    "tpu.trace_stop"() : () -> ()
    %cst_14 = arith.constant 1.000000e+08 : f32
    %14 = vector.broadcast %cst_14 : f32 to vector<8x8xf32>
    %15 = arith.mulf %14, %1 : vector<8x8xf32>
    %16 = vector.shape_cast %15 : vector<8x8xf32> to vector<1x8x8xf32>
    %17 = vector.broadcast %16 : vector<1x8x8xf32> to vector<6x8x8xf32>
    %18 = arith.subf %13, %17 : vector<6x8x8xf32>
    %cst_15 = arith.constant 0.000000e+00 : f32
    %19 = vector.broadcast %cst_15 : f32 to vector<6x8x8xf32>
    %20 = arith.cmpf ogt, %18, %19 : vector<6x8x8xf32>
    %cst_16 = arith.constant 0.00999999977 : f32
    %21 = vector.broadcast %cst_16 : f32 to vector<6x8x8xf32>
    %22 = arith.mulf %21, %18 : vector<6x8x8xf32>
    %23 = arith.select %20, %18, %22 : vector<6x8x8xi1>, vector<6x8x8xf32>
    %cst_17 = arith.constant dense<0xFF800000> : vector<6x8xf32>
    %24 = vector.multi_reduction <maximumf>, %23, %cst_17 [2] : vector<6x8x8xf32> to vector<6x8xf32>
    %25 = vector.shape_cast %24 : vector<6x8xf32> to vector<6x8x1xf32>
    %26 = vector.broadcast %25 : vector<6x8x1xf32> to vector<6x8x8xf32>
    %27 = arith.subf %23, %26 : vector<6x8x8xf32>
    %28 = math.exp %27 : vector<6x8x8xf32>
    %cst_18 = arith.constant dense<0.000000e+00> : vector<6x8xf32>
    %29 = vector.multi_reduction <add>, %28, %cst_18 [2] : vector<6x8x8xf32> to vector<6x8xf32>
    %30 = vector.shape_cast %29 : vector<6x8xf32> to vector<6x8x1xf32>
    %31 = tpu.reciprocal %30 {approx = true} : vector<6x8x1xf32> -> vector<6x8x1xf32>
    %32 = vector.broadcast %31 : vector<6x8x1xf32> to vector<6x8x8xf32>
    %33 = arith.mulf %28, %32 : vector<6x8x8xf32>
    %34 = vector.shape_cast %3 : vector<8x8xf32> to vector<1x8x8xf32>
    %35 = vector.broadcast %34 : vector<1x8x8xf32> to vector<6x8x8xf32>
    %36 = arith.mulf %33, %35 : vector<6x8x8xf32>
    %37 = vector.shape_cast %1 : vector<8x8xf32> to vector<1x8x8xf32>
    %38 = vector.broadcast %37 : vector<1x8x8xf32> to vector<6x8x8xf32>
    %39 = arith.addf %36, %38 : vector<6x8x8xf32>
    %c0_19 = arith.constant 0 : index
    %c0_20 = arith.constant 0 : index
    %c0_21 = arith.constant 0 : index
    %40 = vector.load %arg4[%c0_19, %c0_20, %c0_21] : memref<1x1x16xf32, #tpu.memory_space<vmem>>, vector<1x1x16xf32>
    %41 = vector.shape_cast %40 : vector<1x1x16xf32> to vector<1x16xf32>
    %42 = vector.broadcast %41 : vector<1x16xf32> to vector<48x16xf32>
    %43 = arith.mulf %4, %42 : vector<48x16xf32>
    %c0_22 = arith.constant 0 : index
    %c0_23 = arith.constant 0 : index
    %c0_24 = arith.constant 0 : index
    %44 = vector.load %arg5[%c0_22, %c0_23, %c0_24] : memref<1x1x16xf32, #tpu.memory_space<vmem>>, vector<1x1x16xf32>
    %45 = vector.shape_cast %44 : vector<1x1x16xf32> to vector<1x16xf32>
    %46 = vector.broadcast %45 : vector<1x16xf32> to vector<48x16xf32>
    %47 = arith.addf %43, %46 : vector<48x16xf32>
    %48 = vector.shape_cast %47 : vector<48x16xf32> to vector<6x8x16xf32>
    "tpu.trace_start"() <{level = 10 : i32, message = "gmn,gnd->gmd"}> : () -> ()
    %cst_25 = arith.constant dense<0.000000e+00> : vector<6x8x16xf32>
    %49 = tpu.matmul %39, %48, %cst_25 {dimension_numbers = #tpu.dot_dimension_numbers<[2], [1], [1], [2], [0, 0, 0, 1, 1, 2], [0], [0]>} : vector<6x8x8xf32>, vector<6x8x16xf32>, vector<6x8x16xf32> -> vector<6x8x16xf32>
    "tpu.trace_stop"() : () -> ()
    %50 = vector.shape_cast %49 : vector<6x8x16xf32> to vector<48x16xf32>
    %c0_26 = arith.constant 0 : index
    %c0_27 = arith.constant 0 : index
    %c0_28 = arith.constant 0 : index
    %51 = vector.load %arg8[%c0_26, %c0_27, %c0_28] : memref<1x16x8xf32, #tpu.memory_space<vmem>>, vector<1x16x8xf32>
    %52 = vector.shape_cast %51 : vector<1x16x8xf32> to vector<16x8xf32>
    %cst_29 = arith.constant dense<0.000000e+00> : vector<48x8xf32>
    %53 = tpu.matmul %50, %52, %cst_29 {dimension_numbers = #tpu.dot_dimension_numbers<[1], [0], [0], [1], [0, 0, 1, 1], [], []>} : vector<48x16xf32>, vector<16x8xf32>, vector<48x8xf32> -> vector<48x8xf32>
    %c0_30 = arith.constant 0 : index
    %c0_31 = arith.constant 0 : index
    %c0_32 = arith.constant 0 : index
    %54 = vector.load %arg9[%c0_30, %c0_31, %c0_32] : memref<1x1x8xf32, #tpu.memory_space<vmem>>, vector<1x1x8xf32>
    %55 = vector.shape_cast %54 : vector<1x1x8xf32> to vector<1x8xf32>
    %56 = vector.broadcast %55 : vector<1x8xf32> to vector<48x8xf32>
    %57 = arith.addf %53, %56 : vector<48x8xf32>
    %cst_33 = arith.constant 0.000000e+00 : f32
    %58 = vector.broadcast %cst_33 : f32 to vector<48x8xf32>
    %59 = arith.cmpf ogt, %57, %58 : vector<48x8xf32>
    %cst_34 = arith.constant 0.00999999977 : f32
    %60 = vector.broadcast %cst_34 : f32 to vector<48x8xf32>
    %61 = arith.mulf %60, %57 : vector<48x8xf32>
    %62 = arith.select %59, %57, %61 : vector<48x8xi1>, vector<48x8xf32>
    %63 = vector.shape_cast %62 : vector<48x8xf32> to vector<6x8x8xf32>
    %c0_35 = arith.constant 0 : index
    %c0_36 = arith.constant 0 : index
    %c0_37 = arith.constant 0 : index
    %c0_38 = arith.constant 0 : index
    %64 = vector.load %arg10[%c0_35, %c0_36, %c0_37, %c0_38] : memref<1x6x8x8xf32, #tpu.memory_space<vmem>>, vector<1x6x8x8xf32>
    %65 = vector.shape_cast %64 : vector<1x6x8x8xf32> to vector<6x8x8xf32>
    %66 = vector.shape_cast %63 : vector<6x8x8xf32> to vector<1x6x8x8xf32>
    tpu.vector_store %arg10[%c0_35, %c0_36, %c0_37, %c0_38], %66 {strides = array<i32>} : memref<1x6x8x8xf32, #tpu.memory_space<vmem>>, vector<1x6x8x8xf32>,
    return
  }
  func.func @transform_0(%arg0: i32) -> (i32, i32, i32) {
    %c0_i32 = arith.constant 0 : i32
    %c0_i32_0 = arith.constant 0 : i32
    %c0_i32_1 = arith.constant 0 : i32
    %c0_i32_2 = arith.constant 0 : i32
    return %c0_i32, %c0_i32_0, %c0_i32_1 : i32, i32, i32
  }
  func.func @transform_1(%arg0: i32) -> (i32, i32, i32) {
    %c0_i32 = arith.constant 0 : i32
    %c0_i32_0 = arith.constant 0 : i32
    %c0_i32_1 = arith.constant 0 : i32
    return %arg0, %c0_i32, %c0_i32_0 : i32, i32, i32
  }
  func.func @transform_2(%arg0: i32) -> (i32, i32, i32) {
    %c0_i32 = arith.constant 0 : i32
    %c0_i32_0 = arith.constant 0 : i32
    %c0_i32_1 = arith.constant 0 : i32
    return %arg0, %c0_i32, %c0_i32_0 : i32, i32, i32
  }
  func.func @transform_3(%arg0: i32) -> (i32, i32, i32) {
    %c0_i32 = arith.constant 0 : i32
    %c0_i32_0 = arith.constant 0 : i32
    %c0_i32_1 = arith.constant 0 : i32
    return %arg0, %c0_i32, %c0_i32_0 : i32, i32, i32
  }
  func.func @transform_4(%arg0: i32) -> (i32, i32, i32) {
    %c0_i32 = arith.constant 0 : i32
    %c0_i32_0 = arith.constant 0 : i32
    %c0_i32_1 = arith.constant 0 : i32
    return %arg0, %c0_i32, %c0_i32_0 : i32, i32, i32
  }
  func.func @transform_5(%arg0: i32) -> (i32, i32, i32) {
    %c0_i32 = arith.constant 0 : i32
    %c0_i32_0 = arith.constant 0 : i32
    %c0_i32_1 = arith.constant 0 : i32
    return %arg0, %c0_i32, %c0_i32_0 : i32, i32, i32
  }
  func.func @transform_6(%arg0: i32) -> (i32, i32) {
    %c0_i32 = arith.constant 0 : i32
    %c0_i32_0 = arith.constant 0 : i32
    %c0_i32_1 = arith.constant 0 : i32
    return %c0_i32, %c0_i32_0 : i32, i32
  }
  func.func @transform_7(%arg0: i32) -> (i32, i32, i32) {
    %c0_i32 = arith.constant 0 : i32
    %c0_i32_0 = arith.constant 0 : i32
    %c0_i32_1 = arith.constant 0 : i32
    return %arg0, %c0_i32, %c0_i32_0 : i32, i32, i32
  }
  func.func @transform_8(%arg0: i32) -> (i32, i32, i32) {
    %c0_i32 = arith.constant 0 : i32
    %c0_i32_0 = arith.constant 0 : i32
    %c0_i32_1 = arith.constant 0 : i32
    return %arg0, %c0_i32, %c0_i32_0 : i32, i32, i32
  }
  func.func @transform_9(%arg0: i32) -> (i32, i32, i32, i32) {
    %c0_i32 = arith.constant 0 : i32
    %c0_i32_0 = arith.constant 0 : i32
    %c0_i32_1 = arith.constant 0 : i32
    %c0_i32_2 = arith.constant 0 : i32
    return %arg0, %c0_i32, %c0_i32_0, %c0_i32_1 : i32, i32, i32, i32
  }
}

module attributes {stable_mosaic.version = 11 : i64} {
  func.func @_chain_mlp_kernel(%arg0: i32, %arg1: memref<32x4xf32, #tpu.memory_space<vmem>>, %arg2: memref<4x32xf32, #tpu.memory_space<vmem>>, %arg3: memref<1x32xf32, #tpu.memory_space<vmem>>, %arg4: memref<32x32xf32, #tpu.memory_space<vmem>>, %arg5: memref<1x32xf32, #tpu.memory_space<vmem>>, %arg6: memref<32x16xf32, #tpu.memory_space<vmem>>, %arg7: memref<1x16xf32, #tpu.memory_space<vmem>>, %arg8: memref<32x16xf32, #tpu.memory_space<vmem>>) attributes {dimension_semantics = [#tpu.dimension_semantics<arbitrary>], iteration_bounds = array<i64: 1>, scalar_prefetch = 0 : i64, scratch_operands = 0 : i64, tpu.core_type = #tpu.core_type<tc>, window_params = [{pipeline_mode = #tpu.pipeline_mode<synchronous>, transform_indices = @transform_0, window_bounds = array<i64: 32, 4>}, {pipeline_mode = #tpu.pipeline_mode<synchronous>, transform_indices = @transform_1, window_bounds = array<i64: 4, 32>}, {pipeline_mode = #tpu.pipeline_mode<synchronous>, transform_indices = @transform_2, window_bounds = array<i64: 1, 32>}, {pipeline_mode = #tpu.pipeline_mode<synchronous>, transform_indices = @transform_3, window_bounds = array<i64: 32, 32>}, {pipeline_mode = #tpu.pipeline_mode<synchronous>, transform_indices = @transform_4, window_bounds = array<i64: 1, 32>}, {pipeline_mode = #tpu.pipeline_mode<synchronous>, transform_indices = @transform_5, window_bounds = array<i64: 32, 16>}, {pipeline_mode = #tpu.pipeline_mode<synchronous>, transform_indices = @transform_6, window_bounds = array<i64: 1, 16>}, {pipeline_mode = #tpu.pipeline_mode<synchronous>, transform_indices = @transform_7, window_bounds = array<i64: 32, 16>}]} {
    %c0 = arith.constant 0 : index
    %c0_0 = arith.constant 0 : index
    %0 = vector.load %arg1[%c0, %c0_0] : memref<32x4xf32, #tpu.memory_space<vmem>>, vector<32x4xf32>
    %c0_1 = arith.constant 0 : index
    %c0_2 = arith.constant 0 : index
    %1 = vector.load %arg2[%c0_1, %c0_2] : memref<4x32xf32, #tpu.memory_space<vmem>>, vector<4x32xf32>
    %c0_3 = arith.constant 0 : index
    %c0_4 = arith.constant 0 : index
    %2 = vector.load %arg3[%c0_3, %c0_4] : memref<1x32xf32, #tpu.memory_space<vmem>>, vector<1x32xf32>
    %cst = arith.constant dense<0.000000e+00> : vector<32x32xf32>
    %3 = tpu.matmul %0, %1, %cst {dimension_numbers = #tpu.dot_dimension_numbers<[1], [0], [0], [1], [0, 0, 1, 1], [], []>} : vector<32x4xf32>, vector<4x32xf32>, vector<32x32xf32> -> vector<32x32xf32>
    %4 = vector.broadcast %2 : vector<1x32xf32> to vector<32x32xf32>
    %5 = arith.addf %3, %4 : vector<32x32xf32>
    %cst_5 = arith.constant 0.000000e+00 : f32
    %6 = vector.broadcast %cst_5 : f32 to vector<32x32xf32>
    %7 = arith.maximumf %5, %6 : vector<32x32xf32>
    %c0_6 = arith.constant 0 : index
    %c0_7 = arith.constant 0 : index
    %8 = vector.load %arg4[%c0_6, %c0_7] : memref<32x32xf32, #tpu.memory_space<vmem>>, vector<32x32xf32>
    %c0_8 = arith.constant 0 : index
    %c0_9 = arith.constant 0 : index
    %9 = vector.load %arg5[%c0_8, %c0_9] : memref<1x32xf32, #tpu.memory_space<vmem>>, vector<1x32xf32>
    %cst_10 = arith.constant dense<0.000000e+00> : vector<32x32xf32>
    %10 = tpu.matmul %7, %8, %cst_10 {dimension_numbers = #tpu.dot_dimension_numbers<[1], [0], [0], [1], [0, 0, 1, 1], [], []>} : vector<32x32xf32>, vector<32x32xf32>, vector<32x32xf32> -> vector<32x32xf32>
    %11 = vector.broadcast %9 : vector<1x32xf32> to vector<32x32xf32>
    %12 = arith.addf %10, %11 : vector<32x32xf32>
    %cst_11 = arith.constant 0.000000e+00 : f32
    %13 = vector.broadcast %cst_11 : f32 to vector<32x32xf32>
    %14 = arith.maximumf %12, %13 : vector<32x32xf32>
    %c0_12 = arith.constant 0 : index
    %c0_13 = arith.constant 0 : index
    %15 = vector.load %arg6[%c0_12, %c0_13] : memref<32x16xf32, #tpu.memory_space<vmem>>, vector<32x16xf32>
    %c0_14 = arith.constant 0 : index
    %c0_15 = arith.constant 0 : index
    %16 = vector.load %arg7[%c0_14, %c0_15] : memref<1x16xf32, #tpu.memory_space<vmem>>, vector<1x16xf32>
    %cst_16 = arith.constant dense<0.000000e+00> : vector<32x16xf32>
    %17 = tpu.matmul %14, %15, %cst_16 {dimension_numbers = #tpu.dot_dimension_numbers<[1], [0], [0], [1], [0, 0, 1, 1], [], []>} : vector<32x32xf32>, vector<32x16xf32>, vector<32x16xf32> -> vector<32x16xf32>
    %18 = vector.broadcast %16 : vector<1x16xf32> to vector<32x16xf32>
    %19 = arith.addf %17, %18 : vector<32x16xf32>
    %c0_17 = arith.constant 0 : index
    %c0_18 = arith.constant 0 : index
    %20 = vector.load %arg8[%c0_17, %c0_18] : memref<32x16xf32, #tpu.memory_space<vmem>>, vector<32x16xf32>
    tpu.vector_store %arg8[%c0_17, %c0_18], %19 {strides = array<i32>} : memref<32x16xf32, #tpu.memory_space<vmem>>, vector<32x16xf32>,
    return
  }
  func.func @transform_0(%arg0: i32) -> (i32, i32) {
    %c0_i32 = arith.constant 0 : i32
    %c0_i32_0 = arith.constant 0 : i32
    %c0_i32_1 = arith.constant 0 : i32
    return %c0_i32, %c0_i32_0 : i32, i32
  }
  func.func @transform_1(%arg0: i32) -> (i32, i32) {
    %c0_i32 = arith.constant 0 : i32
    %c0_i32_0 = arith.constant 0 : i32
    %c0_i32_1 = arith.constant 0 : i32
    return %c0_i32, %c0_i32_0 : i32, i32
  }
  func.func @transform_2(%arg0: i32) -> (i32, i32) {
    %c0_i32 = arith.constant 0 : i32
    %c0_i32_0 = arith.constant 0 : i32
    %c0_i32_1 = arith.constant 0 : i32
    return %c0_i32, %c0_i32_0 : i32, i32
  }
  func.func @transform_3(%arg0: i32) -> (i32, i32) {
    %c0_i32 = arith.constant 0 : i32
    %c0_i32_0 = arith.constant 0 : i32
    %c0_i32_1 = arith.constant 0 : i32
    return %c0_i32, %c0_i32_0 : i32, i32
  }
  func.func @transform_4(%arg0: i32) -> (i32, i32) {
    %c0_i32 = arith.constant 0 : i32
    %c0_i32_0 = arith.constant 0 : i32
    %c0_i32_1 = arith.constant 0 : i32
    return %c0_i32, %c0_i32_0 : i32, i32
  }
  func.func @transform_5(%arg0: i32) -> (i32, i32) {
    %c0_i32 = arith.constant 0 : i32
    %c0_i32_0 = arith.constant 0 : i32
    %c0_i32_1 = arith.constant 0 : i32
    return %c0_i32, %c0_i32_0 : i32, i32
  }
  func.func @transform_6(%arg0: i32) -> (i32, i32) {
    %c0_i32 = arith.constant 0 : i32
    %c0_i32_0 = arith.constant 0 : i32
    %c0_i32_1 = arith.constant 0 : i32
    return %c0_i32, %c0_i32_0 : i32, i32
  }
  func.func @transform_7(%arg0: i32) -> (i32, i32) {
    %c0_i32 = arith.constant 0 : i32
    %c0_i32_0 = arith.constant 0 : i32
    %c0_i32_1 = arith.constant 0 : i32
    return %c0_i32, %c0_i32_0 : i32, i32
  }
}

module attributes {stable_mosaic.version = 11 : i64} {
  func.func @_chain_mlp_kernel(%arg0: i32, %arg1: memref<2x192xf32, #tpu.memory_space<vmem>>, %arg2: memref<192x16xf32, #tpu.memory_space<vmem>>, %arg3: memref<1x16xf32, #tpu.memory_space<vmem>>, %arg4: memref<16x16xf32, #tpu.memory_space<vmem>>, %arg5: memref<1x16xf32, #tpu.memory_space<vmem>>, %arg6: memref<16x8xf32, #tpu.memory_space<vmem>>, %arg7: memref<1x8xf32, #tpu.memory_space<vmem>>, %arg8: memref<8x5xf32, #tpu.memory_space<vmem>>, %arg9: memref<1x5xf32, #tpu.memory_space<vmem>>, %arg10: memref<2x5xf32, #tpu.memory_space<vmem>>) attributes {dimension_semantics = [#tpu.dimension_semantics<arbitrary>], iteration_bounds = array<i64: 1>, scalar_prefetch = 0 : i64, scratch_operands = 0 : i64, tpu.core_type = #tpu.core_type<tc>, window_params = [{pipeline_mode = #tpu.pipeline_mode<synchronous>, transform_indices = @transform_0, window_bounds = array<i64: 2, 192>}, {pipeline_mode = #tpu.pipeline_mode<synchronous>, transform_indices = @transform_1, window_bounds = array<i64: 192, 16>}, {pipeline_mode = #tpu.pipeline_mode<synchronous>, transform_indices = @transform_2, window_bounds = array<i64: 1, 16>}, {pipeline_mode = #tpu.pipeline_mode<synchronous>, transform_indices = @transform_3, window_bounds = array<i64: 16, 16>}, {pipeline_mode = #tpu.pipeline_mode<synchronous>, transform_indices = @transform_4, window_bounds = array<i64: 1, 16>}, {pipeline_mode = #tpu.pipeline_mode<synchronous>, transform_indices = @transform_5, window_bounds = array<i64: 16, 8>}, {pipeline_mode = #tpu.pipeline_mode<synchronous>, transform_indices = @transform_6, window_bounds = array<i64: 1, 8>}, {pipeline_mode = #tpu.pipeline_mode<synchronous>, transform_indices = @transform_7, window_bounds = array<i64: 8, 5>}, {pipeline_mode = #tpu.pipeline_mode<synchronous>, transform_indices = @transform_8, window_bounds = array<i64: 1, 5>}, {pipeline_mode = #tpu.pipeline_mode<synchronous>, transform_indices = @transform_9, window_bounds = array<i64: 2, 5>}]} {
    %c0 = arith.constant 0 : index
    %c0_0 = arith.constant 0 : index
    %0 = vector.load %arg1[%c0, %c0_0] : memref<2x192xf32, #tpu.memory_space<vmem>>, vector<2x192xf32>
    %c0_1 = arith.constant 0 : index
    %c0_2 = arith.constant 0 : index
    %1 = vector.load %arg2[%c0_1, %c0_2] : memref<192x16xf32, #tpu.memory_space<vmem>>, vector<192x16xf32>
    %c0_3 = arith.constant 0 : index
    %c0_4 = arith.constant 0 : index
    %2 = vector.load %arg3[%c0_3, %c0_4] : memref<1x16xf32, #tpu.memory_space<vmem>>, vector<1x16xf32>
    %cst = arith.constant dense<0.000000e+00> : vector<2x16xf32>
    %3 = tpu.matmul %0, %1, %cst {dimension_numbers = #tpu.dot_dimension_numbers<[1], [0], [0], [1], [0, 0, 1, 1], [], []>} : vector<2x192xf32>, vector<192x16xf32>, vector<2x16xf32> -> vector<2x16xf32>
    %4 = vector.broadcast %2 : vector<1x16xf32> to vector<2x16xf32>
    %5 = arith.addf %3, %4 : vector<2x16xf32>
    %cst_5 = arith.constant 0.000000e+00 : f32
    %6 = vector.broadcast %cst_5 : f32 to vector<2x16xf32>
    %7 = arith.maximumf %5, %6 : vector<2x16xf32>
    %c0_6 = arith.constant 0 : index
    %c0_7 = arith.constant 0 : index
    %8 = vector.load %arg4[%c0_6, %c0_7] : memref<16x16xf32, #tpu.memory_space<vmem>>, vector<16x16xf32>
    %c0_8 = arith.constant 0 : index
    %c0_9 = arith.constant 0 : index
    %9 = vector.load %arg5[%c0_8, %c0_9] : memref<1x16xf32, #tpu.memory_space<vmem>>, vector<1x16xf32>
    %cst_10 = arith.constant dense<0.000000e+00> : vector<2x16xf32>
    %10 = tpu.matmul %7, %8, %cst_10 {dimension_numbers = #tpu.dot_dimension_numbers<[1], [0], [0], [1], [0, 0, 1, 1], [], []>} : vector<2x16xf32>, vector<16x16xf32>, vector<2x16xf32> -> vector<2x16xf32>
    %11 = vector.broadcast %9 : vector<1x16xf32> to vector<2x16xf32>
    %12 = arith.addf %10, %11 : vector<2x16xf32>
    %cst_11 = arith.constant 0.000000e+00 : f32
    %13 = vector.broadcast %cst_11 : f32 to vector<2x16xf32>
    %14 = arith.maximumf %12, %13 : vector<2x16xf32>
    %c0_12 = arith.constant 0 : index
    %c0_13 = arith.constant 0 : index
    %15 = vector.load %arg6[%c0_12, %c0_13] : memref<16x8xf32, #tpu.memory_space<vmem>>, vector<16x8xf32>
    %c0_14 = arith.constant 0 : index
    %c0_15 = arith.constant 0 : index
    %16 = vector.load %arg7[%c0_14, %c0_15] : memref<1x8xf32, #tpu.memory_space<vmem>>, vector<1x8xf32>
    %cst_16 = arith.constant dense<0.000000e+00> : vector<2x8xf32>
    %17 = tpu.matmul %14, %15, %cst_16 {dimension_numbers = #tpu.dot_dimension_numbers<[1], [0], [0], [1], [0, 0, 1, 1], [], []>} : vector<2x16xf32>, vector<16x8xf32>, vector<2x8xf32> -> vector<2x8xf32>
    %18 = vector.broadcast %16 : vector<1x8xf32> to vector<2x8xf32>
    %19 = arith.addf %17, %18 : vector<2x8xf32>
    %cst_17 = arith.constant 0.000000e+00 : f32
    %20 = vector.broadcast %cst_17 : f32 to vector<2x8xf32>
    %21 = arith.maximumf %19, %20 : vector<2x8xf32>
    %c0_18 = arith.constant 0 : index
    %c0_19 = arith.constant 0 : index
    %22 = vector.load %arg8[%c0_18, %c0_19] : memref<8x5xf32, #tpu.memory_space<vmem>>, vector<8x5xf32>
    %c0_20 = arith.constant 0 : index
    %c0_21 = arith.constant 0 : index
    %23 = vector.load %arg9[%c0_20, %c0_21] : memref<1x5xf32, #tpu.memory_space<vmem>>, vector<1x5xf32>
    %cst_22 = arith.constant dense<0.000000e+00> : vector<2x5xf32>
    %24 = tpu.matmul %21, %22, %cst_22 {dimension_numbers = #tpu.dot_dimension_numbers<[1], [0], [0], [1], [0, 0, 1, 1], [], []>} : vector<2x8xf32>, vector<8x5xf32>, vector<2x5xf32> -> vector<2x5xf32>
    %25 = vector.broadcast %23 : vector<1x5xf32> to vector<2x5xf32>
    %26 = arith.addf %24, %25 : vector<2x5xf32>
    %c0_23 = arith.constant 0 : index
    %c0_24 = arith.constant 0 : index
    %27 = vector.load %arg10[%c0_23, %c0_24] : memref<2x5xf32, #tpu.memory_space<vmem>>, vector<2x5xf32>
    tpu.vector_store %arg10[%c0_23, %c0_24], %26 {strides = array<i32>} : memref<2x5xf32, #tpu.memory_space<vmem>>, vector<2x5xf32>,
    return
  }
  func.func @transform_0(%arg0: i32) -> (i32, i32) {
    %c0_i32 = arith.constant 0 : i32
    %c0_i32_0 = arith.constant 0 : i32
    %c0_i32_1 = arith.constant 0 : i32
    return %c0_i32, %c0_i32_0 : i32, i32
  }
  func.func @transform_1(%arg0: i32) -> (i32, i32) {
    %c0_i32 = arith.constant 0 : i32
    %c0_i32_0 = arith.constant 0 : i32
    %c0_i32_1 = arith.constant 0 : i32
    return %c0_i32, %c0_i32_0 : i32, i32
  }
  func.func @transform_2(%arg0: i32) -> (i32, i32) {
    %c0_i32 = arith.constant 0 : i32
    %c0_i32_0 = arith.constant 0 : i32
    %c0_i32_1 = arith.constant 0 : i32
    return %c0_i32, %c0_i32_0 : i32, i32
  }
  func.func @transform_3(%arg0: i32) -> (i32, i32) {
    %c0_i32 = arith.constant 0 : i32
    %c0_i32_0 = arith.constant 0 : i32
    %c0_i32_1 = arith.constant 0 : i32
    return %c0_i32, %c0_i32_0 : i32, i32
  }
  func.func @transform_4(%arg0: i32) -> (i32, i32) {
    %c0_i32 = arith.constant 0 : i32
    %c0_i32_0 = arith.constant 0 : i32
    %c0_i32_1 = arith.constant 0 : i32
    return %c0_i32, %c0_i32_0 : i32, i32
  }
  func.func @transform_5(%arg0: i32) -> (i32, i32) {
    %c0_i32 = arith.constant 0 : i32
    %c0_i32_0 = arith.constant 0 : i32
    %c0_i32_1 = arith.constant 0 : i32
    return %c0_i32, %c0_i32_0 : i32, i32
  }
  func.func @transform_6(%arg0: i32) -> (i32, i32) {
    %c0_i32 = arith.constant 0 : i32
    %c0_i32_0 = arith.constant 0 : i32
    %c0_i32_1 = arith.constant 0 : i32
    return %c0_i32, %c0_i32_0 : i32, i32
  }
  func.func @transform_7(%arg0: i32) -> (i32, i32) {
    %c0_i32 = arith.constant 0 : i32
    %c0_i32_0 = arith.constant 0 : i32
    %c0_i32_1 = arith.constant 0 : i32
    return %c0_i32, %c0_i32_0 : i32, i32
  }
  func.func @transform_8(%arg0: i32) -> (i32, i32) {
    %c0_i32 = arith.constant 0 : i32
    %c0_i32_0 = arith.constant 0 : i32
    %c0_i32_1 = arith.constant 0 : i32
    return %c0_i32, %c0_i32_0 : i32, i32
  }
  func.func @transform_9(%arg0: i32) -> (i32, i32) {
    %c0_i32 = arith.constant 0 : i32
    %c0_i32_0 = arith.constant 0 : i32
    %c0_i32_1 = arith.constant 0 : i32
    return %c0_i32, %c0_i32_0 : i32, i32
  }
}

</mosaic_0001>

<llo_original>
// kernel: model_forward.3
$region0: #{model_forward.3}
  #allocation0 [shape = 'u32[]', space=smem, size = 0x4, offset = 0x4, fixed_abs, tag = 'smem constant byte address 0x4 - core index']
  #allocation1 [shape = 'u32[144,128]{1,0:T(1,128)}', space=vmem, size = 0x12000, scoped, tag = 'internal scratch']
  %s0 = inlined_call_operand.vmem [shape: f32[32,4], index: 0, kind: input, shape index: {}]
  %s1 = inlined_call_operand.vmem [shape: f32[4,32], index: 1, kind: input, shape index: {}]
  %s2 = inlined_call_operand.vmem [shape: f32[1,32], index: 2, kind: input, shape index: {}]
  %s3 = inlined_call_operand.vmem [shape: f32[32,32], index: 3, kind: input, shape index: {}]
  %s4 = inlined_call_operand.vmem [shape: f32[1,32], index: 4, kind: input, shape index: {}]
  %s5 = inlined_call_operand.vmem [shape: f32[32,16], index: 5, kind: input, shape index: {}]
  %s6 = inlined_call_operand.vmem [shape: f32[1,16], index: 6, kind: input, shape index: {}]
  %s7 = inlined_call_operand.vmem [shape: f32[32,16], index: 7, kind: output, shape index: {}]
  %s8 = sld [smem:[#allocation0]]
  $region38: #{model_forward.3} parent=0
    _
  %s10 = ssub.s32 1, %s8
  %s11 = scalar_select 0, %s10, %s8
  // Predicated region
  $region2: #{model_forward.3} parent=0 // pred_check
    _
  $region3: #{model_forward.3} parent=0 // pred_check_branch
    %13 = sbr.rel (0) target = $region5
  $region4: #{model_forward.3} parent=0 // pred_region
    _
  $region5: #{model_forward.3} parent=0 // pred_fallthru
    _
  // Predicated region
  $region6: #{model_forward.3} parent=0 // pred_check
    _
  $region7: #{model_forward.3} parent=0 // pred_check_branch
    %15 = sbr.rel (0) target = $region9
  $region8: #{model_forward.3} parent=0 // pred_region
    _
  $region9: #{model_forward.3} parent=0 // pred_fallthru
    _
  // Predicated region
  $region10: #{model_forward.3} parent=0 // pred_check
    _
  $region11: #{model_forward.3} parent=0 // pred_check_branch
    %17 = sbr.rel (0) target = $region13
  $region12: #{model_forward.3} parent=0 // pred_region
    _
  $region13: #{model_forward.3} parent=0 // pred_fallthru
    _
  // Predicated region
  $region14: #{model_forward.3} parent=0 // pred_check
    _
  $region15: #{model_forward.3} parent=0 // pred_check_branch
    %19 = sbr.rel (0) target = $region17
  $region16: #{model_forward.3} parent=0 // pred_region
    _
  $region17: #{model_forward.3} parent=0 // pred_fallthru
    _
  // Predicated region
  $region18: #{model_forward.3} parent=0 // pred_check
    _
  $region19: #{model_forward.3} parent=0 // pred_check_branch
    %21 = sbr.rel (0) target = $region21
  $region20: #{model_forward.3} parent=0 // pred_region
    _
  $region21: #{model_forward.3} parent=0 // pred_fallthru
    _
  // Predicated region
  $region22: #{model_forward.3} parent=0 // pred_check
    _
  $region23: #{model_forward.3} parent=0 // pred_check_branch
    %23 = sbr.rel (0) target = $region25
  $region24: #{model_forward.3} parent=0 // pred_region
    _
  $region25: #{model_forward.3} parent=0 // pred_fallthru
    _
  // Predicated region
  $region26: #{model_forward.3} parent=0 // pred_check
    _
  $region27: #{model_forward.3} parent=0 // pred_check_branch
    %25 = sbr.rel (0) target = $region29
  $region28: #{model_forward.3} parent=0 // pred_region
    _
  $region29: #{model_forward.3} parent=0 // pred_fallthru
    _
  %v26 = vld [vmem:[%s0] sm:$0xff]
  %v27 = vld [vmem:[%s0 + $0x8] sm:$0xff]
  %v28 = vld [vmem:[%s0 + $0x10] sm:$0xff]
  %v29 = vld [vmem:[%s0 + $0x18] sm:$0xff]
  %v30 = vld [vmem:[%s1] sm:$0xf]
  %v31 = vld [vmem:[%s2] sm:$0x1]
  %v33 = vlaneseq
  %v34 = vshrl.u32 %v33, 7
  %v35 = vsub.s32 0, %v34
  %v36 = vrot.slane %v31, %v35
  %vm38 = vcmask 31744
  %v40 = vsel %vm38, %v26, 0
  %v43 = vsel %vm38, %v27, 0
  %v46 = vsel %vm38, %v28, 0
  %v49 = vsel %vm38, %v29, 0
  %vm51 = vcmask 1043456
  %v53 = vsel %vm51, %v30, 0
  %55 = vmatprep.subr.mxu0 0.0
  %56 = vmatpush1.msra.mxu0 %v53
  %57 = vmatprep.subr.mxu0 0.0
  %58 = vmatpush1.msra.mxu0 0.0
  %59 = vmatprep.subr.mxu0 0.0
  %60 = vmatpush1.msra.mxu0 0.0
  %61 = vmatprep.subr.mxu0 0.0
  %62 = vmatpush1.msra.mxu0 0.0
  %63 = vmatprep.subr.mxu0 0.0
  %64 = vmatpush1.msra.mxu0 0.0
  %65 = vmatprep.subr.mxu0 0.0
  %66 = vmatpush1.msra.mxu0 0.0
  %67 = vmatprep.subr.mxu0 0.0
  %68 = vmatpush1.msra.mxu0 0.0
  %69 = vmatprep.subr.mxu0 0.0
  %70 = vmatpush1.msra.mxu0 0.0
  %71 = vmatprep.subr.mxu0 0.0
  %72 = vmatpush1.msra.mxu0 0.0
  %73 = vmatprep.subr.mxu0 0.0
  %74 = vmatpush1.msra.mxu0 0.0
  %75 = vmatprep.subr.mxu0 0.0
  %76 = vmatpush1.msra.mxu0 0.0
  %77 = vmatprep.subr.mxu0 0.0
  %78 = vmatpush1.msra.mxu0 0.0
  %79 = vmatprep.subr.mxu0 0.0
  %80 = vmatpush1.msra.mxu0 0.0
  %81 = vmatprep.subr.mxu0 0.0
  %82 = vmatpush1.msra.mxu0 0.0
  %83 = vmatprep.subr.mxu0 0.0
  %84 = vmatpush1.msra.mxu0 0.0
  %85 = vmatprep.subr.mxu0 0.0
  %86 = vmatpush1.msra.mxu0 0.0
  %87 = vmatprep.subr.mxu0 0.0
  %88 = vmatpush1.msra.mxu0 0.0
  %89 = vmatprep.subr.mxu0 0.0
  %90 = vmatpush1.msra.mxu0 0.0
  %91 = vmatprep.subr.mxu0 0.0
  %92 = vmatpush1.msra.mxu0 0.0
  %93 = vmatprep.subr.mxu0 0.0
  %94 = vmatpush1.msra.mxu0 0.0
  %95 = vmatprep.subr.mxu0 0.0
  %96 = vmatpush1.msra.mxu0 0.0
  %97 = vmatprep.subr.mxu0 0.0
  %98 = vmatpush1.msra.mxu0 0.0
  %99 = vmatprep.subr.mxu0 0.0
  %100 = vmatpush1.msra.mxu0 0.0
  %101 = vmatprep.subr.mxu0 0.0
  %102 = vmatpush1.msra.mxu0 0.0
  %103 = vmatprep.subr.mxu0 0.0
  %104 = vmatpush1.msra.mxu0 0.0
  %105 = vmatprep.subr.mxu0 0.0
  %106 = vmatpush1.msra.mxu0 0.0
  %107 = vmatprep.subr.mxu0 0.0
  %108 = vmatpush1.msra.mxu0 0.0
  %109 = vmatprep.subr.mxu0 0.0
  %110 = vmatpush1.msra.mxu0 0.0
  %111 = vmatprep.subr.mxu0 0.0
  %112 = vmatpush1.msra.mxu0 0.0
  %113 = vmatprep.subr.mxu0 0.0
  %114 = vmatpush1.msra.mxu0 0.0
  %115 = vmatprep.subr.mxu0 0.0
  %116 = vmatpush1.msra.mxu0 0.0
  %117 = vmatprep.subr.mxu0 0.0
  %118 = vmatpush1.msra.mxu0 0.0
  %119 = vmatprep.mubr.f32.mxu0 0.0
  %120 = vmatmul.mubr.f32.gmra.mrb[0].mxu0 %v40
  %v121 = vpop.f32.mrb[0].mxu0
  %v122 = vadd.f32 %v36, %v121
  %v123 = vpop.f32.mrb[0].mxu0
  %124 = vmatprep.mubr.f32.mxu0 0.0
  %125 = vmatmul.mubr.f32.gmra.mrb[0].mxu0 %v43
  %v126 = vpop.f32.mrb[0].mxu0
  %v127 = vadd.f32 %v36, %v126
  %v128 = vpop.f32.mrb[0].mxu0
  %129 = vmatprep.mubr.f32.mxu0 0.0
  %130 = vmatmul.mubr.f32.gmra.mrb[0].mxu0 %v46
  %v131 = vpop.f32.mrb[0].mxu0
  %v132 = vadd.f32 %v36, %v131
  %v133 = vpop.f32.mrb[0].mxu0
  %134 = vmatprep.mubr.f32.mxu0 0.0
  %135 = vmatmul.mubr.f32.gmra.mrb[0].mxu0 %v49
  %v136 = vpop.f32.mrb[0].mxu0
  %v137 = vadd.f32 %v36, %v136
  %v138 = vpop.f32.mrb[0].mxu0
  %139 = vdwg.mxu0
  %v140 = vmax.f32 %v122, 0.0
  %v141 = vmax.f32 %v127, 0.0
  %v142 = vmax.f32 %v132, 0.0
  %v143 = vmax.f32 %v137, 0.0
  %v144 = vld [vmem:[%s3] sm:$0xff]
  %v145 = vld [vmem:[%s3 + $0x8] sm:$0xff]
  %v146 = vld [vmem:[%s3 + $0x10] sm:$0xff]
  %v147 = vld [vmem:[%s3 + $0x18] sm:$0xff]
  %v148 = vld [vmem:[%s4] sm:$0x1]
  %v150 = vlaneseq
  %v151 = vshrl.u32 %v150, 7
  %v152 = vsub.s32 0, %v151
  %v153 = vrot.slane %v148, %v152
  %vm155 = vcmask 261120
  %v157 = vsel %vm155, %v140, 0
  %v160 = vsel %vm155, %v141, 0
  %v163 = vsel %vm155, %v142, 0
  %v166 = vsel %vm155, %v143, 0
  %168 = vmatprep.subr.mxu0 0.0
  %169 = vmatpush1.msra.mxu0 %v144
  %170 = vmatprep.subr.mxu0 0.0
  %171 = vmatpush1.msra.mxu0 %v145
  %172 = vmatprep.subr.mxu0 0.0
  %173 = vmatpush1.msra.mxu0 %v146
  %174 = vmatprep.subr.mxu0 0.0
  %175 = vmatpush1.msra.mxu0 %v147
  %176 = vmatprep.subr.mxu0 0.0
  %177 = vmatpush1.msra.mxu0 0.0
  %178 = vmatprep.subr.mxu0 0.0
  %179 = vmatpush1.msra.mxu0 0.0
  %180 = vmatprep.subr.mxu0 0.0
  %181 = vmatpush1.msra.mxu0 0.0
  %182 = vmatprep.subr.mxu0 0.0
  %183 = vmatpush1.msra.mxu0 0.0
  %184 = vmatprep.subr.mxu0 0.0
  %185 = vmatpush1.msra.mxu0 0.0
  %186 = vmatprep.subr.mxu0 0.0
  %187 = vmatpush1.msra.mxu0 0.0
  %188 = vmatprep.subr.mxu0 0.0
  %189 = vmatpush1.msra.mxu0 0.0
  %190 = vmatprep.subr.mxu0 0.0
  %191 = vmatpush1.msra.mxu0 0.0
  %192 = vmatprep.subr.mxu0 0.0
  %193 = vmatpush1.msra.mxu0 0.0
  %194 = vmatprep.subr.mxu0 0.0
  %195 = vmatpush1.msra.mxu0 0.0
  %196 = vmatprep.subr.mxu0 0.0
  %197 = vmatpush1.msra.mxu0 0.0
  %198 = vmatprep.subr.mxu0 0.0
  %199 = vmatpush1.msra.mxu0 0.0
  %200 = vmatprep.subr.mxu0 0.0
  %201 = vmatpush1.msra.mxu0 0.0
  %202 = vmatprep.subr.mxu0 0.0
  %203 = vmatpush1.msra.mxu0 0.0
  %204 = vmatprep.subr.mxu0 0.0
  %205 = vmatpush1.msra.mxu0 0.0
  %206 = vmatprep.subr.mxu0 0.0
  %207 = vmatpush1.msra.mxu0 0.0
  %208 = vmatprep.subr.mxu0 0.0
  %209 = vmatpush1.msra.mxu0 0.0
  %210 = vmatprep.subr.mxu0 0.0
  %211 = vmatpush1.msra.mxu0 0.0
  %212 = vmatprep.subr.mxu0 0.0
  %213 = vmatpush1.msra.mxu0 0.0
  %214 = vmatprep.subr.mxu0 0.0
  %215 = vmatpush1.msra.mxu0 0.0
  %216 = vmatprep.subr.mxu0 0.0
  %217 = vmatpush1.msra.mxu0 0.0
  %218 = vmatprep.subr.mxu0 0.0
  %219 = vmatpush1.msra.mxu0 0.0
  %220 = vmatprep.subr.mxu0 0.0
  %221 = vmatpush1.msra.mxu0 0.0
  %222 = vmatprep.subr.mxu0 0.0
  %223 = vmatpush1.msra.mxu0 0.0
  %224 = vmatprep.subr.mxu0 0.0
  %225 = vmatpush1.msra.mxu0 0.0
  %226 = vmatprep.subr.mxu0 0.0
  %227 = vmatpush1.msra.mxu0 0.0
  %228 = vmatprep.subr.mxu0 0.0
  %229 = vmatpush1.msra.mxu0 0.0
  %230 = vmatprep.subr.mxu0 0.0
  %231 = vmatpush1.msra.mxu0 0.0
  %232 = vmatprep.mubr.f32.mxu0 0.0
  %233 = vmatmul.mubr.f32.gmra.mrb[0].mxu0 %v157
  %v234 = vpop.f32.mrb[0].mxu0
  %v235 = vadd.f32 %v153, %v234
  %v236 = vpop.f32.mrb[0].mxu0
  %237 = vmatprep.mubr.f32.mxu0 0.0
  %238 = vmatmul.mubr.f32.gmra.mrb[0].mxu0 %v160
  %v239 = vpop.f32.mrb[0].mxu0
  %v240 = vadd.f32 %v153, %v239
  %v241 = vpop.f32.mrb[0].mxu0
  %242 = vmatprep.mubr.f32.mxu0 0.0
  %243 = vmatmul.mubr.f32.gmra.mrb[0].mxu0 %v163
  %v244 = vpop.f32.mrb[0].mxu0
  %v245 = vadd.f32 %v153, %v244
  %v246 = vpop.f32.mrb[0].mxu0
  %247 = vmatprep.mubr.f32.mxu0 0.0
  %248 = vmatmul.mubr.f32.gmra.mrb[0].mxu0 %v166
  %v249 = vpop.f32.mrb[0].mxu0
  %v250 = vadd.f32 %v153, %v249
  %v251 = vpop.f32.mrb[0].mxu0
  %252 = vdwg.mxu0
  %v253 = vmax.f32 %v235, 0.0
  %v254 = vmax.f32 %v240, 0.0
  %v255 = vmax.f32 %v245, 0.0
  %v256 = vmax.f32 %v250, 0.0
  %v257 = vld [vmem:[%s5] sm:$0xff]
  %v258 = vld [vmem:[%s5 + $0x8] sm:$0xff]
  %v259 = vld [vmem:[%s5 + $0x10] sm:$0xff]
  %v260 = vld [vmem:[%s5 + $0x18] sm:$0xff]
  %v261 = vld [vmem:[%s6] sm:$0x1]
  %v263 = vlaneseq
  %v264 = vshrl.u32 %v263, 7
  %v265 = vsub.s32 0, %v264
  %v266 = vrot.slane %v261, %v265
  %v269 = vsel %vm155, %v253, 0
  %v272 = vsel %vm155, %v254, 0
  %v275 = vsel %vm155, %v255, 0
  %v278 = vsel %vm155, %v256, 0
  %280 = vmatprep.subr.mxu0 0.0
  %281 = vmatpush1.msra.mxu0 %v257
  %282 = vmatprep.subr.mxu0 0.0
  %283 = vmatpush1.msra.mxu0 %v258
  %284 = vmatprep.subr.mxu0 0.0
  %285 = vmatpush1.msra.mxu0 %v259
  %286 = vmatprep.subr.mxu0 0.0
  %287 = vmatpush1.msra.mxu0 %v260
  %288 = vmatprep.subr.mxu0 0.0
  %289 = vmatpush1.msra.mxu0 0.0
  %290 = vmatprep.subr.mxu0 0.0
  %291 = vmatpush1.msra.mxu0 0.0
  %292 = vmatprep.subr.mxu0 0.0
  %293 = vmatpush1.msra.mxu0 0.0
  %294 = vmatprep.subr.mxu0 0.0
  %295 = vmatpush1.msra.mxu0 0.0
  %296 = vmatprep.subr.mxu0 0.0
  %297 = vmatpush1.msra.mxu0 0.0
  %298 = vmatprep.subr.mxu0 0.0
  %299 = vmatpush1.msra.mxu0 0.0
  %300 = vmatprep.subr.mxu0 0.0
  %301 = vmatpush1.msra.mxu0 0.0
  %302 = vmatprep.subr.mxu0 0.0
  %303 = vmatpush1.msra.mxu0 0.0
  %304 = vmatprep.subr.mxu0 0.0
  %305 = vmatpush1.msra.mxu0 0.0
  %306 = vmatprep.subr.mxu0 0.0
  %307 = vmatpush1.msra.mxu0 0.0
  %308 = vmatprep.subr.mxu0 0.0
  %309 = vmatpush1.msra.mxu0 0.0
  %310 = vmatprep.subr.mxu0 0.0
  %311 = vmatpush1.msra.mxu0 0.0
  %312 = vmatprep.subr.mxu0 0.0
  %313 = vmatpush1.msra.mxu0 0.0
  %314 = vmatprep.subr.mxu0 0.0
  %315 = vmatpush1.msra.mxu0 0.0
  %316 = vmatprep.subr.mxu0 0.0
  %317 = vmatpush1.msra.mxu0 0.0
  %318 = vmatprep.subr.mxu0 0.0
  %319 = vmatpush1.msra.mxu0 0.0
  %320 = vmatprep.subr.mxu0 0.0
  %321 = vmatpush1.msra.mxu0 0.0
  %322 = vmatprep.subr.mxu0 0.0
  %323 = vmatpush1.msra.mxu0 0.0
  %324 = vmatprep.subr.mxu0 0.0
  %325 = vmatpush1.msra.mxu0 0.0
  %326 = vmatprep.subr.mxu0 0.0
  %327 = vmatpush1.msra.mxu0 0.0
  %328 = vmatprep.subr.mxu0 0.0
  %329 = vmatpush1.msra.mxu0 0.0
  %330 = vmatprep.subr.mxu0 0.0
  %331 = vmatpush1.msra.mxu0 0.0
  %332 = vmatprep.subr.mxu0 0.0
  %333 = vmatpush1.msra.mxu0 0.0
  %334 = vmatprep.subr.mxu0 0.0
  %335 = vmatpush1.msra.mxu0 0.0
  %336 = vmatprep.subr.mxu0 0.0
  %337 = vmatpush1.msra.mxu0 0.0
  %338 = vmatprep.subr.mxu0 0.0
  %339 = vmatpush1.msra.mxu0 0.0
  %340 = vmatprep.subr.mxu0 0.0
  %341 = vmatpush1.msra.mxu0 0.0
  %342 = vmatprep.subr.mxu0 0.0
  %343 = vmatpush1.msra.mxu0 0.0
  %344 = vmatprep.mubr.f32.mxu0 0.0
  %345 = vmatmul.mubr.f32.gmra.mrb[0].mxu0 %v269
  %v346 = vpop.f32.mrb[0].mxu0
  %v347 = vadd.f32 %v266, %v346
  %v348 = vpop.f32.mrb[0].mxu0
  %349 = vmatprep.mubr.f32.mxu0 0.0
  %350 = vmatmul.mubr.f32.gmra.mrb[0].mxu0 %v272
  %v351 = vpop.f32.mrb[0].mxu0
  %v352 = vadd.f32 %v266, %v351
  %v353 = vpop.f32.mrb[0].mxu0
  %354 = vmatprep.mubr.f32.mxu0 0.0
  %355 = vmatmul.mubr.f32.gmra.mrb[0].mxu0 %v275
  %v356 = vpop.f32.mrb[0].mxu0
  %v357 = vadd.f32 %v266, %v356
  %v358 = vpop.f32.mrb[0].mxu0
  %359 = vmatprep.mubr.f32.mxu0 0.0
  %360 = vmatmul.mubr.f32.gmra.mrb[0].mxu0 %v278
  %v361 = vpop.f32.mrb[0].mxu0
  %v362 = vadd.f32 %v266, %v361
  %v363 = vpop.f32.mrb[0].mxu0
  %364 = vdwg.mxu0
  %vm365 = vcmask 130048
  %366 = vst.msk [vmem:[%s7] sm:$0xff] %vm365, %v347
  %367 = vst.msk [vmem:[%s7 + $0x8] sm:$0xff] %vm365, %v352
  %368 = vst.msk [vmem:[%s7 + $0x10] sm:$0xff] %vm365, %v357
  %369 = vst.msk [vmem:[%s7 + $0x18] sm:$0xff] %vm365, %v362
  // Predicated region
  $region30: #{model_forward.3} parent=0 // pred_check
    _
  $region31: #{model_forward.3} parent=0 // pred_check_branch
    %371 = sbr.rel (0) target = $region33
  $region32: #{model_forward.3} parent=0 // pred_region
    _
  $region33: #{model_forward.3} parent=0 // pred_fallthru
    _
  // Predicated region
  $region34: #{model_forward.3} parent=0 // pred_check
    _
  $region35: #{model_forward.3} parent=0 // pred_check_branch
    %373 = sbr.rel (0) target = $region37
  $region36: #{model_forward.3} parent=0 // pred_region
    _
  $region37: #{model_forward.3} parent=0 // pred_fallthru
    _

// kernel: model_forward.4
$region0: #{model_forward.4}
  #allocation0 [shape = 'u32[]', space=smem, size = 0x4, offset = 0x4, fixed_abs, tag = 'smem constant byte address 0x4 - core index']
  #allocation1 [shape = 'u32[144,128]{1,0:T(1,128)}', space=vmem, size = 0x12000, scoped, tag = 'internal scratch']
  %s0 = inlined_call_operand.vmem [shape: f32[6,8,16], index: 0, kind: input, shape index: {}]
  %s1 = inlined_call_operand.vmem [shape: f32[2,16,16], index: 1, kind: input, shape index: {}]
  %s2 = inlined_call_operand.vmem [shape: f32[2,1,16], index: 2, kind: input, shape index: {}]
  %s3 = inlined_call_operand.vmem [shape: f32[2,1,16], index: 3, kind: input, shape index: {}]
  %s4 = inlined_call_operand.vmem [shape: f32[2,1,16], index: 4, kind: input, shape index: {}]
  %s5 = inlined_call_operand.vmem [shape: f32[2,8,8], index: 5, kind: input, shape index: {}]
  %s6 = inlined_call_operand.vmem [shape: f32[8,8], index: 6, kind: input, shape index: {}]
  %s7 = inlined_call_operand.vmem [shape: f32[2,16,8], index: 7, kind: input, shape index: {}]
  %s8 = inlined_call_operand.vmem [shape: f32[2,1,8], index: 8, kind: input, shape index: {}]
  %s9 = inlined_call_operand.vmem [shape: f32[2,6,8,8], index: 9, kind: output, shape index: {}]
  %s10 = sld [smem:[#allocation0]]
  $region69: #{model_forward.4} parent=0
    _
  %s12 = ssub.s32 1, %s10
  %s13 = scalar_select 0, %s12, %s10
  loop: start=0, step=1, limit=4
  $region2: #{model_forward.4} parent=0 // loop_pre_header
    _
  $region3: #{model_forward.4} parent=0 // loop_header
    %s15 = sphi 0, %s19
    %p16 = scmp.ge.s32.totalorder %s15, 4
    %s23 = sphi 0, %s23
    %s25 = sphi 0, %s23
    %s26 = sphi 0, %s25
    %s40 = sphi 0, %s26
    %s46 = sphi 0, %s48
    %s49 = sphi 0, %s46
    %s50 = sphi 0, %s49
    %s66 = sphi 0, %s50
    %s72 = sphi 0, %s74
    %s75 = sphi 0, %s72
    %s76 = sphi 0, %s75
    %s92 = sphi 0, %s76
    %s98 = sphi 0, %s100
    %s101 = sphi 0, %s98
    %s102 = sphi 0, %s101
    %s118 = sphi 0, %s102
    %s124 = sphi 0, %s126
    %s127 = sphi 0, %s124
    %s128 = sphi 0, %s127
    %s144 = sphi 0, %s128
    %s150 = sphi 0, %s152
    %s153 = sphi 0, %s150
    %s154 = sphi 0, %s153
    %s170 = sphi 0, %s154
    %s174 = sphi 0, %s174
    %s176 = sphi 0, %s174
    %s177 = sphi 0, %s176
    %s191 = sphi 0, %s177
    %s197 = sphi 0, %s199
    %s200 = sphi 0, %s197
    %s201 = sphi 0, %s200
    %s217 = sphi 0, %s201
    %s223 = sphi 0, %s225
    %s226 = sphi 0, %s223
    %s227 = sphi 0, %s226
    %s243 = sphi 0, %s227
    %s249 = sphi 0, %s251
    %s252 = sphi 0, %s249
    %s253 = sphi 0, %s252
    %s269 = sphi 0, %s253
  $region4: #{model_forward.4} parent=0 // loop_header_branch
    %18 = sbr.rel (%p16) target = $region8
  $region5: #{model_forward.4} parent=0 // loop_body
    %s20 = ssub.s32 %s15, 1
    %s21 = ssub.s32 %s15, 2
    %s22 = sadd.s32 %s15, 1
    %s24 = sadd.s32 %s23, 1
    %p27 = scmp.eq.s32.totalorder %s15, 1
    %p28 = scmp.ne.s32.totalorder %s23, %s25
    %p29 = scmp.eq.s32.totalorder %s15, 0
    %p30 = por %p28, %p29
    %p31 = scmp.ne.s32.totalorder %s23, %s25
    %p32 = scmp.eq.s32.totalorder %s20, 1
    %p33 = por %p31, %p32
    %p34 = scmp.ne.s32.totalorder %s25, %s26
    %p35 = scmp.eq.s32.totalorder %s20, 0
    %p36 = por %p34, %p35
    %p37 = scmp.ne.s32.totalorder %s25, %s26
    %p38 = scmp.eq.s32.totalorder %s21, 1
    %p39 = por %p37, %p38
    %p41 = scmp.ne.s32.totalorder %s26, %s40
    %p42 = scmp.eq.s32.totalorder %s21, 0
    %p43 = por %p41, %p42
    %s44 = ssub.s32 %s15, %s22
    %p45 = scmp.eq.s32.totalorder %s44, 0
    %s47 = sadd.s32 %s46, 1
    %s48 = scalar_select %p45, %s46, %s47
    %p51 = pneg %p45
    %p52 = scmp.eq.s32.totalorder %s15, 1
    %p53 = por %p51, %p52
    %p54 = scmp.ne.s32.totalorder %s46, %s49
    %p55 = scmp.eq.s32.totalorder %s15, 0
    %p56 = por %p54, %p55
    %p57 = scmp.ne.s32.totalorder %s46, %s49
    %p58 = scmp.eq.s32.totalorder %s20, 1
    %p59 = por %p57, %p58
    %p60 = scmp.ne.s32.totalorder %s49, %s50
    %p61 = scmp.eq.s32.totalorder %s20, 0
    %p62 = por %p60, %p61
    %p63 = scmp.ne.s32.totalorder %s49, %s50
    %p64 = scmp.eq.s32.totalorder %s21, 1
    %p65 = por %p63, %p64
    %p67 = scmp.ne.s32.totalorder %s50, %s66
    %p68 = scmp.eq.s32.totalorder %s21, 0
    %p69 = por %p67, %p68
    %s70 = ssub.s32 %s15, %s22
    %p71 = scmp.eq.s32.totalorder %s70, 0
    %s73 = sadd.s32 %s72, 1
    %s74 = scalar_select %p71, %s72, %s73
    %p77 = pneg %p71
    %p78 = scmp.eq.s32.totalorder %s15, 1
    %p79 = por %p77, %p78
    %p80 = scmp.ne.s32.totalorder %s72, %s75
    %p81 = scmp.eq.s32.totalorder %s15, 0
    %p82 = por %p80, %p81
    %p83 = scmp.ne.s32.totalorder %s72, %s75
    %p84 = scmp.eq.s32.totalorder %s20, 1
    %p85 = por %p83, %p84
    %p86 = scmp.ne.s32.totalorder %s75, %s76
    %p87 = scmp.eq.s32.totalorder %s20, 0
    %p88 = por %p86, %p87
    %p89 = scmp.ne.s32.totalorder %s75, %s76
    %p90 = scmp.eq.s32.totalorder %s21, 1
    %p91 = por %p89, %p90
    %p93 = scmp.ne.s32.totalorder %s76, %s92
    %p94 = scmp.eq.s32.totalorder %s21, 0
    %p95 = por %p93, %p94
    %s96 = ssub.s32 %s15, %s22
    %p97 = scmp.eq.s32.totalorder %s96, 0
    %s99 = sadd.s32 %s98, 1
    %s100 = scalar_select %p97, %s98, %s99
    %p103 = pneg %p97
    %p104 = scmp.eq.s32.totalorder %s15, 1
    %p105 = por %p103, %p104
    %p106 = scmp.ne.s32.totalorder %s98, %s101
    %p107 = scmp.eq.s32.totalorder %s15, 0
    %p108 = por %p106, %p107
    %p109 = scmp.ne.s32.totalorder %s98, %s101
    %p110 = scmp.eq.s32.totalorder %s20, 1
    %p111 = por %p109, %p110
    %p112 = scmp.ne.s32.totalorder %s101, %s102
    %p113 = scmp.eq.s32.totalorder %s20, 0
    %p114 = por %p112, %p113
    %p115 = scmp.ne.s32.totalorder %s101, %s102
    %p116 = scmp.eq.s32.totalorder %s21, 1
    %p117 = por %p115, %p116
    %p119 = scmp.ne.s32.totalorder %s102, %s118
    %p120 = scmp.eq.s32.totalorder %s21, 0
    %p121 = por %p119, %p120
    %s122 = ssub.s32 %s15, %s22
    %p123 = scmp.eq.s32.totalorder %s122, 0
    %s125 = sadd.s32 %s124, 1
    %s126 = scalar_select %p123, %s124, %s125
    %p129 = pneg %p123
    %p130 = scmp.eq.s32.totalorder %s15, 1
    %p131 = por %p129, %p130
    %p132 = scmp.ne.s32.totalorder %s124, %s127
    %p133 = scmp.eq.s32.totalorder %s15, 0
    %p134 = por %p132, %p133
    %p135 = scmp.ne.s32.totalorder %s124, %s127
    %p136 = scmp.eq.s32.totalorder %s20, 1
    %p137 = por %p135, %p136
    %p138 = scmp.ne.s32.totalorder %s127, %s128
    %p139 = scmp.eq.s32.totalorder %s20, 0
    %p140 = por %p138, %p139
    %p141 = scmp.ne.s32.totalorder %s127, %s128
    %p142 = scmp.eq.s32.totalorder %s21, 1
    %p143 = por %p141, %p142
    %p145 = scmp.ne.s32.totalorder %s128, %s144
    %p146 = scmp.eq.s32.totalorder %s21, 0
    %p147 = por %p145, %p146
    %s148 = ssub.s32 %s15, %s22
    %p149 = scmp.eq.s32.totalorder %s148, 0
    %s151 = sadd.s32 %s150, 1
    %s152 = scalar_select %p149, %s150, %s151
    %p155 = pneg %p149
    %p156 = scmp.eq.s32.totalorder %s15, 1
    %p157 = por %p155, %p156
    %p158 = scmp.ne.s32.totalorder %s150, %s153
    %p159 = scmp.eq.s32.totalorder %s15, 0
    %p160 = por %p158, %p159
    %p161 = scmp.ne.s32.totalorder %s150, %s153
    %p162 = scmp.eq.s32.totalorder %s20, 1
    %p163 = por %p161, %p162
    %p164 = scmp.ne.s32.totalorder %s153, %s154
    %p165 = scmp.eq.s32.totalorder %s20, 0
    %p166 = por %p164, %p165
    %p167 = scmp.ne.s32.totalorder %s153, %s154
    %p168 = scmp.eq.s32.totalorder %s21, 1
    %p169 = por %p167, %p168
    %p171 = scmp.ne.s32.totalorder %s154, %s170
    %p172 = scmp.eq.s32.totalorder %s21, 0
    %p173 = por %p171, %p172
    %s175 = sadd.s32 %s174, 1
    %p178 = scmp.eq.s32.totalorder %s15, 1
    %p179 = scmp.ne.s32.totalorder %s174, %s176
    %p180 = scmp.eq.s32.totalorder %s15, 0
    %p181 = por %p179, %p180
    %p182 = scmp.ne.s32.totalorder %s174, %s176
    %p183 = scmp.eq.s32.totalorder %s20, 1
    %p184 = por %p182, %p183
    %p185 = scmp.ne.s32.totalorder %s176, %s177
    %p186 = scmp.eq.s32.totalorder %s20, 0
    %p187 = por %p185, %p186
    %p188 = scmp.ne.s32.totalorder %s176, %s177
    %p189 = scmp.eq.s32.totalorder %s21, 1
    %p190 = por %p188, %p189
    %p192 = scmp.ne.s32.totalorder %s177, %s191
    %p193 = scmp.eq.s32.totalorder %s21, 0
    %p194 = por %p192, %p193
    %s195 = ssub.s32 %s15, %s22
    %p196 = scmp.eq.s32.totalorder %s195, 0
    %s198 = sadd.s32 %s197, 1
    %s199 = scalar_select %p196, %s197, %s198
    %p202 = pneg %p196
    %p203 = scmp.eq.s32.totalorder %s15, 1
    %p204 = por %p202, %p203
    %p205 = scmp.ne.s32.totalorder %s197, %s200
    %p206 = scmp.eq.s32.totalorder %s15, 0
    %p207 = por %p205, %p206
    %p208 = scmp.ne.s32.totalorder %s197, %s200
    %p209 = scmp.eq.s32.totalorder %s20, 1
    %p210 = por %p208, %p209
    %p211 = scmp.ne.s32.totalorder %s200, %s201
    %p212 = scmp.eq.s32.totalorder %s20, 0
    %p213 = por %p211, %p212
    %p214 = scmp.ne.s32.totalorder %s200, %s201
    %p215 = scmp.eq.s32.totalorder %s21, 1
    %p216 = por %p214, %p215
    %p218 = scmp.ne.s32.totalorder %s201, %s217
    %p219 = scmp.eq.s32.totalorder %s21, 0
    %p220 = por %p218, %p219
    %s221 = ssub.s32 %s15, %s22
    %p222 = scmp.eq.s32.totalorder %s221, 0
    %s224 = sadd.s32 %s223, 1
    %s225 = scalar_select %p222, %s223, %s224
    %p228 = pneg %p222
    %p229 = scmp.eq.s32.totalorder %s15, 1
    %p230 = por %p228, %p229
    %p231 = scmp.ne.s32.totalorder %s223, %s226
    %p232 = scmp.eq.s32.totalorder %s15, 0
    %p233 = por %p231, %p232
    %p234 = scmp.ne.s32.totalorder %s223, %s226
    %p235 = scmp.eq.s32.totalorder %s20, 1
    %p236 = por %p234, %p235
    %p237 = scmp.ne.s32.totalorder %s226, %s227
    %p238 = scmp.eq.s32.totalorder %s20, 0
    %p239 = por %p237, %p238
    %p240 = scmp.ne.s32.totalorder %s226, %s227
    %p241 = scmp.eq.s32.totalorder %s21, 1
    %p242 = por %p240, %p241
    %p244 = scmp.ne.s32.totalorder %s227, %s243
    %p245 = scmp.eq.s32.totalorder %s21, 0
    %p246 = por %p244, %p245
    %s247 = ssub.s32 %s15, %s22
    %p248 = scmp.eq.s32.totalorder %s247, 0
    %s250 = sadd.s32 %s249, 1
    %s251 = scalar_select %p248, %s249, %s250
    %p254 = pneg %p248
    %p255 = scmp.eq.s32.totalorder %s15, 1
    %p256 = por %p254, %p255
    %p257 = scmp.ne.s32.totalorder %s249, %s252
    %p258 = scmp.eq.s32.totalorder %s15, 0
    %p259 = por %p257, %p258
    %p260 = scmp.ne.s32.totalorder %s249, %s252
    %p261 = scmp.eq.s32.totalorder %s20, 1
    %p262 = por %p260, %p261
    %p263 = scmp.ne.s32.totalorder %s252, %s253
    %p264 = scmp.eq.s32.totalorder %s20, 0
    %p265 = por %p263, %p264
    %p266 = scmp.ne.s32.totalorder %s252, %s253
    %p267 = scmp.eq.s32.totalorder %s21, 1
    %p268 = por %p266, %p267
    %p270 = scmp.ne.s32.totalorder %s253, %s269
    %p271 = scmp.eq.s32.totalorder %s21, 0
    %p272 = por %p270, %p271
    %p273 = scmp.le.s32.totalorder 1, %s15
    %p274 = scmp.lt.s32.totalorder %s15, 3
    %p275 = pnand %p273, %p274
    %p276 = pneg %p275
    // Predicated region
    $region9: #{model_forward.4} parent=5 // pred_check
      _
    $region10: #{model_forward.4} parent=5 // pred_check_branch
      %278 = sbr.rel (%p275) target = $region12
    $region11: #{model_forward.4} parent=5 // pred_region
      %s279 = ssub.s32 %s15, 1
      // Predicated region
      $region13: #{model_forward.4} parent=11 // pred_check
        %p280 = pneg %p36
      $region14: #{model_forward.4} parent=11 // pred_check_branch
        %282 = sbr.rel (%p280) target = $region16
      $region15: #{model_forward.4} parent=11 // pred_region
        _
      $region16: #{model_forward.4} parent=11 // pred_fallthru
        _
      // Predicated region
      $region17: #{model_forward.4} parent=11 // pred_check
        %p283 = pneg %p187
      $region18: #{model_forward.4} parent=11 // pred_check_branch
        %285 = sbr.rel (%p283) target = $region20
      $region19: #{model_forward.4} parent=11 // pred_region
        _
      $region20: #{model_forward.4} parent=11 // pred_fallthru
        _
    $region12: #{model_forward.4} parent=5 // pred_fallthru
      _
    %p286 = scmp.lt.s32.totalorder %s15, 2
    // Predicated region
    $region21: #{model_forward.4} parent=5 // pred_check
      %p287 = pneg %p286
    $region22: #{model_forward.4} parent=5 // pred_check_branch
      %289 = sbr.rel (%p287) target = $region24
    $region23: #{model_forward.4} parent=5 // pred_region
      // Predicated region
      $region25: #{model_forward.4} parent=23 // pred_check
        %p290 = pneg %p56
      $region26: #{model_forward.4} parent=23 // pred_check_branch
        %292 = sbr.rel (%p290) target = $region28
      $region27: #{model_forward.4} parent=23 // pred_region
        %p293 = scmp.lt.s32.totalorder %s15, 1
        %s294 = scalar_select %p293, %s15, 1
        %s295 = smul.addr %s294, 2
        %s296 = smul.addr %s295, 8
        %s297 = scalar_lea.vmem %s1, %s296
      $region28: #{model_forward.4} parent=23 // pred_fallthru
        _
      // Predicated region
      $region29: #{model_forward.4} parent=23 // pred_check
        %p298 = pneg %p82
      $region30: #{model_forward.4} parent=23 // pred_check_branch
        %300 = sbr.rel (%p298) target = $region32
      $region31: #{model_forward.4} parent=23 // pred_region
        %p301 = scmp.lt.s32.totalorder %s15, 1
        %s302 = scalar_select %p301, %s15, 1
        %s303 = scalar_lea.vmem %s2, %s302
      $region32: #{model_forward.4} parent=23 // pred_fallthru
        _
      // Predicated region
      $region33: #{model_forward.4} parent=23 // pred_check
        %p304 = pneg %p108
      $region34: #{model_forward.4} parent=23 // pred_check_branch
        %306 = sbr.rel (%p304) target = $region36
      $region35: #{model_forward.4} parent=23 // pred_region
        %p307 = scmp.lt.s32.totalorder %s15, 1
        %s308 = scalar_select %p307, %s15, 1
        %s309 = scalar_lea.vmem %s3, %s308
      $region36: #{model_forward.4} parent=23 // pred_fallthru
        _
      // Predicated region
      $region37: #{model_forward.4} parent=23 // pred_check
        %p310 = pneg %p134
      $region38: #{model_forward.4} parent=23 // pred_check_branch
        %312 = sbr.rel (%p310) target = $region40
      $region39: #{model_forward.4} parent=23 // pred_region
        %p313 = scmp.lt.s32.totalorder %s15, 1
        %s314 = scalar_select %p313, %s15, 1
        %s315 = scalar_lea.vmem %s4, %s314
      $region40: #{model_forward.4} parent=23 // pred_fallthru
        _
      // Predicated region
      $region41: #{model_forward.4} parent=23 // pred_check
        %p316 = pneg %p160
      $region42: #{model_forward.4} parent=23 // pred_check_branch
        %318 = sbr.rel (%p316) target = $region44
      $region43: #{model_forward.4} parent=23 // pred_region
        %p319 = scmp.lt.s32.totalorder %s15, 1
        %s320 = scalar_select %p319, %s15, 1
        %s321 = smul.addr %s320, 8
        %s322 = scalar_lea.vmem %s5, %s321
      $region44: #{model_forward.4} parent=23 // pred_fallthru
        _
      // Predicated region
      $region45: #{model_forward.4} parent=23 // pred_check
        %p323 = pneg %p207
      $region46: #{model_forward.4} parent=23 // pred_check_branch
        %325 = sbr.rel (%p323) target = $region48
      $region47: #{model_forward.4} parent=23 // pred_region
        %p326 = scmp.lt.s32.totalorder %s15, 1
        %s327 = scalar_select %p326, %s15, 1
        %s328 = smul.addr %s327, 2
        %s329 = smul.addr %s328, 8
        %s330 = scalar_lea.vmem %s7, %s329
      $region48: #{model_forward.4} parent=23 // pred_fallthru
        _
      // Predicated region
      $region49: #{model_forward.4} parent=23 // pred_check
        %p331 = pneg %p233
      $region50: #{model_forward.4} parent=23 // pred_check_branch
        %333 = sbr.rel (%p331) target = $region52
      $region51: #{model_forward.4} parent=23 // pred_region
        %p334 = scmp.lt.s32.totalorder %s15, 1
        %s335 = scalar_select %p334, %s15, 1
        %s336 = scalar_lea.vmem %s8, %s335
      $region52: #{model_forward.4} parent=23 // pred_fallthru
        _
    $region24: #{model_forward.4} parent=5 // pred_fallthru
      _
    %p337 = scmp.le.s32.totalorder 1, %s15
    %p338 = scmp.lt.s32.totalorder %s15, 3
    %p339 = pnand %p337, %p338
    %p340 = pneg %p339
    // Predicated region
    $region53: #{model_forward.4} parent=5 // pred_check
      _
    $region54: #{model_forward.4} parent=5 // pred_check_branch
      %342 = sbr.rel (%p339) target = $region56
    $region55: #{model_forward.4} parent=5 // pred_region
      %s343 = ssub.s32 %s15, 1
      %p344 = pneg %p36
      %p345 = pneg %p33
      %p346 = scmp.lt.s32.totalorder %s20, 1
      %s347 = scalar_select %p346, %s20, 1
      %s348 = smul.addr %s347, 2
      %s349 = smul.addr %s348, 8
      %s350 = scalar_lea.vmem %s1, %s349
      %p351 = pneg %p62
      %p352 = pneg %p59
      %p353 = scmp.lt.s32.totalorder %s20, 1
      %s354 = scalar_select %p353, %s20, 1
      %s355 = scalar_lea.vmem %s2, %s354
      %p356 = pneg %p88
      %p357 = pneg %p85
      %p358 = scmp.lt.s32.totalorder %s20, 1
      %s359 = scalar_select %p358, %s20, 1
      %s360 = scalar_lea.vmem %s3, %s359
      %p361 = pneg %p114
      %p362 = pneg %p111
      %p363 = scmp.lt.s32.totalorder %s20, 1
      %s364 = scalar_select %p363, %s20, 1
      %s365 = scalar_lea.vmem %s4, %s364
      %p366 = pneg %p140
      %p367 = pneg %p137
      %p368 = scmp.lt.s32.totalorder %s20, 1
      %s369 = scalar_select %p368, %s20, 1
      %s370 = smul.addr %s369, 8
      %s371 = scalar_lea.vmem %s5, %s370
      %p372 = pneg %p166
      %p373 = pneg %p163
      %p374 = pneg %p187
      %p375 = pneg %p184
      %p376 = scmp.lt.s32.totalorder %s20, 1
      %s377 = scalar_select %p376, %s20, 1
      %s378 = smul.addr %s377, 2
      %s379 = smul.addr %s378, 8
      %s380 = scalar_lea.vmem %s7, %s379
      %p381 = pneg %p213
      %p382 = pneg %p210
      %p383 = scmp.lt.s32.totalorder %s20, 1
      %s384 = scalar_select %p383, %s20, 1
      %s385 = scalar_lea.vmem %s8, %s384
      %p386 = pneg %p239
      %p387 = pneg %p236
      %p388 = pneg %p265
      %p389 = pneg %p262
      %p390 = scmp.lt.s32.totalorder %s20, 1
      %s391 = scalar_select %p390, %s20, 1
      %s392 = smul.addr %s391, 6
      %s393 = smul.addr %s392, 8
      %s394 = scalar_lea.vmem %s9, %s393
      %p395 = scmp.lt.s32.totalorder %s20, 1
      %s396 = scalar_select %p395, %s20, 1
      %s397 = smul.addr %s396, 2
      %s398 = smul.addr %s397, 8
      %s399 = scalar_lea.vmem %s1, %s398
      %p400 = scmp.lt.s32.totalorder %s20, 1
      %s401 = scalar_select %p400, %s20, 1
      %s402 = scalar_lea.vmem %s2, %s401
      %p403 = scmp.lt.s32.totalorder %s20, 1
      %s404 = scalar_select %p403, %s20, 1
      %s405 = scalar_lea.vmem %s3, %s404
      %p406 = scmp.lt.s32.totalorder %s20, 1
      %s407 = scalar_select %p406, %s20, 1
      %s408 = scalar_lea.vmem %s4, %s407
      %p409 = scmp.lt.s32.totalorder %s20, 1
      %s410 = scalar_select %p409, %s20, 1
      %s411 = smul.addr %s410, 8
      %s412 = scalar_lea.vmem %s5, %s411
      %p413 = scmp.lt.s32.totalorder %s20, 1
      %s414 = scalar_select %p413, %s20, 1
      %s415 = smul.addr %s414, 2
      %s416 = smul.addr %s415, 8
      %s417 = scalar_lea.vmem %s7, %s416
      %p418 = scmp.lt.s32.totalorder %s20, 1
      %s419 = scalar_select %p418, %s20, 1
      %s420 = scalar_lea.vmem %s8, %s419
      %p421 = scmp.lt.s32.totalorder %s20, 1
      %s422 = scalar_select %p421, %s20, 1
      %s423 = smul.addr %s422, 6
      %s424 = smul.addr %s423, 8
      %s425 = scalar_lea.vmem %s9, %s424
      %v426 = vld [vmem:[%s0] sm:$0xff]
      %v427 = vld [vmem:[%s0 + $0x8] sm:$0xff]
      %v428 = vld [vmem:[%s0 + $0x10] sm:$0xff]
      %v429 = vld [vmem:[%s0 + $0x18] sm:$0xff]
      %v430 = vld [vmem:[%s0 + $0x20] sm:$0xff]
      %v431 = vld [vmem:[%s0 + $0x28] sm:$0xff]
      %v432 = vld [vmem:[%s6] sm:$0xff]
      %v433 = vld [vmem:[%s412] sm:$0xff]
      %v434 = vld [vmem:[%s399] sm:$0xff]
      %v435 = vld [vmem:[%s399 + $0x8] sm:$0xff]
      %v436 = vld [vmem:[%s402] sm:$0x1]
      %v438 = vlaneseq
      %v439 = vshrl.u32 %v438, 7
      %v440 = vsub.s32 0, %v439
      %v441 = vrot.slane %v436, %v440
      %vm443 = vcmask 130048
      %v445 = vsel %vm443, %v426, 0
      %v448 = vsel %vm443, %v427, 0
      %v451 = vsel %vm443, %v428, 0
      %v454 = vsel %vm443, %v429, 0
      %v457 = vsel %vm443, %v430, 0
      %v460 = vsel %vm443, %v431, 0
      %462 = vmatprep.subr.mxu0 0.0
      %463 = vmatpush1.msra.mxu0 %v434
      %464 = vmatprep.subr.mxu0 0.0
      %465 = vmatpush1.msra.mxu0 %v435
      %466 = vmatprep.subr.mxu0 0.0
      %467 = vmatpush1.msra.mxu0 0.0
      %468 = vmatprep.subr.mxu0 0.0
      %469 = vmatpush1.msra.mxu0 0.0
      %470 = vmatprep.subr.mxu0 0.0
      %471 = vmatpush1.msra.mxu0 0.0
      %472 = vmatprep.subr.mxu0 0.0
      %473 = vmatpush1.msra.mxu0 0.0
      %474 = vmatprep.subr.mxu0 0.0
      %475 = vmatpush1.msra.mxu0 0.0
      %476 = vmatprep.subr.mxu0 0.0
      %477 = vmatpush1.msra.mxu0 0.0
      %478 = vmatprep.subr.mxu0 0.0
      %479 = vmatpush1.msra.mxu0 0.0
      %480 = vmatprep.subr.mxu0 0.0
      %481 = vmatpush1.msra.mxu0 0.0
      %482 = vmatprep.subr.mxu0 0.0
      %483 = vmatpush1.msra.mxu0 0.0
      %484 = vmatprep.subr.mxu0 0.0
      %485 = vmatpush1.msra.mxu0 0.0
      %486 = vmatprep.subr.mxu0 0.0
      %487 = vmatpush1.msra.mxu0 0.0
      %488 = vmatprep.subr.mxu0 0.0
      %489 = vmatpush1.msra.mxu0 0.0
      %490 = vmatprep.subr.mxu0 0.0
      %491 = vmatpush1.msra.mxu0 0.0
      %492 = vmatprep.subr.mxu0 0.0
      %493 = vmatpush1.msra.mxu0 0.0
      %494 = vmatprep.subr.mxu0 0.0
      %495 = vmatpush1.msra.mxu0 0.0
      %496 = vmatprep.subr.mxu0 0.0
      %497 = vmatpush1.msra.mxu0 0.0
      %498 = vmatprep.subr.mxu0 0.0
      %499 = vmatpush1.msra.mxu0 0.0
      %500 = vmatprep.subr.mxu0 0.0
      %501 = vmatpush1.msra.mxu0 0.0
      %502 = vmatprep.subr.mxu0 0.0
      %503 = vmatpush1.msra.mxu0 0.0
      %504 = vmatprep.subr.mxu0 0.0
      %505 = vmatpush1.msra.mxu0 0.0
      %506 = vmatprep.subr.mxu0 0.0
      %507 = vmatpush1.msra.mxu0 0.0
      %508 = vmatprep.subr.mxu0 0.0
      %509 = vmatpush1.msra.mxu0 0.0
      %510 = vmatprep.subr.mxu0 0.0
      %511 = vmatpush1.msra.mxu0 0.0
      %512 = vmatprep.subr.mxu0 0.0
      %513 = vmatpush1.msra.mxu0 0.0
      %514 = vmatprep.subr.mxu0 0.0
      %515 = vmatpush1.msra.mxu0 0.0
      %516 = vmatprep.subr.mxu0 0.0
      %517 = vmatpush1.msra.mxu0 0.0
      %518 = vmatprep.subr.mxu0 0.0
      %519 = vmatpush1.msra.mxu0 0.0
      %520 = vmatprep.subr.mxu0 0.0
      %521 = vmatpush1.msra.mxu0 0.0
      %522 = vmatprep.subr.mxu0 0.0
      %523 = vmatpush1.msra.mxu0 0.0
      %524 = vmatprep.subr.mxu0 0.0
      %525 = vmatpush1.msra.mxu0 0.0
      %526 = vmatprep.mubr.f32.mxu0 0.0
      %527 = vmatmul.mubr.f32.gmra.mrb[0].mxu0 %v445
      %v528 = vpop.f32.mrb[0].mxu0
      %v529 = vadd.f32 %v441, %v528
      %v530 = vpop.f32.mrb[0].mxu0
      %531 = vmatprep.mubr.f32.mxu0 0.0
      %532 = vmatmul.mubr.f32.gmra.mrb[0].mxu0 %v448
      %v533 = vpop.f32.mrb[0].mxu0
      %v534 = vadd.f32 %v441, %v533
      %v535 = vpop.f32.mrb[0].mxu0
      %536 = vmatprep.mubr.f32.mxu0 0.0
      %537 = vmatmul.mubr.f32.gmra.mrb[0].mxu0 %v451
      %v538 = vpop.f32.mrb[0].mxu0
      %v539 = vadd.f32 %v441, %v538
      %v540 = vpop.f32.mrb[0].mxu0
      %541 = vmatprep.mubr.f32.mxu0 0.0
      %542 = vmatmul.mubr.f32.gmra.mrb[0].mxu0 %v454
      %v543 = vpop.f32.mrb[0].mxu0
      %v544 = vadd.f32 %v441, %v543
      %v545 = vpop.f32.mrb[0].mxu0
      %546 = vmatprep.mubr.f32.mxu0 0.0
      %547 = vmatmul.mubr.f32.gmra.mrb[0].mxu0 %v457
      %v548 = vpop.f32.mrb[0].mxu0
      %v549 = vadd.f32 %v441, %v548
      %v550 = vpop.f32.mrb[0].mxu0
      %551 = vmatprep.mubr.f32.mxu0 0.0
      %552 = vmatmul.mubr.f32.gmra.mrb[0].mxu0 %v460
      %v553 = vpop.f32.mrb[0].mxu0
      %v554 = vadd.f32 %v441, %v553
      %v555 = vpop.f32.mrb[0].mxu0
      %556 = vdwg.mxu0
      %v558 = vsel %vm443, %v529, 0
      %560 = vmatprep.subr.mxu0 0.0
      %561 = vmatpush1.xpose.msra.mxu0 %v558
      %562 = vmatprep.subr.mxu0 0.0
      %563 = vmatpush1.xpose.msra.mxu0 0.0
      %564 = vmatprep.subr.mxu0 0.0
      %565 = vmatpush1.xpose.msra.mxu0 0.0
      %566 = vmatprep.subr.mxu0 0.0
      %567 = vmatpush1.xpose.msra.mxu0 0.0
      %568 = vmatprep.subr.mxu0 0.0
      %569 = vmatpush1.xpose.msra.mxu0 0.0
      %570 = vmatprep.subr.mxu0 0.0
      %571 = vmatpush1.xpose.msra.mxu0 0.0
      %572 = vmatprep.subr.mxu0 0.0
      %573 = vmatpush1.xpose.msra.mxu0 0.0
      %574 = vmatprep.subr.mxu0 0.0
      %575 = vmatpush1.xpose.msra.mxu0 0.0
      %576 = vmatprep.subr.mxu0 0.0
      %577 = vmatpush1.xpose.msra.mxu0 0.0
      %578 = vmatprep.subr.mxu0 0.0
      %579 = vmatpush1.xpose.msra.mxu0 0.0
      %580 = vmatprep.subr.mxu0 0.0
      %581 = vmatpush1.xpose.msra.mxu0 0.0
      %582 = vmatprep.subr.mxu0 0.0
      %583 = vmatpush1.xpose.msra.mxu0 0.0
      %584 = vmatprep.subr.mxu0 0.0
      %585 = vmatpush1.xpose.msra.mxu0 0.0
      %586 = vmatprep.subr.mxu0 0.0
      %587 = vmatpush1.xpose.msra.mxu0 0.0
      %588 = vmatprep.subr.mxu0 0.0
      %589 = vmatpush1.xpose.msra.mxu0 0.0
      %590 = vmatprep.subr.mxu0 0.0
      %591 = vmatpush1.xpose.msra.mxu0 0.0
      %592 = vmatprep.subr.mxu0 0.0
      %593 = vmatpush1.xpose.msra.mxu0 0.0
      %594 = vmatprep.subr.mxu0 0.0
      %595 = vmatpush1.xpose.msra.mxu0 0.0
      %596 = vmatprep.subr.mxu0 0.0
      %597 = vmatpush1.xpose.msra.mxu0 0.0
      %598 = vmatprep.subr.mxu0 0.0
      %599 = vmatpush1.xpose.msra.mxu0 0.0
      %600 = vmatprep.subr.mxu0 0.0
      %601 = vmatpush1.xpose.msra.mxu0 0.0
      %602 = vmatprep.subr.mxu0 0.0
      %603 = vmatpush1.xpose.msra.mxu0 0.0
      %604 = vmatprep.subr.mxu0 0.0
      %605 = vmatpush1.xpose.msra.mxu0 0.0
      %606 = vmatprep.subr.mxu0 0.0
      %607 = vmatpush1.xpose.msra.mxu0 0.0
      %608 = vmatprep.subr.mxu0 0.0
      %609 = vmatpush1.xpose.msra.mxu0 0.0
      %610 = vmatprep.subr.mxu0 0.0
      %611 = vmatpush1.xpose.msra.mxu0 0.0
      %612 = vmatprep.subr.mxu0 0.0
      %613 = vmatpush1.xpose.msra.mxu0 0.0
      %614 = vmatprep.subr.mxu0 0.0
      %615 = vmatpush1.xpose.msra.mxu0 0.0
      %616 = vmatprep.subr.mxu0 0.0
      %617 = vmatpush1.xpose.msra.mxu0 0.0
      %618 = vmatprep.subr.mxu0 0.0
      %619 = vmatpush1.xpose.msra.mxu0 0.0
      %620 = vmatprep.subr.mxu0 0.0
      %621 = vmatpush1.xpose.msra.mxu0 0.0
      %622 = vmatprep.subr.mxu0 0.0
      %623 = vmatpush1.xpose.msra.mxu0 0.0
      %624 = vmatprep.mubr.f32.mxu0 0.0
      %625 = vmatmul.mubr.f32.gmra.mrb[0].mxu0 %v558
      %v626 = vpop.f32.mrb[0].mxu0
      %v627 = vadd.f32 0.0, %v626
      %v628 = vpop.f32.mrb[0].mxu0
      %629 = vdwg.mxu0
      %v631 = vsel %vm443, %v534, 0
      %633 = vmatprep.subr.mxu0 0.0
      %634 = vmatpush1.xpose.msra.mxu0 %v631
      %635 = vmatprep.subr.mxu0 0.0
      %636 = vmatpush1.xpose.msra.mxu0 0.0
      %637 = vmatprep.subr.mxu0 0.0
      %638 = vmatpush1.xpose.msra.mxu0 0.0
      %639 = vmatprep.subr.mxu0 0.0
      %640 = vmatpush1.xpose.msra.mxu0 0.0
      %641 = vmatprep.subr.mxu0 0.0
      %642 = vmatpush1.xpose.msra.mxu0 0.0
      %643 = vmatprep.subr.mxu0 0.0
      %644 = vmatpush1.xpose.msra.mxu0 0.0
      %645 = vmatprep.subr.mxu0 0.0
      %646 = vmatpush1.xpose.msra.mxu0 0.0
      %647 = vmatprep.subr.mxu0 0.0
      %648 = vmatpush1.xpose.msra.mxu0 0.0
      %649 = vmatprep.subr.mxu0 0.0
      %650 = vmatpush1.xpose.msra.mxu0 0.0
      %651 = vmatprep.subr.mxu0 0.0
      %652 = vmatpush1.xpose.msra.mxu0 0.0
      %653 = vmatprep.subr.mxu0 0.0
      %654 = vmatpush1.xpose.msra.mxu0 0.0
      %655 = vmatprep.subr.mxu0 0.0
      %656 = vmatpush1.xpose.msra.mxu0 0.0
      %657 = vmatprep.subr.mxu0 0.0
      %658 = vmatpush1.xpose.msra.mxu0 0.0
      %659 = vmatprep.subr.mxu0 0.0
      %660 = vmatpush1.xpose.msra.mxu0 0.0
      %661 = vmatprep.subr.mxu0 0.0
      %662 = vmatpush1.xpose.msra.mxu0 0.0
      %663 = vmatprep.subr.mxu0 0.0
      %664 = vmatpush1.xpose.msra.mxu0 0.0
      %665 = vmatprep.subr.mxu0 0.0
      %666 = vmatpush1.xpose.msra.mxu0 0.0
      %667 = vmatprep.subr.mxu0 0.0
      %668 = vmatpush1.xpose.msra.mxu0 0.0
      %669 = vmatprep.subr.mxu0 0.0
      %670 = vmatpush1.xpose.msra.mxu0 0.0
      %671 = vmatprep.subr.mxu0 0.0
      %672 = vmatpush1.xpose.msra.mxu0 0.0
      %673 = vmatprep.subr.mxu0 0.0
      %674 = vmatpush1.xpose.msra.mxu0 0.0
      %675 = vmatprep.subr.mxu0 0.0
      %676 = vmatpush1.xpose.msra.mxu0 0.0
      %677 = vmatprep.subr.mxu0 0.0
      %678 = vmatpush1.xpose.msra.mxu0 0.0
      %679 = vmatprep.subr.mxu0 0.0
      %680 = vmatpush1.xpose.msra.mxu0 0.0
      %681 = vmatprep.subr.mxu0 0.0
      %682 = vmatpush1.xpose.msra.mxu0 0.0
      %683 = vmatprep.subr.mxu0 0.0
      %684 = vmatpush1.xpose.msra.mxu0 0.0
      %685 = vmatprep.subr.mxu0 0.0
      %686 = vmatpush1.xpose.msra.mxu0 0.0
      %687 = vmatprep.subr.mxu0 0.0
      %688 = vmatpush1.xpose.msra.mxu0 0.0
      %689 = vmatprep.subr.mxu0 0.0
      %690 = vmatpush1.xpose.msra.mxu0 0.0
      %691 = vmatprep.subr.mxu0 0.0
      %692 = vmatpush1.xpose.msra.mxu0 0.0
      %693 = vmatprep.subr.mxu0 0.0
      %694 = vmatpush1.xpose.msra.mxu0 0.0
      %695 = vmatprep.subr.mxu0 0.0
      %696 = vmatpush1.xpose.msra.mxu0 0.0
      %697 = vmatprep.mubr.f32.mxu0 0.0
      %698 = vmatmul.mubr.f32.gmra.mrb[0].mxu0 %v631
      %v699 = vpop.f32.mrb[0].mxu0
      %v700 = vadd.f32 0.0, %v699
      %v701 = vpop.f32.mrb[0].mxu0
      %702 = vdwg.mxu0
      %v704 = vsel %vm443, %v539, 0
      %706 = vmatprep.subr.mxu0 0.0
      %707 = vmatpush1.xpose.msra.mxu0 %v704
      %708 = vmatprep.subr.mxu0 0.0
      %709 = vmatpush1.xpose.msra.mxu0 0.0
      %710 = vmatprep.subr.mxu0 0.0
      %711 = vmatpush1.xpose.msra.mxu0 0.0
      %712 = vmatprep.subr.mxu0 0.0
      %713 = vmatpush1.xpose.msra.mxu0 0.0
      %714 = vmatprep.subr.mxu0 0.0
      %715 = vmatpush1.xpose.msra.mxu0 0.0
      %716 = vmatprep.subr.mxu0 0.0
      %717 = vmatpush1.xpose.msra.mxu0 0.0
      %718 = vmatprep.subr.mxu0 0.0
      %719 = vmatpush1.xpose.msra.mxu0 0.0
      %720 = vmatprep.subr.mxu0 0.0
      %721 = vmatpush1.xpose.msra.mxu0 0.0
      %722 = vmatprep.subr.mxu0 0.0
      %723 = vmatpush1.xpose.msra.mxu0 0.0
      %724 = vmatprep.subr.mxu0 0.0
      %725 = vmatpush1.xpose.msra.mxu0 0.0
      %726 = vmatprep.subr.mxu0 0.0
      %727 = vmatpush1.xpose.msra.mxu0 0.0
      %728 = vmatprep.subr.mxu0 0.0
      %729 = vmatpush1.xpose.msra.mxu0 0.0
      %730 = vmatprep.subr.mxu0 0.0
      %731 = vmatpush1.xpose.msra.mxu0 0.0
      %732 = vmatprep.subr.mxu0 0.0
      %733 = vmatpush1.xpose.msra.mxu0 0.0
      %734 = vmatprep.subr.mxu0 0.0
      %735 = vmatpush1.xpose.msra.mxu0 0.0
      %736 = vmatprep.subr.mxu0 0.0
      %737 = vmatpush1.xpose.msra.mxu0 0.0
      %738 = vmatprep.subr.mxu0 0.0
      %739 = vmatpush1.xpose.msra.mxu0 0.0
      %740 = vmatprep.subr.mxu0 0.0
      %741 = vmatpush1.xpose.msra.mxu0 0.0
      %742 = vmatprep.subr.mxu0 0.0
      %743 = vmatpush1.xpose.msra.mxu0 0.0
      %744 = vmatprep.subr.mxu0 0.0
      %745 = vmatpush1.xpose.msra.mxu0 0.0
      %746 = vmatprep.subr.mxu0 0.0
      %747 = vmatpush1.xpose.msra.mxu0 0.0
      %748 = vmatprep.subr.mxu0 0.0
      %749 = vmatpush1.xpose.msra.mxu0 0.0
      %750 = vmatprep.subr.mxu0 0.0
      %751 = vmatpush1.xpose.msra.mxu0 0.0
      %752 = vmatprep.subr.mxu0 0.0
      %753 = vmatpush1.xpose.msra.mxu0 0.0
      %754 = vmatprep.subr.mxu0 0.0
      %755 = vmatpush1.xpose.msra.mxu0 0.0
      %756 = vmatprep.subr.mxu0 0.0
      %757 = vmatpush1.xpose.msra.mxu0 0.0
      %758 = vmatprep.subr.mxu0 0.0
      %759 = vmatpush1.xpose.msra.mxu0 0.0
      %760 = vmatprep.subr.mxu0 0.0
      %761 = vmatpush1.xpose.msra.mxu0 0.0
      %762 = vmatprep.subr.mxu0 0.0
      %763 = vmatpush1.xpose.msra.mxu0 0.0
      %764 = vmatprep.subr.mxu0 0.0
      %765 = vmatpush1.xpose.msra.mxu0 0.0
      %766 = vmatprep.subr.mxu0 0.0
      %767 = vmatpush1.xpose.msra.mxu0 0.0
      %768 = vmatprep.subr.mxu0 0.0
      %769 = vmatpush1.xpose.msra.mxu0 0.0
      %770 = vmatprep.mubr.f32.mxu0 0.0
      %771 = vmatmul.mubr.f32.gmra.mrb[0].mxu0 %v704
      %v772 = vpop.f32.mrb[0].mxu0
      %v773 = vadd.f32 0.0, %v772
      %v774 = vpop.f32.mrb[0].mxu0
      %775 = vdwg.mxu0
      %v777 = vsel %vm443, %v544, 0
      %779 = vmatprep.subr.mxu0 0.0
      %780 = vmatpush1.xpose.msra.mxu0 %v777
      %781 = vmatprep.subr.mxu0 0.0
      %782 = vmatpush1.xpose.msra.mxu0 0.0
      %783 = vmatprep.subr.mxu0 0.0
      %784 = vmatpush1.xpose.msra.mxu0 0.0
      %785 = vmatprep.subr.mxu0 0.0
      %786 = vmatpush1.xpose.msra.mxu0 0.0
      %787 = vmatprep.subr.mxu0 0.0
      %788 = vmatpush1.xpose.msra.mxu0 0.0
      %789 = vmatprep.subr.mxu0 0.0
      %790 = vmatpush1.xpose.msra.mxu0 0.0
      %791 = vmatprep.subr.mxu0 0.0
      %792 = vmatpush1.xpose.msra.mxu0 0.0
      %793 = vmatprep.subr.mxu0 0.0
      %794 = vmatpush1.xpose.msra.mxu0 0.0
      %795 = vmatprep.subr.mxu0 0.0
      %796 = vmatpush1.xpose.msra.mxu0 0.0
      %797 = vmatprep.subr.mxu0 0.0
      %798 = vmatpush1.xpose.msra.mxu0 0.0
      %799 = vmatprep.subr.mxu0 0.0
      %800 = vmatpush1.xpose.msra.mxu0 0.0
      %801 = vmatprep.subr.mxu0 0.0
      %802 = vmatpush1.xpose.msra.mxu0 0.0
      %803 = vmatprep.subr.mxu0 0.0
      %804 = vmatpush1.xpose.msra.mxu0 0.0
      %805 = vmatprep.subr.mxu0 0.0
      %806 = vmatpush1.xpose.msra.mxu0 0.0
      %807 = vmatprep.subr.mxu0 0.0
      %808 = vmatpush1.xpose.msra.mxu0 0.0
      %809 = vmatprep.subr.mxu0 0.0
      %810 = vmatpush1.xpose.msra.mxu0 0.0
      %811 = vmatprep.subr.mxu0 0.0
      %812 = vmatpush1.xpose.msra.mxu0 0.0
      %813 = vmatprep.subr.mxu0 0.0
      %814 = vmatpush1.xpose.msra.mxu0 0.0
      %815 = vmatprep.subr.mxu0 0.0
      %816 = vmatpush1.xpose.msra.mxu0 0.0
      %817 = vmatprep.subr.mxu0 0.0
      %818 = vmatpush1.xpose.msra.mxu0 0.0
      %819 = vmatprep.subr.mxu0 0.0
      %820 = vmatpush1.xpose.msra.mxu0 0.0
      %821 = vmatprep.subr.mxu0 0.0
      %822 = vmatpush1.xpose.msra.mxu0 0.0
      %823 = vmatprep.subr.mxu0 0.0
      %824 = vmatpush1.xpose.msra.mxu0 0.0
      %825 = vmatprep.subr.mxu0 0.0
      %826 = vmatpush1.xpose.msra.mxu0 0.0
      %827 = vmatprep.subr.mxu0 0.0
      %828 = vmatpush1.xpose.msra.mxu0 0.0
      %829 = vmatprep.subr.mxu0 0.0
      %830 = vmatpush1.xpose.msra.mxu0 0.0
      %831 = vmatprep.subr.mxu0 0.0
      %832 = vmatpush1.xpose.msra.mxu0 0.0
      %833 = vmatprep.subr.mxu0 0.0
      %834 = vmatpush1.xpose.msra.mxu0 0.0
      %835 = vmatprep.subr.mxu0 0.0
      %836 = vmatpush1.xpose.msra.mxu0 0.0
      %837 = vmatprep.subr.mxu0 0.0
      %838 = vmatpush1.xpose.msra.mxu0 0.0
      %839 = vmatprep.subr.mxu0 0.0
      %840 = vmatpush1.xpose.msra.mxu0 0.0
      %841 = vmatprep.subr.mxu0 0.0
      %842 = vmatpush1.xpose.msra.mxu0 0.0
      %843 = vmatprep.mubr.f32.mxu0 0.0
      %844 = vmatmul.mubr.f32.gmra.mrb[0].mxu0 %v777
      %v845 = vpop.f32.mrb[0].mxu0
      %v846 = vadd.f32 0.0, %v845
      %v847 = vpop.f32.mrb[0].mxu0
      %848 = vdwg.mxu0
      %v850 = vsel %vm443, %v549, 0
      %852 = vmatprep.subr.mxu0 0.0
      %853 = vmatpush1.xpose.msra.mxu0 %v850
      %854 = vmatprep.subr.mxu0 0.0
      %855 = vmatpush1.xpose.msra.mxu0 0.0
      %856 = vmatprep.subr.mxu0 0.0
      %857 = vmatpush1.xpose.msra.mxu0 0.0
      %858 = vmatprep.subr.mxu0 0.0
      %859 = vmatpush1.xpose.msra.mxu0 0.0
      %860 = vmatprep.subr.mxu0 0.0
      %861 = vmatpush1.xpose.msra.mxu0 0.0
      %862 = vmatprep.subr.mxu0 0.0
      %863 = vmatpush1.xpose.msra.mxu0 0.0
      %864 = vmatprep.subr.mxu0 0.0
      %865 = vmatpush1.xpose.msra.mxu0 0.0
      %866 = vmatprep.subr.mxu0 0.0
      %867 = vmatpush1.xpose.msra.mxu0 0.0
      %868 = vmatprep.subr.mxu0 0.0
      %869 = vmatpush1.xpose.msra.mxu0 0.0
      %870 = vmatprep.subr.mxu0 0.0
      %871 = vmatpush1.xpose.msra.mxu0 0.0
      %872 = vmatprep.subr.mxu0 0.0
      %873 = vmatpush1.xpose.msra.mxu0 0.0
      %874 = vmatprep.subr.mxu0 0.0
      %875 = vmatpush1.xpose.msra.mxu0 0.0
      %876 = vmatprep.subr.mxu0 0.0
      %877 = vmatpush1.xpose.msra.mxu0 0.0
      %878 = vmatprep.subr.mxu0 0.0
      %879 = vmatpush1.xpose.msra.mxu0 0.0
      %880 = vmatprep.subr.mxu0 0.0
      %881 = vmatpush1.xpose.msra.mxu0 0.0
      %882 = vmatprep.subr.mxu0 0.0
      %883 = vmatpush1.xpose.msra.mxu0 0.0
      %884 = vmatprep.subr.mxu0 0.0
      %885 = vmatpush1.xpose.msra.mxu0 0.0
      %886 = vmatprep.subr.mxu0 0.0
      %887 = vmatpush1.xpose.msra.mxu0 0.0
      %888 = vmatprep.subr.mxu0 0.0
      %889 = vmatpush1.xpose.msra.mxu0 0.0
      %890 = vmatprep.subr.mxu0 0.0
      %891 = vmatpush1.xpose.msra.mxu0 0.0
      %892 = vmatprep.subr.mxu0 0.0
      %893 = vmatpush1.xpose.msra.mxu0 0.0
      %894 = vmatprep.subr.mxu0 0.0
      %895 = vmatpush1.xpose.msra.mxu0 0.0
      %896 = vmatprep.subr.mxu0 0.0
      %897 = vmatpush1.xpose.msra.mxu0 0.0
      %898 = vmatprep.subr.mxu0 0.0
      %899 = vmatpush1.xpose.msra.mxu0 0.0
      %900 = vmatprep.subr.mxu0 0.0
      %901 = vmatpush1.xpose.msra.mxu0 0.0
      %902 = vmatprep.subr.mxu0 0.0
      %903 = vmatpush1.xpose.msra.mxu0 0.0
      %904 = vmatprep.subr.mxu0 0.0
      %905 = vmatpush1.xpose.msra.mxu0 0.0
      %906 = vmatprep.subr.mxu0 0.0
      %907 = vmatpush1.xpose.msra.mxu0 0.0
      %908 = vmatprep.subr.mxu0 0.0
      %909 = vmatpush1.xpose.msra.mxu0 0.0
      %910 = vmatprep.subr.mxu0 0.0
      %911 = vmatpush1.xpose.msra.mxu0 0.0
      %912 = vmatprep.subr.mxu0 0.0
      %913 = vmatpush1.xpose.msra.mxu0 0.0
      %914 = vmatprep.subr.mxu0 0.0
      %915 = vmatpush1.xpose.msra.mxu0 0.0
      %916 = vmatprep.mubr.f32.mxu0 0.0
      %917 = vmatmul.mubr.f32.gmra.mrb[0].mxu0 %v850
      %v918 = vpop.f32.mrb[0].mxu0
      %v919 = vadd.f32 0.0, %v918
      %v920 = vpop.f32.mrb[0].mxu0
      %921 = vdwg.mxu0
      %v923 = vsel %vm443, %v554, 0
      %925 = vmatprep.subr.mxu0 0.0
      %926 = vmatpush1.xpose.msra.mxu0 %v923
      %927 = vmatprep.subr.mxu0 0.0
      %928 = vmatpush1.xpose.msra.mxu0 0.0
      %929 = vmatprep.subr.mxu0 0.0
      %930 = vmatpush1.xpose.msra.mxu0 0.0
      %931 = vmatprep.subr.mxu0 0.0
      %932 = vmatpush1.xpose.msra.mxu0 0.0
      %933 = vmatprep.subr.mxu0 0.0
      %934 = vmatpush1.xpose.msra.mxu0 0.0
      %935 = vmatprep.subr.mxu0 0.0
      %936 = vmatpush1.xpose.msra.mxu0 0.0
      %937 = vmatprep.subr.mxu0 0.0
      %938 = vmatpush1.xpose.msra.mxu0 0.0
      %939 = vmatprep.subr.mxu0 0.0
      %940 = vmatpush1.xpose.msra.mxu0 0.0
      %941 = vmatprep.subr.mxu0 0.0
      %942 = vmatpush1.xpose.msra.mxu0 0.0
      %943 = vmatprep.subr.mxu0 0.0
      %944 = vmatpush1.xpose.msra.mxu0 0.0
      %945 = vmatprep.subr.mxu0 0.0
      %946 = vmatpush1.xpose.msra.mxu0 0.0
      %947 = vmatprep.subr.mxu0 0.0
      %948 = vmatpush1.xpose.msra.mxu0 0.0
      %949 = vmatprep.subr.mxu0 0.0
      %950 = vmatpush1.xpose.msra.mxu0 0.0
      %951 = vmatprep.subr.mxu0 0.0
      %952 = vmatpush1.xpose.msra.mxu0 0.0
      %953 = vmatprep.subr.mxu0 0.0
      %954 = vmatpush1.xpose.msra.mxu0 0.0
      %955 = vmatprep.subr.mxu0 0.0
      %956 = vmatpush1.xpose.msra.mxu0 0.0
      %957 = vmatprep.subr.mxu0 0.0
      %958 = vmatpush1.xpose.msra.mxu0 0.0
      %959 = vmatprep.subr.mxu0 0.0
      %960 = vmatpush1.xpose.msra.mxu0 0.0
      %961 = vmatprep.subr.mxu0 0.0
      %962 = vmatpush1.xpose.msra.mxu0 0.0
      %963 = vmatprep.subr.mxu0 0.0
      %964 = vmatpush1.xpose.msra.mxu0 0.0
      %965 = vmatprep.subr.mxu0 0.0
      %966 = vmatpush1.xpose.msra.mxu0 0.0
      %967 = vmatprep.subr.mxu0 0.0
      %968 = vmatpush1.xpose.msra.mxu0 0.0
      %969 = vmatprep.subr.mxu0 0.0
      %970 = vmatpush1.xpose.msra.mxu0 0.0
      %971 = vmatprep.subr.mxu0 0.0
      %972 = vmatpush1.xpose.msra.mxu0 0.0
      %973 = vmatprep.subr.mxu0 0.0
      %974 = vmatpush1.xpose.msra.mxu0 0.0
      %975 = vmatprep.subr.mxu0 0.0
      %976 = vmatpush1.xpose.msra.mxu0 0.0
      %977 = vmatprep.subr.mxu0 0.0
      %978 = vmatpush1.xpose.msra.mxu0 0.0
      %979 = vmatprep.subr.mxu0 0.0
      %980 = vmatpush1.xpose.msra.mxu0 0.0
      %981 = vmatprep.subr.mxu0 0.0
      %982 = vmatpush1.xpose.msra.mxu0 0.0
      %983 = vmatprep.subr.mxu0 0.0
      %984 = vmatpush1.xpose.msra.mxu0 0.0
      %985 = vmatprep.subr.mxu0 0.0
      %986 = vmatpush1.xpose.msra.mxu0 0.0
      %987 = vmatprep.subr.mxu0 0.0
      %988 = vmatpush1.xpose.msra.mxu0 0.0
      %989 = vmatprep.mubr.f32.mxu0 0.0
      %990 = vmatmul.mubr.f32.gmra.mrb[0].mxu0 %v923
      %v991 = vpop.f32.mrb[0].mxu0
      %v992 = vadd.f32 0.0, %v991
      %v993 = vpop.f32.mrb[0].mxu0
      %994 = vdwg.mxu0
      %v995 = vmul.f32 %v432, 1e+08
      %v996 = vsub.f32 %v627, %v995
      %v997 = vsub.f32 %v700, %v995
      %v998 = vsub.f32 %v773, %v995
      %v999 = vsub.f32 %v846, %v995
      %v1000 = vsub.f32 %v919, %v995
      %v1001 = vsub.f32 %v992, %v995
      %vm1002 = vcmp.gt.f32.partialorder %v996, 0.0
      %vm1003 = vcmp.gt.f32.partialorder %v997, 0.0
      %vm1004 = vcmp.gt.f32.partialorder %v998, 0.0
      %vm1005 = vcmp.gt.f32.partialorder %v999, 0.0
      %vm1006 = vcmp.gt.f32.partialorder %v1000, 0.0
      %vm1007 = vcmp.gt.f32.partialorder %v1001, 0.0
      %v1008 = vmul.f32 %v996, 0.01
      %v1009 = vmul.f32 %v997, 0.01
      %v1010 = vmul.f32 %v998, 0.01
      %v1011 = vmul.f32 %v999, 0.01
      %v1012 = vmul.f32 %v1000, 0.01
      %v1013 = vmul.f32 %v1001, 0.01
      %v1014 = vsel %vm1002, %v996, %v1008
      %v1015 = vsel %vm1003, %v997, %v1009
      %v1016 = vsel %vm1004, %v998, %v1010
      %v1017 = vsel %vm1005, %v999, %v1011
      %v1018 = vsel %vm1006, %v1000, %v1012
      %v1019 = vsel %vm1007, %v1001, %v1013
      %vm1020 = vcmask 64512
      %v1021 = vsel %vm1020, %v1014, -inf
      %1022 = vmax.xlane.f32.xlu0 %v1021
      %v1023 = vpop.xlane.xlu0 %1022
      %v1024 = vsel %vm1020, %v1015, -inf
      %1025 = vmax.xlane.f32.xlu0 %v1024
      %v1026 = vpop.xlane.xlu0 %1025
      %v1027 = vsel %vm1020, %v1016, -inf
      %1028 = vmax.xlane.f32.xlu0 %v1027
      %v1029 = vpop.xlane.xlu0 %1028
      %v1030 = vsel %vm1020, %v1017, -inf
      %1031 = vmax.xlane.f32.xlu0 %v1030
      %v1032 = vpop.xlane.xlu0 %1031
      %v1033 = vsel %vm1020, %v1018, -inf
      %1034 = vmax.xlane.f32.xlu0 %v1033
      %v1035 = vpop.xlane.xlu0 %1034
      %v1036 = vsel %vm1020, %v1019, -inf
      %1037 = vmax.xlane.f32.xlu0 %v1036
      %v1038 = vpop.xlane.xlu0 %1037
      %v1039 = vsub.f32 %v1014, %v1023
      %v1040 = vsub.f32 %v1015, %v1026
      %v1041 = vsub.f32 %v1016, %v1029
      %v1042 = vsub.f32 %v1017, %v1032
      %v1043 = vsub.f32 %v1018, %v1035
      %v1044 = vsub.f32 %v1019, %v1038
      %v1045 = vmul.f32 %v1039, 1.442695
      %v1046 = vpow.pop %v1045
      %v1047 = vmul.f32 %v1040, 1.442695
      %v1048 = vpow.pop %v1047
      %v1049 = vmul.f32 %v1041, 1.442695
      %v1050 = vpow.pop %v1049
      %v1051 = vmul.f32 %v1042, 1.442695
      %v1052 = vpow.pop %v1051
      %v1053 = vmul.f32 %v1043, 1.442695
      %v1054 = vpow.pop %v1053
      %v1055 = vmul.f32 %v1044, 1.442695
      %v1056 = vpow.pop %v1055
      %v1057 = vsel %vm1020, %v1046, 0.0
      %1058 = vadd.xlane.f32.xlu0 %v1057
      %v1059 = vpop.xlane.xlu0 %1058
      %v1060 = vsel %vm1020, %v1048, 0.0
      %1061 = vadd.xlane.f32.xlu0 %v1060
      %v1062 = vpop.xlane.xlu0 %1061
      %v1063 = vsel %vm1020, %v1050, 0.0
      %1064 = vadd.xlane.f32.xlu0 %v1063
      %v1065 = vpop.xlane.xlu0 %1064
      %v1066 = vsel %vm1020, %v1052, 0.0
      %1067 = vadd.xlane.f32.xlu0 %v1066
      %v1068 = vpop.xlane.xlu0 %1067
      %v1069 = vsel %vm1020, %v1054, 0.0
      %1070 = vadd.xlane.f32.xlu0 %v1069
      %v1071 = vpop.xlane.xlu0 %1070
      %v1072 = vsel %vm1020, %v1056, 0.0
      %1073 = vadd.xlane.f32.xlu0 %v1072
      %v1074 = vpop.xlane.xlu0 %1073
      %v1075 = vrcp.pop %v1059
      %v1076 = vrcp.pop %v1062
      %v1077 = vrcp.pop %v1065
      %v1078 = vrcp.pop %v1068
      %v1079 = vrcp.pop %v1071
      %v1080 = vrcp.pop %v1074
      %v1081 = vmul.f32 %v1046, %v1075
      %v1082 = vmul.f32 %v1048, %v1076
      %v1083 = vmul.f32 %v1050, %v1077
      %v1084 = vmul.f32 %v1052, %v1078
      %v1085 = vmul.f32 %v1054, %v1079
      %v1086 = vmul.f32 %v1056, %v1080
      %v1087 = vmul.f32 %v1081, %v433
      %v1088 = vmul.f32 %v1082, %v433
      %v1089 = vmul.f32 %v1083, %v433
      %v1090 = vmul.f32 %v1084, %v433
      %v1091 = vmul.f32 %v1085, %v433
      %v1092 = vmul.f32 %v1086, %v433
      %v1093 = vadd.f32 %v1087, %v432
      %v1094 = vadd.f32 %v1088, %v432
      %v1095 = vadd.f32 %v1089, %v432
      %v1096 = vadd.f32 %v1090, %v432
      %v1097 = vadd.f32 %v1091, %v432
      %v1098 = vadd.f32 %v1092, %v432
      %v1099 = vld [vmem:[%s405] sm:$0x1]
      %v1101 = vlaneseq
      %v1102 = vshrl.u32 %v1101, 7
      %v1103 = vsub.s32 0, %v1102
      %v1104 = vrot.slane %v1099, %v1103
      %v1106 = vmul.f32 %v426, %v1104
      %v1107 = vmul.f32 %v427, %v1104
      %v1108 = vmul.f32 %v428, %v1104
      %v1109 = vmul.f32 %v429, %v1104
      %v1110 = vmul.f32 %v430, %v1104
      %v1111 = vmul.f32 %v431, %v1104
      %v1112 = vld [vmem:[%s408] sm:$0x1]
      %v1114 = vlaneseq
      %v1115 = vshrl.u32 %v1114, 7
      %v1116 = vsub.s32 0, %v1115
      %v1117 = vrot.slane %v1112, %v1116
      %v1119 = vadd.f32 %v1106, %v1117
      %v1120 = vadd.f32 %v1107, %v1117
      %v1121 = vadd.f32 %v1108, %v1117
      %v1122 = vadd.f32 %v1109, %v1117
      %v1123 = vadd.f32 %v1110, %v1117
      %v1124 = vadd.f32 %v1111, %v1117
      %v1126 = vsel %vm1020, %v1093, 0
      %1128 = vmatprep.subr.mxu0 0.0
      %1129 = vmatpush1.msra.mxu0 %v1119
      %1130 = vmatprep.subr.mxu0 0.0
      %1131 = vmatpush1.msra.mxu0 0.0
      %1132 = vmatprep.subr.mxu0 0.0
      %1133 = vmatpush1.msra.mxu0 0.0
      %1134 = vmatprep.subr.mxu0 0.0
      %1135 = vmatpush1.msra.mxu0 0.0
      %1136 = vmatprep.subr.mxu0 0.0
      %1137 = vmatpush1.msra.mxu0 0.0
      %1138 = vmatprep.subr.mxu0 0.0
      %1139 = vmatpush1.msra.mxu0 0.0
      %1140 = vmatprep.subr.mxu0 0.0
      %1141 = vmatpush1.msra.mxu0 0.0
      %1142 = vmatprep.subr.mxu0 0.0
      %1143 = vmatpush1.msra.mxu0 0.0
      %1144 = vmatprep.subr.mxu0 0.0
      %1145 = vmatpush1.msra.mxu0 0.0
      %1146 = vmatprep.subr.mxu0 0.0
      %1147 = vmatpush1.msra.mxu0 0.0
      %1148 = vmatprep.subr.mxu0 0.0
      %1149 = vmatpush1.msra.mxu0 0.0
      %1150 = vmatprep.subr.mxu0 0.0
      %1151 = vmatpush1.msra.mxu0 0.0
      %1152 = vmatprep.subr.mxu0 0.0
      %1153 = vmatpush1.msra.mxu0 0.0
      %1154 = vmatprep.subr.mxu0 0.0
      %1155 = vmatpush1.msra.mxu0 0.0
      %1156 = vmatprep.subr.mxu0 0.0
      %1157 = vmatpush1.msra.mxu0 0.0
      %1158 = vmatprep.subr.mxu0 0.0
      %1159 = vmatpush1.msra.mxu0 0.0
      %1160 = vmatprep.subr.mxu0 0.0
      %1161 = vmatpush1.msra.mxu0 0.0
      %1162 = vmatprep.subr.mxu0 0.0
      %1163 = vmatpush1.msra.mxu0 0.0
      %1164 = vmatprep.subr.mxu0 0.0
      %1165 = vmatpush1.msra.mxu0 0.0
      %1166 = vmatprep.subr.mxu0 0.0
      %1167 = vmatpush1.msra.mxu0 0.0
      %1168 = vmatprep.subr.mxu0 0.0
      %1169 = vmatpush1.msra.mxu0 0.0
      %1170 = vmatprep.subr.mxu0 0.0
      %1171 = vmatpush1.msra.mxu0 0.0
      %1172 = vmatprep.subr.mxu0 0.0
      %1173 = vmatpush1.msra.mxu0 0.0
      %1174 = vmatprep.subr.mxu0 0.0
      %1175 = vmatpush1.msra.mxu0 0.0
      %1176 = vmatprep.subr.mxu0 0.0
      %1177 = vmatpush1.msra.mxu0 0.0
      %1178 = vmatprep.subr.mxu0 0.0
      %1179 = vmatpush1.msra.mxu0 0.0
      %1180 = vmatprep.subr.mxu0 0.0
      %1181 = vmatpush1.msra.mxu0 0.0
      %1182 = vmatprep.subr.mxu0 0.0
      %1183 = vmatpush1.msra.mxu0 0.0
      %1184 = vmatprep.subr.mxu0 0.0
      %1185 = vmatpush1.msra.mxu0 0.0
      %1186 = vmatprep.subr.mxu0 0.0
      %1187 = vmatpush1.msra.mxu0 0.0
      %1188 = vmatprep.subr.mxu0 0.0
      %1189 = vmatpush1.msra.mxu0 0.0
      %1190 = vmatprep.subr.mxu0 0.0
      %1191 = vmatpush1.msra.mxu0 0.0
      %1192 = vmatprep.mubr.f32.mxu0 0.0
      %1193 = vmatmul.mubr.f32.gmra.mrb[0].mxu0 %v1126
      %v1194 = vpop.f32.mrb[0].mxu0
      %v1195 = vadd.f32 0.0, %v1194
      %v1196 = vpop.f32.mrb[0].mxu0
      %1197 = vdwg.mxu0
      %v1199 = vsel %vm1020, %v1094, 0
      %1201 = vmatprep.subr.mxu0 0.0
      %1202 = vmatpush1.msra.mxu0 %v1120
      %1203 = vmatprep.subr.mxu0 0.0
      %1204 = vmatpush1.msra.mxu0 0.0
      %1205 = vmatprep.subr.mxu0 0.0
      %1206 = vmatpush1.msra.mxu0 0.0
      %1207 = vmatprep.subr.mxu0 0.0
      %1208 = vmatpush1.msra.mxu0 0.0
      %1209 = vmatprep.subr.mxu0 0.0
      %1210 = vmatpush1.msra.mxu0 0.0
      %1211 = vmatprep.subr.mxu0 0.0
      %1212 = vmatpush1.msra.mxu0 0.0
      %1213 = vmatprep.subr.mxu0 0.0
      %1214 = vmatpush1.msra.mxu0 0.0
      %1215 = vmatprep.subr.mxu0 0.0
      %1216 = vmatpush1.msra.mxu0 0.0
      %1217 = vmatprep.subr.mxu0 0.0
      %1218 = vmatpush1.msra.mxu0 0.0
      %1219 = vmatprep.subr.mxu0 0.0
      %1220 = vmatpush1.msra.mxu0 0.0
      %1221 = vmatprep.subr.mxu0 0.0
      %1222 = vmatpush1.msra.mxu0 0.0
      %1223 = vmatprep.subr.mxu0 0.0
      %1224 = vmatpush1.msra.mxu0 0.0
      %1225 = vmatprep.subr.mxu0 0.0
      %1226 = vmatpush1.msra.mxu0 0.0
      %1227 = vmatprep.subr.mxu0 0.0
      %1228 = vmatpush1.msra.mxu0 0.0
      %1229 = vmatprep.subr.mxu0 0.0
      %1230 = vmatpush1.msra.mxu0 0.0
      %1231 = vmatprep.subr.mxu0 0.0
      %1232 = vmatpush1.msra.mxu0 0.0
      %1233 = vmatprep.subr.mxu0 0.0
      %1234 = vmatpush1.msra.mxu0 0.0
      %1235 = vmatprep.subr.mxu0 0.0
      %1236 = vmatpush1.msra.mxu0 0.0
      %1237 = vmatprep.subr.mxu0 0.0
      %1238 = vmatpush1.msra.mxu0 0.0
      %1239 = vmatprep.subr.mxu0 0.0
      %1240 = vmatpush1.msra.mxu0 0.0
      %1241 = vmatprep.subr.mxu0 0.0
      %1242 = vmatpush1.msra.mxu0 0.0
      %1243 = vmatprep.subr.mxu0 0.0
      %1244 = vmatpush1.msra.mxu0 0.0
      %1245 = vmatprep.subr.mxu0 0.0
      %1246 = vmatpush1.msra.mxu0 0.0
      %1247 = vmatprep.subr.mxu0 0.0
      %1248 = vmatpush1.msra.mxu0 0.0
      %1249 = vmatprep.subr.mxu0 0.0
      %1250 = vmatpush1.msra.mxu0 0.0
      %1251 = vmatprep.subr.mxu0 0.0
      %1252 = vmatpush1.msra.mxu0 0.0
      %1253 = vmatprep.subr.mxu0 0.0
      %1254 = vmatpush1.msra.mxu0 0.0
      %1255 = vmatprep.subr.mxu0 0.0
      %1256 = vmatpush1.msra.mxu0 0.0
      %1257 = vmatprep.subr.mxu0 0.0
      %1258 = vmatpush1.msra.mxu0 0.0
      %1259 = vmatprep.subr.mxu0 0.0
      %1260 = vmatpush1.msra.mxu0 0.0
      %1261 = vmatprep.subr.mxu0 0.0
      %1262 = vmatpush1.msra.mxu0 0.0
      %1263 = vmatprep.subr.mxu0 0.0
      %1264 = vmatpush1.msra.mxu0 0.0
      %1265 = vmatprep.mubr.f32.mxu0 0.0
      %1266 = vmatmul.mubr.f32.gmra.mrb[0].mxu0 %v1199
      %v1267 = vpop.f32.mrb[0].mxu0
      %v1268 = vadd.f32 0.0, %v1267
      %v1269 = vpop.f32.mrb[0].mxu0
      %1270 = vdwg.mxu0
      %v1272 = vsel %vm1020, %v1095, 0
      %1274 = vmatprep.subr.mxu0 0.0
      %1275 = vmatpush1.msra.mxu0 %v1121
      %1276 = vmatprep.subr.mxu0 0.0
      %1277 = vmatpush1.msra.mxu0 0.0
      %1278 = vmatprep.subr.mxu0 0.0
      %1279 = vmatpush1.msra.mxu0 0.0
      %1280 = vmatprep.subr.mxu0 0.0
      %1281 = vmatpush1.msra.mxu0 0.0
      %1282 = vmatprep.subr.mxu0 0.0
      %1283 = vmatpush1.msra.mxu0 0.0
      %1284 = vmatprep.subr.mxu0 0.0
      %1285 = vmatpush1.msra.mxu0 0.0
      %1286 = vmatprep.subr.mxu0 0.0
      %1287 = vmatpush1.msra.mxu0 0.0
      %1288 = vmatprep.subr.mxu0 0.0
      %1289 = vmatpush1.msra.mxu0 0.0
      %1290 = vmatprep.subr.mxu0 0.0
      %1291 = vmatpush1.msra.mxu0 0.0
      %1292 = vmatprep.subr.mxu0 0.0
      %1293 = vmatpush1.msra.mxu0 0.0
      %1294 = vmatprep.subr.mxu0 0.0
      %1295 = vmatpush1.msra.mxu0 0.0
      %1296 = vmatprep.subr.mxu0 0.0
      %1297 = vmatpush1.msra.mxu0 0.0
      %1298 = vmatprep.subr.mxu0 0.0
      %1299 = vmatpush1.msra.mxu0 0.0
      %1300 = vmatprep.subr.mxu0 0.0
      %1301 = vmatpush1.msra.mxu0 0.0
      %1302 = vmatprep.subr.mxu0 0.0
      %1303 = vmatpush1.msra.mxu0 0.0
      %1304 = vmatprep.subr.mxu0 0.0
      %1305 = vmatpush1.msra.mxu0 0.0
      %1306 = vmatprep.subr.mxu0 0.0
      %1307 = vmatpush1.msra.mxu0 0.0
      %1308 = vmatprep.subr.mxu0 0.0
      %1309 = vmatpush1.msra.mxu0 0.0
      %1310 = vmatprep.subr.mxu0 0.0
      %1311 = vmatpush1.msra.mxu0 0.0
      %1312 = vmatprep.subr.mxu0 0.0
      %1313 = vmatpush1.msra.mxu0 0.0
      %1314 = vmatprep.subr.mxu0 0.0
      %1315 = vmatpush1.msra.mxu0 0.0
      %1316 = vmatprep.subr.mxu0 0.0
      %1317 = vmatpush1.msra.mxu0 0.0
      %1318 = vmatprep.subr.mxu0 0.0
      %1319 = vmatpush1.msra.mxu0 0.0
      %1320 = vmatprep.subr.mxu0 0.0
      %1321 = vmatpush1.msra.mxu0 0.0
      %1322 = vmatprep.subr.mxu0 0.0
      %1323 = vmatpush1.msra.mxu0 0.0
      %1324 = vmatprep.subr.mxu0 0.0
      %1325 = vmatpush1.msra.mxu0 0.0
      %1326 = vmatprep.subr.mxu0 0.0
      %1327 = vmatpush1.msra.mxu0 0.0
      %1328 = vmatprep.subr.mxu0 0.0
      %1329 = vmatpush1.msra.mxu0 0.0
      %1330 = vmatprep.subr.mxu0 0.0
      %1331 = vmatpush1.msra.mxu0 0.0
      %1332 = vmatprep.subr.mxu0 0.0
      %1333 = vmatpush1.msra.mxu0 0.0
      %1334 = vmatprep.subr.mxu0 0.0
      %1335 = vmatpush1.msra.mxu0 0.0
      %1336 = vmatprep.subr.mxu0 0.0
      %1337 = vmatpush1.msra.mxu0 0.0
      %1338 = vmatprep.mubr.f32.mxu0 0.0
      %1339 = vmatmul.mubr.f32.gmra.mrb[0].mxu0 %v1272
      %v1340 = vpop.f32.mrb[0].mxu0
      %v1341 = vadd.f32 0.0, %v1340
      %v1342 = vpop.f32.mrb[0].mxu0
      %1343 = vdwg.mxu0
      %v1345 = vsel %vm1020, %v1096, 0
      %1347 = vmatprep.subr.mxu0 0.0
      %1348 = vmatpush1.msra.mxu0 %v1122
      %1349 = vmatprep.subr.mxu0 0.0
      %1350 = vmatpush1.msra.mxu0 0.0
      %1351 = vmatprep.subr.mxu0 0.0
      %1352 = vmatpush1.msra.mxu0 0.0
      %1353 = vmatprep.subr.mxu0 0.0
      %1354 = vmatpush1.msra.mxu0 0.0
      %1355 = vmatprep.subr.mxu0 0.0
      %1356 = vmatpush1.msra.mxu0 0.0
      %1357 = vmatprep.subr.mxu0 0.0
      %1358 = vmatpush1.msra.mxu0 0.0
      %1359 = vmatprep.subr.mxu0 0.0
      %1360 = vmatpush1.msra.mxu0 0.0
      %1361 = vmatprep.subr.mxu0 0.0
      %1362 = vmatpush1.msra.mxu0 0.0
      %1363 = vmatprep.subr.mxu0 0.0
      %1364 = vmatpush1.msra.mxu0 0.0
      %1365 = vmatprep.subr.mxu0 0.0
      %1366 = vmatpush1.msra.mxu0 0.0
      %1367 = vmatprep.subr.mxu0 0.0
      %1368 = vmatpush1.msra.mxu0 0.0
      %1369 = vmatprep.subr.mxu0 0.0
      %1370 = vmatpush1.msra.mxu0 0.0
      %1371 = vmatprep.subr.mxu0 0.0
      %1372 = vmatpush1.msra.mxu0 0.0
      %1373 = vmatprep.subr.mxu0 0.0
      %1374 = vmatpush1.msra.mxu0 0.0
      %1375 = vmatprep.subr.mxu0 0.0
      %1376 = vmatpush1.msra.mxu0 0.0
      %1377 = vmatprep.subr.mxu0 0.0
      %1378 = vmatpush1.msra.mxu0 0.0
      %1379 = vmatprep.subr.mxu0 0.0
      %1380 = vmatpush1.msra.mxu0 0.0
      %1381 = vmatprep.subr.mxu0 0.0
      %1382 = vmatpush1.msra.mxu0 0.0
      %1383 = vmatprep.subr.mxu0 0.0
      %1384 = vmatpush1.msra.mxu0 0.0
      %1385 = vmatprep.subr.mxu0 0.0
      %1386 = vmatpush1.msra.mxu0 0.0
      %1387 = vmatprep.subr.mxu0 0.0
      %1388 = vmatpush1.msra.mxu0 0.0
      %1389 = vmatprep.subr.mxu0 0.0
      %1390 = vmatpush1.msra.mxu0 0.0
      %1391 = vmatprep.subr.mxu0 0.0
      %1392 = vmatpush1.msra.mxu0 0.0
      %1393 = vmatprep.subr.mxu0 0.0
      %1394 = vmatpush1.msra.mxu0 0.0
      %1395 = vmatprep.subr.mxu0 0.0
      %1396 = vmatpush1.msra.mxu0 0.0
      %1397 = vmatprep.subr.mxu0 0.0
      %1398 = vmatpush1.msra.mxu0 0.0
      %1399 = vmatprep.subr.mxu0 0.0
      %1400 = vmatpush1.msra.mxu0 0.0
      %1401 = vmatprep.subr.mxu0 0.0
      %1402 = vmatpush1.msra.mxu0 0.0
      %1403 = vmatprep.subr.mxu0 0.0
      %1404 = vmatpush1.msra.mxu0 0.0
      %1405 = vmatprep.subr.mxu0 0.0
      %1406 = vmatpush1.msra.mxu0 0.0
      %1407 = vmatprep.subr.mxu0 0.0
      %1408 = vmatpush1.msra.mxu0 0.0
      %1409 = vmatprep.subr.mxu0 0.0
      %1410 = vmatpush1.msra.mxu0 0.0
      %1411 = vmatprep.mubr.f32.mxu0 0.0
      %1412 = vmatmul.mubr.f32.gmra.mrb[0].mxu0 %v1345
      %v1413 = vpop.f32.mrb[0].mxu0
      %v1414 = vadd.f32 0.0, %v1413
      %v1415 = vpop.f32.mrb[0].mxu0
      %1416 = vdwg.mxu0
      %v1418 = vsel %vm1020, %v1097, 0
      %1420 = vmatprep.subr.mxu0 0.0
      %1421 = vmatpush1.msra.mxu0 %v1123
      %1422 = vmatprep.subr.mxu0 0.0
      %1423 = vmatpush1.msra.mxu0 0.0
      %1424 = vmatprep.subr.mxu0 0.0
      %1425 = vmatpush1.msra.mxu0 0.0
      %1426 = vmatprep.subr.mxu0 0.0
      %1427 = vmatpush1.msra.mxu0 0.0
      %1428 = vmatprep.subr.mxu0 0.0
      %1429 = vmatpush1.msra.mxu0 0.0
      %1430 = vmatprep.subr.mxu0 0.0
      %1431 = vmatpush1.msra.mxu0 0.0
      %1432 = vmatprep.subr.mxu0 0.0
      %1433 = vmatpush1.msra.mxu0 0.0
      %1434 = vmatprep.subr.mxu0 0.0
      %1435 = vmatpush1.msra.mxu0 0.0
      %1436 = vmatprep.subr.mxu0 0.0
      %1437 = vmatpush1.msra.mxu0 0.0
      %1438 = vmatprep.subr.mxu0 0.0
      %1439 = vmatpush1.msra.mxu0 0.0
      %1440 = vmatprep.subr.mxu0 0.0
      %1441 = vmatpush1.msra.mxu0 0.0
      %1442 = vmatprep.subr.mxu0 0.0
      %1443 = vmatpush1.msra.mxu0 0.0
      %1444 = vmatprep.subr.mxu0 0.0
      %1445 = vmatpush1.msra.mxu0 0.0
      %1446 = vmatprep.subr.mxu0 0.0
      %1447 = vmatpush1.msra.mxu0 0.0
      %1448 = vmatprep.subr.mxu0 0.0
      %1449 = vmatpush1.msra.mxu0 0.0
      %1450 = vmatprep.subr.mxu0 0.0
      %1451 = vmatpush1.msra.mxu0 0.0
      %1452 = vmatprep.subr.mxu0 0.0
      %1453 = vmatpush1.msra.mxu0 0.0
      %1454 = vmatprep.subr.mxu0 0.0
      %1455 = vmatpush1.msra.mxu0 0.0
      %1456 = vmatprep.subr.mxu0 0.0
      %1457 = vmatpush1.msra.mxu0 0.0
      %1458 = vmatprep.subr.mxu0 0.0
      %1459 = vmatpush1.msra.mxu0 0.0
      %1460 = vmatprep.subr.mxu0 0.0
      %1461 = vmatpush1.msra.mxu0 0.0
      %1462 = vmatprep.subr.mxu0 0.0
      %1463 = vmatpush1.msra.mxu0 0.0
      %1464 = vmatprep.subr.mxu0 0.0
      %1465 = vmatpush1.msra.mxu0 0.0
      %1466 = vmatprep.subr.mxu0 0.0
      %1467 = vmatpush1.msra.mxu0 0.0
      %1468 = vmatprep.subr.mxu0 0.0
      %1469 = vmatpush1.msra.mxu0 0.0
      %1470 = vmatprep.subr.mxu0 0.0
      %1471 = vmatpush1.msra.mxu0 0.0
      %1472 = vmatprep.subr.mxu0 0.0
      %1473 = vmatpush1.msra.mxu0 0.0
      %1474 = vmatprep.subr.mxu0 0.0
      %1475 = vmatpush1.msra.mxu0 0.0
      %1476 = vmatprep.subr.mxu0 0.0
      %1477 = vmatpush1.msra.mxu0 0.0
      %1478 = vmatprep.subr.mxu0 0.0
      %1479 = vmatpush1.msra.mxu0 0.0
      %1480 = vmatprep.subr.mxu0 0.0
      %1481 = vmatpush1.msra.mxu0 0.0
      %1482 = vmatprep.subr.mxu0 0.0
      %1483 = vmatpush1.msra.mxu0 0.0
      %1484 = vmatprep.mubr.f32.mxu0 0.0
      %1485 = vmatmul.mubr.f32.gmra.mrb[0].mxu0 %v1418
      %v1486 = vpop.f32.mrb[0].mxu0
      %v1487 = vadd.f32 0.0, %v1486
      %v1488 = vpop.f32.mrb[0].mxu0
      %1489 = vdwg.mxu0
      %v1491 = vsel %vm1020, %v1098, 0
      %1493 = vmatprep.subr.mxu0 0.0
      %1494 = vmatpush1.msra.mxu0 %v1124
      %1495 = vmatprep.subr.mxu0 0.0
      %1496 = vmatpush1.msra.mxu0 0.0
      %1497 = vmatprep.subr.mxu0 0.0
      %1498 = vmatpush1.msra.mxu0 0.0
      %1499 = vmatprep.subr.mxu0 0.0
      %1500 = vmatpush1.msra.mxu0 0.0
      %1501 = vmatprep.subr.mxu0 0.0
      %1502 = vmatpush1.msra.mxu0 0.0
      %1503 = vmatprep.subr.mxu0 0.0
      %1504 = vmatpush1.msra.mxu0 0.0
      %1505 = vmatprep.subr.mxu0 0.0
      %1506 = vmatpush1.msra.mxu0 0.0
      %1507 = vmatprep.subr.mxu0 0.0
      %1508 = vmatpush1.msra.mxu0 0.0
      %1509 = vmatprep.subr.mxu0 0.0
      %1510 = vmatpush1.msra.mxu0 0.0
      %1511 = vmatprep.subr.mxu0 0.0
      %1512 = vmatpush1.msra.mxu0 0.0
      %1513 = vmatprep.subr.mxu0 0.0
      %1514 = vmatpush1.msra.mxu0 0.0
      %1515 = vmatprep.subr.mxu0 0.0
      %1516 = vmatpush1.msra.mxu0 0.0
      %1517 = vmatprep.subr.mxu0 0.0
      %1518 = vmatpush1.msra.mxu0 0.0
      %1519 = vmatprep.subr.mxu0 0.0
      %1520 = vmatpush1.msra.mxu0 0.0
      %1521 = vmatprep.subr.mxu0 0.0
      %1522 = vmatpush1.msra.mxu0 0.0
      %1523 = vmatprep.subr.mxu0 0.0
      %1524 = vmatpush1.msra.mxu0 0.0
      %1525 = vmatprep.subr.mxu0 0.0
      %1526 = vmatpush1.msra.mxu0 0.0
      %1527 = vmatprep.subr.mxu0 0.0
      %1528 = vmatpush1.msra.mxu0 0.0
      %1529 = vmatprep.subr.mxu0 0.0
      %1530 = vmatpush1.msra.mxu0 0.0
      %1531 = vmatprep.subr.mxu0 0.0
      %1532 = vmatpush1.msra.mxu0 0.0
      %1533 = vmatprep.subr.mxu0 0.0
      %1534 = vmatpush1.msra.mxu0 0.0
      %1535 = vmatprep.subr.mxu0 0.0
      %1536 = vmatpush1.msra.mxu0 0.0
      %1537 = vmatprep.subr.mxu0 0.0
      %1538 = vmatpush1.msra.mxu0 0.0
      %1539 = vmatprep.subr.mxu0 0.0
      %1540 = vmatpush1.msra.mxu0 0.0
      %1541 = vmatprep.subr.mxu0 0.0
      %1542 = vmatpush1.msra.mxu0 0.0
      %1543 = vmatprep.subr.mxu0 0.0
      %1544 = vmatpush1.msra.mxu0 0.0
      %1545 = vmatprep.subr.mxu0 0.0
      %1546 = vmatpush1.msra.mxu0 0.0
      %1547 = vmatprep.subr.mxu0 0.0
      %1548 = vmatpush1.msra.mxu0 0.0
      %1549 = vmatprep.subr.mxu0 0.0
      %1550 = vmatpush1.msra.mxu0 0.0
      %1551 = vmatprep.subr.mxu0 0.0
      %1552 = vmatpush1.msra.mxu0 0.0
      %1553 = vmatprep.subr.mxu0 0.0
      %1554 = vmatpush1.msra.mxu0 0.0
      %1555 = vmatprep.subr.mxu0 0.0
      %1556 = vmatpush1.msra.mxu0 0.0
      %1557 = vmatprep.mubr.f32.mxu0 0.0
      %1558 = vmatmul.mubr.f32.gmra.mrb[0].mxu0 %v1491
      %v1559 = vpop.f32.mrb[0].mxu0
      %v1560 = vadd.f32 0.0, %v1559
      %v1561 = vpop.f32.mrb[0].mxu0
      %1562 = vdwg.mxu0
      %v1563 = vld [vmem:[%s417] sm:$0xff]
      %v1564 = vld [vmem:[%s417 + $0x8] sm:$0xff]
      %v1565 = vld [vmem:[%s420] sm:$0x1]
      %v1567 = vlaneseq
      %v1568 = vshrl.u32 %v1567, 7
      %v1569 = vsub.s32 0, %v1568
      %v1570 = vrot.slane %v1565, %v1569
      %v1573 = vsel %vm443, %v1195, 0
      %v1576 = vsel %vm443, %v1268, 0
      %v1579 = vsel %vm443, %v1341, 0
      %v1582 = vsel %vm443, %v1414, 0
      %v1585 = vsel %vm443, %v1487, 0
      %v1588 = vsel %vm443, %v1560, 0
      %1590 = vmatprep.subr.mxu0 0.0
      %1591 = vmatpush1.msra.mxu0 %v1563
      %1592 = vmatprep.subr.mxu0 0.0
      %1593 = vmatpush1.msra.mxu0 %v1564
      %1594 = vmatprep.subr.mxu0 0.0
      %1595 = vmatpush1.msra.mxu0 0.0
      %1596 = vmatprep.subr.mxu0 0.0
      %1597 = vmatpush1.msra.mxu0 0.0
      %1598 = vmatprep.subr.mxu0 0.0
      %1599 = vmatpush1.msra.mxu0 0.0
      %1600 = vmatprep.subr.mxu0 0.0
      %1601 = vmatpush1.msra.mxu0 0.0
      %1602 = vmatprep.subr.mxu0 0.0
      %1603 = vmatpush1.msra.mxu0 0.0
      %1604 = vmatprep.subr.mxu0 0.0
      %1605 = vmatpush1.msra.mxu0 0.0
      %1606 = vmatprep.subr.mxu0 0.0
      %1607 = vmatpush1.msra.mxu0 0.0
      %1608 = vmatprep.subr.mxu0 0.0
      %1609 = vmatpush1.msra.mxu0 0.0
      %1610 = vmatprep.subr.mxu0 0.0
      %1611 = vmatpush1.msra.mxu0 0.0
      %1612 = vmatprep.subr.mxu0 0.0
      %1613 = vmatpush1.msra.mxu0 0.0
      %1614 = vmatprep.subr.mxu0 0.0
      %1615 = vmatpush1.msra.mxu0 0.0
      %1616 = vmatprep.subr.mxu0 0.0
      %1617 = vmatpush1.msra.mxu0 0.0
      %1618 = vmatprep.subr.mxu0 0.0
      %1619 = vmatpush1.msra.mxu0 0.0
      %1620 = vmatprep.subr.mxu0 0.0
      %1621 = vmatpush1.msra.mxu0 0.0
      %1622 = vmatprep.subr.mxu0 0.0
      %1623 = vmatpush1.msra.mxu0 0.0
      %1624 = vmatprep.subr.mxu0 0.0
      %1625 = vmatpush1.msra.mxu0 0.0
      %1626 = vmatprep.subr.mxu0 0.0
      %1627 = vmatpush1.msra.mxu0 0.0
      %1628 = vmatprep.subr.mxu0 0.0
      %1629 = vmatpush1.msra.mxu0 0.0
      %1630 = vmatprep.subr.mxu0 0.0
      %1631 = vmatpush1.msra.mxu0 0.0
      %1632 = vmatprep.subr.mxu0 0.0
      %1633 = vmatpush1.msra.mxu0 0.0
      %1634 = vmatprep.subr.mxu0 0.0
      %1635 = vmatpush1.msra.mxu0 0.0
      %1636 = vmatprep.subr.mxu0 0.0
      %1637 = vmatpush1.msra.mxu0 0.0
      %1638 = vmatprep.subr.mxu0 0.0
      %1639 = vmatpush1.msra.mxu0 0.0
      %1640 = vmatprep.subr.mxu0 0.0
      %1641 = vmatpush1.msra.mxu0 0.0
      %1642 = vmatprep.subr.mxu0 0.0
      %1643 = vmatpush1.msra.mxu0 0.0
      %1644 = vmatprep.subr.mxu0 0.0
      %1645 = vmatpush1.msra.mxu0 0.0
      %1646 = vmatprep.subr.mxu0 0.0
      %1647 = vmatpush1.msra.mxu0 0.0
      %1648 = vmatprep.subr.mxu0 0.0
      %1649 = vmatpush1.msra.mxu0 0.0
      %1650 = vmatprep.subr.mxu0 0.0
      %1651 = vmatpush1.msra.mxu0 0.0
      %1652 = vmatprep.subr.mxu0 0.0
      %1653 = vmatpush1.msra.mxu0 0.0
      %1654 = vmatprep.mubr.f32.mxu0 0.0
      %1655 = vmatmul.mubr.f32.gmra.mrb[0].mxu0 %v1573
      %v1656 = vpop.f32.mrb[0].mxu0
      %v1657 = vadd.f32 %v1570, %v1656
      %v1658 = vpop.f32.mrb[0].mxu0
      %1659 = vmatprep.mubr.f32.mxu0 0.0
      %1660 = vmatmul.mubr.f32.gmra.mrb[0].mxu0 %v1576
      %v1661 = vpop.f32.mrb[0].mxu0
      %v1662 = vadd.f32 %v1570, %v1661
      %v1663 = vpop.f32.mrb[0].mxu0
      %1664 = vmatprep.mubr.f32.mxu0 0.0
      %1665 = vmatmul.mubr.f32.gmra.mrb[0].mxu0 %v1579
      %v1666 = vpop.f32.mrb[0].mxu0
      %v1667 = vadd.f32 %v1570, %v1666
      %v1668 = vpop.f32.mrb[0].mxu0
      %1669 = vmatprep.mubr.f32.mxu0 0.0
      %1670 = vmatmul.mubr.f32.gmra.mrb[0].mxu0 %v1582
      %v1671 = vpop.f32.mrb[0].mxu0
      %v1672 = vadd.f32 %v1570, %v1671
      %v1673 = vpop.f32.mrb[0].mxu0
      %1674 = vmatprep.mubr.f32.mxu0 0.0
      %1675 = vmatmul.mubr.f32.gmra.mrb[0].mxu0 %v1585
      %v1676 = vpop.f32.mrb[0].mxu0
      %v1677 = vadd.f32 %v1570, %v1676
      %v1678 = vpop.f32.mrb[0].mxu0
      %1679 = vmatprep.mubr.f32.mxu0 0.0
      %1680 = vmatmul.mubr.f32.gmra.mrb[0].mxu0 %v1588
      %v1681 = vpop.f32.mrb[0].mxu0
      %v1682 = vadd.f32 %v1570, %v1681
      %v1683 = vpop.f32.mrb[0].mxu0
      %1684 = vdwg.mxu0
      %vm1685 = vcmp.gt.f32.partialorder %v1657, 0.0
      %vm1686 = vcmp.gt.f32.partialorder %v1662, 0.0
      %vm1687 = vcmp.gt.f32.partialorder %v1667, 0.0
      %vm1688 = vcmp.gt.f32.partialorder %v1672, 0.0
      %vm1689 = vcmp.gt.f32.partialorder %v1677, 0.0
      %vm1690 = vcmp.gt.f32.partialorder %v1682, 0.0
      %v1691 = vmul.f32 %v1657, 0.01
      %v1692 = vmul.f32 %v1662, 0.01
      %v1693 = vmul.f32 %v1667, 0.01
      %v1694 = vmul.f32 %v1672, 0.01
      %v1695 = vmul.f32 %v1677, 0.01
      %v1696 = vmul.f32 %v1682, 0.01
      %v1697 = vsel %vm1685, %v1657, %v1691
      %v1698 = vsel %vm1686, %v1662, %v1692
      %v1699 = vsel %vm1687, %v1667, %v1693
      %v1700 = vsel %vm1688, %v1672, %v1694
      %v1701 = vsel %vm1689, %v1677, %v1695
      %v1702 = vsel %vm1690, %v1682, %v1696
      %1703 = vst.msk [vmem:[%s425] sm:$0xff] %vm1020, %v1697
      %1704 = vst.msk [vmem:[%s425 + $0x8] sm:$0xff] %vm1020, %v1698
      %1705 = vst.msk [vmem:[%s425 + $0x10] sm:$0xff] %vm1020, %v1699
      %1706 = vst.msk [vmem:[%s425 + $0x18] sm:$0xff] %vm1020, %v1700
      %1707 = vst.msk [vmem:[%s425 + $0x20] sm:$0xff] %vm1020, %v1701
      %1708 = vst.msk [vmem:[%s425 + $0x28] sm:$0xff] %vm1020, %v1702
      %p1709 = scmp.lt.s32.totalorder %s20, 1
      %s1710 = scalar_select %p1709, %s20, 1
      %s1711 = smul.addr %s1710, 6
      %s1712 = smul.addr %s1711, 8
      %s1713 = scalar_lea.vmem %s9, %s1712
      // Predicated region
      $region57: #{model_forward.4} parent=55 // pred_check
        %p1714 = pneg %p262
      $region58: #{model_forward.4} parent=55 // pred_check_branch
        %1716 = sbr.rel (%p1714) target = $region60
      $region59: #{model_forward.4} parent=55 // pred_region
        _
      $region60: #{model_forward.4} parent=55 // pred_fallthru
        _
    $region56: #{model_forward.4} parent=5 // pred_fallthru
      _
    %p1717 = scmp.le.s32.totalorder 2, %s15
    // Predicated region
    $region61: #{model_forward.4} parent=5 // pred_check
      %p1718 = pneg %p1717
    $region62: #{model_forward.4} parent=5 // pred_check_branch
      %1720 = sbr.rel (%p1718) target = $region64
    $region63: #{model_forward.4} parent=5 // pred_region
      %s1721 = ssub.s32 %s15, 2
      // Predicated region
      $region65: #{model_forward.4} parent=63 // pred_check
        %p1722 = pneg %p268
      $region66: #{model_forward.4} parent=63 // pred_check_branch
        %1724 = sbr.rel (%p1722) target = $region68
      $region67: #{model_forward.4} parent=63 // pred_region
        %p1725 = scmp.lt.s32.totalorder %s21, 1
        %s1726 = scalar_select %p1725, %s21, 1
        %s1727 = smul.addr %s1726, 6
        %s1728 = smul.addr %s1727, 8
        %s1729 = scalar_lea.vmem %s9, %s1728
      $region68: #{model_forward.4} parent=63 // pred_fallthru
        _
    $region64: #{model_forward.4} parent=5 // pred_fallthru
      _
  $region6: #{model_forward.4} parent=0 // loop_footer
    %s19 = sadd.s32 1, %s15
  $region7: #{model_forward.4} parent=0 // loop_footer_branch
    %14 = sbr.rel target = $region3
  $region8: #{model_forward.4} parent=0 // loop_exit
    _

// kernel: model_forward.5
$region0: #{model_forward.5}
  #allocation0 [shape = 'u32[]', space=smem, size = 0x4, offset = 0x4, fixed_abs, tag = 'smem constant byte address 0x4 - core index']
  #allocation1 [shape = 'u32[144,128]{1,0:T(1,128)}', space=vmem, size = 0x12000, scoped, tag = 'internal scratch']
  %s0 = inlined_call_operand.vmem [shape: f32[2,192], index: 0, kind: input, shape index: {}]
  %s1 = inlined_call_operand.vmem [shape: f32[192,16], index: 1, kind: input, shape index: {}]
  %s2 = inlined_call_operand.vmem [shape: f32[1,16], index: 2, kind: input, shape index: {}]
  %s3 = inlined_call_operand.vmem [shape: f32[16,16], index: 3, kind: input, shape index: {}]
  %s4 = inlined_call_operand.vmem [shape: f32[1,16], index: 4, kind: input, shape index: {}]
  %s5 = inlined_call_operand.vmem [shape: f32[16,8], index: 5, kind: input, shape index: {}]
  %s6 = inlined_call_operand.vmem [shape: f32[1,8], index: 6, kind: input, shape index: {}]
  %s7 = inlined_call_operand.vmem [shape: f32[8,5], index: 7, kind: input, shape index: {}]
  %s8 = inlined_call_operand.vmem [shape: f32[1,5], index: 8, kind: input, shape index: {}]
  %s9 = inlined_call_operand.hbm [shape: f32[2,5], index: 9, kind: output, shape index: {}]
  %s10 = sld [smem:[#allocation0]]
  $region46: #{model_forward.5} parent=0
    _
  %s12 = ssub.s32 1, %s10
  %s13 = scalar_select 0, %s12, %s10
  $region1: #{model_forward.5} parent=0
    #allocation2 [shape = 'u8[1024]{0}', space=vmem, size = 0x400, scoped, tag = 'output window, operand 0, single buffered']
    #allocation3 [shape = 's32[1]{0}', space=sflag, size = 0x4, scoped, tag = 'scoped memory for model_forward.5']
    %14 = vsyncpa [#allocation3], 0
    // Predicated region
    $region2: #{model_forward.5} parent=1 // pred_check
      _
    $region3: #{model_forward.5} parent=1 // pred_check_branch
      %16 = sbr.rel (0) target = $region5
    $region4: #{model_forward.5} parent=1 // pred_region
      _
    $region5: #{model_forward.5} parent=1 // pred_fallthru
      _
    // Predicated region
    $region6: #{model_forward.5} parent=1 // pred_check
      _
    $region7: #{model_forward.5} parent=1 // pred_check_branch
      %18 = sbr.rel (0) target = $region9
    $region8: #{model_forward.5} parent=1 // pred_region
      _
    $region9: #{model_forward.5} parent=1 // pred_fallthru
      _
    // Predicated region
    $region10: #{model_forward.5} parent=1 // pred_check
      _
    $region11: #{model_forward.5} parent=1 // pred_check_branch
      %20 = sbr.rel (0) target = $region13
    $region12: #{model_forward.5} parent=1 // pred_region
      _
    $region13: #{model_forward.5} parent=1 // pred_fallthru
      _
    // Predicated region
    $region14: #{model_forward.5} parent=1 // pred_check
      _
    $region15: #{model_forward.5} parent=1 // pred_check_branch
      %22 = sbr.rel (0) target = $region17
    $region16: #{model_forward.5} parent=1 // pred_region
      _
    $region17: #{model_forward.5} parent=1 // pred_fallthru
      _
    // Predicated region
    $region18: #{model_forward.5} parent=1 // pred_check
      _
    $region19: #{model_forward.5} parent=1 // pred_check_branch
      %24 = sbr.rel (0) target = $region21
    $region20: #{model_forward.5} parent=1 // pred_region
      _
    $region21: #{model_forward.5} parent=1 // pred_fallthru
      _
    // Predicated region
    $region22: #{model_forward.5} parent=1 // pred_check
      _
    $region23: #{model_forward.5} parent=1 // pred_check_branch
      %26 = sbr.rel (0) target = $region25
    $region24: #{model_forward.5} parent=1 // pred_region
      _
    $region25: #{model_forward.5} parent=1 // pred_fallthru
      _
    // Predicated region
    $region26: #{model_forward.5} parent=1 // pred_check
      _
    $region27: #{model_forward.5} parent=1 // pred_check_branch
      %28 = sbr.rel (0) target = $region29
    $region28: #{model_forward.5} parent=1 // pred_region
      _
    $region29: #{model_forward.5} parent=1 // pred_fallthru
      _
    // Predicated region
    $region30: #{model_forward.5} parent=1 // pred_check
      _
    $region31: #{model_forward.5} parent=1 // pred_check_branch
      %30 = sbr.rel (0) target = $region33
    $region32: #{model_forward.5} parent=1 // pred_region
      _
    $region33: #{model_forward.5} parent=1 // pred_fallthru
      _
    // Predicated region
    $region34: #{model_forward.5} parent=1 // pred_check
      _
    $region35: #{model_forward.5} parent=1 // pred_check_branch
      %32 = sbr.rel (0) target = $region37
    $region36: #{model_forward.5} parent=1 // pred_region
      _
    $region37: #{model_forward.5} parent=1 // pred_fallthru
      _
    %v33 = vld [vmem:[%s0] sm:$0xf]
    %v34 = vld [vmem:[%s1] sm:$0xff]
    %v35 = vld [vmem:[%s1 + $0x8] sm:$0xff]
    %v36 = vld [vmem:[%s1 + $0x10] sm:$0xff]
    %v37 = vld [vmem:[%s1 + $0x18] sm:$0xff]
    %v38 = vld [vmem:[%s1 + $0x20] sm:$0xff]
    %v39 = vld [vmem:[%s1 + $0x28] sm:$0xff]
    %v40 = vld [vmem:[%s1 + $0x30] sm:$0xff]
    %v41 = vld [vmem:[%s1 + $0x38] sm:$0xff]
    %v42 = vld [vmem:[%s1 + $0x40] sm:$0xff]
    %v43 = vld [vmem:[%s1 + $0x48] sm:$0xff]
    %v44 = vld [vmem:[%s1 + $0x50] sm:$0xff]
    %v45 = vld [vmem:[%s1 + $0x58] sm:$0xff]
    %v46 = vld [vmem:[%s1 + $0x60] sm:$0xff]
    %v47 = vld [vmem:[%s1 + $0x68] sm:$0xff]
    %v48 = vld [vmem:[%s1 + $0x70] sm:$0xff]
    %v49 = vld [vmem:[%s1 + $0x78] sm:$0xff]
    %v50 = vld [vmem:[%s1 + $0x80] sm:$0xff]
    %v51 = vld [vmem:[%s1 + $0x88] sm:$0xff]
    %v52 = vld [vmem:[%s1 + $0x90] sm:$0xff]
    %v53 = vld [vmem:[%s1 + $0x98] sm:$0xff]
    %v54 = vld [vmem:[%s1 + $0xa0] sm:$0xff]
    %v55 = vld [vmem:[%s1 + $0xa8] sm:$0xff]
    %v56 = vld [vmem:[%s1 + $0xb0] sm:$0xff]
    %v57 = vld [vmem:[%s1 + $0xb8] sm:$0xff]
    %v58 = vld [vmem:[%s2] sm:$0x1]
    %v60 = vlaneseq
    %v61 = vshrl.u32 %v60, 7
    %v62 = vsub.s32 0, %v61
    %v63 = vrot.slane %v58, %v62
    %v67 = vunpack.c.l.s4 1983009808
    %v68 = vunpack.c.0.s8 %v67
    %v69 = vlaneseq
    %v70 = vshrl.u32 %v69, 7
    %v71 = vsub.s32 %v68, %v70
    %v72 = vrot.slane %v33, %v71
    %v73 = vcombine.high %v72, %v72
    %vm75 = vcmask 523264
    %v76 = vsel %vm75, %v73, 0
    %78 = vmatprep.subr.mxu0 0.0
    %79 = vmatpush1.msra.mxu0 %v34
    %80 = vmatprep.subr.mxu0 0.0
    %81 = vmatpush1.msra.mxu0 %v35
    %82 = vmatprep.subr.mxu0 0.0
    %83 = vmatpush1.msra.mxu0 %v36
    %84 = vmatprep.subr.mxu0 0.0
    %85 = vmatpush1.msra.mxu0 %v37
    %86 = vmatprep.subr.mxu0 0.0
    %87 = vmatpush1.msra.mxu0 %v38
    %88 = vmatprep.subr.mxu0 0.0
    %89 = vmatpush1.msra.mxu0 %v39
    %90 = vmatprep.subr.mxu0 0.0
    %91 = vmatpush1.msra.mxu0 %v40
    %92 = vmatprep.subr.mxu0 0.0
    %93 = vmatpush1.msra.mxu0 %v41
    %94 = vmatprep.subr.mxu0 0.0
    %95 = vmatpush1.msra.mxu0 %v42
    %96 = vmatprep.subr.mxu0 0.0
    %97 = vmatpush1.msra.mxu0 %v43
    %98 = vmatprep.subr.mxu0 0.0
    %99 = vmatpush1.msra.mxu0 %v44
    %100 = vmatprep.subr.mxu0 0.0
    %101 = vmatpush1.msra.mxu0 %v45
    %102 = vmatprep.subr.mxu0 0.0
    %103 = vmatpush1.msra.mxu0 %v46
    %104 = vmatprep.subr.mxu0 0.0
    %105 = vmatpush1.msra.mxu0 %v47
    %106 = vmatprep.subr.mxu0 0.0
    %107 = vmatpush1.msra.mxu0 %v48
    %108 = vmatprep.subr.mxu0 0.0
    %109 = vmatpush1.msra.mxu0 %v49
    %110 = vmatprep.subr.mxu0 0.0
    %111 = vmatpush1.msra.mxu0 %v50
    %112 = vmatprep.subr.mxu0 0.0
    %113 = vmatpush1.msra.mxu0 %v51
    %114 = vmatprep.subr.mxu0 0.0
    %115 = vmatpush1.msra.mxu0 %v52
    %116 = vmatprep.subr.mxu0 0.0
    %117 = vmatpush1.msra.mxu0 %v53
    %118 = vmatprep.subr.mxu0 0.0
    %119 = vmatpush1.msra.mxu0 %v54
    %120 = vmatprep.subr.mxu0 0.0
    %121 = vmatpush1.msra.mxu0 %v55
    %122 = vmatprep.subr.mxu0 0.0
    %123 = vmatpush1.msra.mxu0 %v56
    %124 = vmatprep.subr.mxu0 0.0
    %125 = vmatpush1.msra.mxu0 %v57
    %126 = vmatprep.subr.mxu0 0.0
    %127 = vmatpush1.msra.mxu0 0.0
    %128 = vmatprep.subr.mxu0 0.0
    %129 = vmatpush1.msra.mxu0 0.0
    %130 = vmatprep.subr.mxu0 0.0
    %131 = vmatpush1.msra.mxu0 0.0
    %132 = vmatprep.subr.mxu0 0.0
    %133 = vmatpush1.msra.mxu0 0.0
    %134 = vmatprep.subr.mxu0 0.0
    %135 = vmatpush1.msra.mxu0 0.0
    %136 = vmatprep.subr.mxu0 0.0
    %137 = vmatpush1.msra.mxu0 0.0
    %138 = vmatprep.subr.mxu0 0.0
    %139 = vmatpush1.msra.mxu0 0.0
    %140 = vmatprep.subr.mxu0 0.0
    %141 = vmatpush1.msra.mxu0 0.0
    %142 = vmatprep.mubr.f32.mxu0 %v76
    %143 = vmatmul.mubr.f32.gmra.mrb[0].mxu0 %v72
    %v144 = vpop.f32.mrb[0].mxu0
    %v145 = vadd.f32 %v63, %v144
    %v146 = vpop.f32.mrb[0].mxu0
    %147 = vdwg.mxu0
    %v148 = vmax.f32 %v145, 0.0
    %v149 = vld [vmem:[%s3] sm:$0xff]
    %v150 = vld [vmem:[%s3 + $0x8] sm:$0xff]
    %v151 = vld [vmem:[%s4] sm:$0x1]
    %v153 = vlaneseq
    %v154 = vshrl.u32 %v153, 7
    %v155 = vsub.s32 0, %v154
    %v156 = vrot.slane %v151, %v155
    %vm158 = vcmask 130048
    %v160 = vsel %vm158, %v148, 0
    %162 = vmatprep.subr.mxu0 0.0
    %163 = vmatpush1.msra.mxu0 %v149
    %164 = vmatprep.subr.mxu0 0.0
    %165 = vmatpush1.msra.mxu0 %v150
    %166 = vmatprep.subr.mxu0 0.0
    %167 = vmatpush1.msra.mxu0 0.0
    %168 = vmatprep.subr.mxu0 0.0
    %169 = vmatpush1.msra.mxu0 0.0
    %170 = vmatprep.subr.mxu0 0.0
    %171 = vmatpush1.msra.mxu0 0.0
    %172 = vmatprep.subr.mxu0 0.0
    %173 = vmatpush1.msra.mxu0 0.0
    %174 = vmatprep.subr.mxu0 0.0
    %175 = vmatpush1.msra.mxu0 0.0
    %176 = vmatprep.subr.mxu0 0.0
    %177 = vmatpush1.msra.mxu0 0.0
    %178 = vmatprep.subr.mxu0 0.0
    %179 = vmatpush1.msra.mxu0 0.0
    %180 = vmatprep.subr.mxu0 0.0
    %181 = vmatpush1.msra.mxu0 0.0
    %182 = vmatprep.subr.mxu0 0.0
    %183 = vmatpush1.msra.mxu0 0.0
    %184 = vmatprep.subr.mxu0 0.0
    %185 = vmatpush1.msra.mxu0 0.0
    %186 = vmatprep.subr.mxu0 0.0
    %187 = vmatpush1.msra.mxu0 0.0
    %188 = vmatprep.subr.mxu0 0.0
    %189 = vmatpush1.msra.mxu0 0.0
    %190 = vmatprep.subr.mxu0 0.0
    %191 = vmatpush1.msra.mxu0 0.0
    %192 = vmatprep.subr.mxu0 0.0
    %193 = vmatpush1.msra.mxu0 0.0
    %194 = vmatprep.subr.mxu0 0.0
    %195 = vmatpush1.msra.mxu0 0.0
    %196 = vmatprep.subr.mxu0 0.0
    %197 = vmatpush1.msra.mxu0 0.0
    %198 = vmatprep.subr.mxu0 0.0
    %199 = vmatpush1.msra.mxu0 0.0
    %200 = vmatprep.subr.mxu0 0.0
    %201 = vmatpush1.msra.mxu0 0.0
    %202 = vmatprep.subr.mxu0 0.0
    %203 = vmatpush1.msra.mxu0 0.0
    %204 = vmatprep.subr.mxu0 0.0
    %205 = vmatpush1.msra.mxu0 0.0
    %206 = vmatprep.subr.mxu0 0.0
    %207 = vmatpush1.msra.mxu0 0.0
    %208 = vmatprep.subr.mxu0 0.0
    %209 = vmatpush1.msra.mxu0 0.0
    %210 = vmatprep.subr.mxu0 0.0
    %211 = vmatpush1.msra.mxu0 0.0
    %212 = vmatprep.subr.mxu0 0.0
    %213 = vmatpush1.msra.mxu0 0.0
    %214 = vmatprep.subr.mxu0 0.0
    %215 = vmatpush1.msra.mxu0 0.0
    %216 = vmatprep.subr.mxu0 0.0
    %217 = vmatpush1.msra.mxu0 0.0
    %218 = vmatprep.subr.mxu0 0.0
    %219 = vmatpush1.msra.mxu0 0.0
    %220 = vmatprep.subr.mxu0 0.0
    %221 = vmatpush1.msra.mxu0 0.0
    %222 = vmatprep.subr.mxu0 0.0
    %223 = vmatpush1.msra.mxu0 0.0
    %224 = vmatprep.subr.mxu0 0.0
    %225 = vmatpush1.msra.mxu0 0.0
    %226 = vmatprep.mubr.f32.mxu0 0.0
    %227 = vmatmul.mubr.f32.gmra.mrb[0].mxu0 %v160
    %v228 = vpop.f32.mrb[0].mxu0
    %v229 = vadd.f32 %v156, %v228
    %v230 = vpop.f32.mrb[0].mxu0
    %231 = vdwg.mxu0
    %v232 = vmax.f32 %v229, 0.0
    %v233 = vld [vmem:[%s5] sm:$0xff]
    %v234 = vld [vmem:[%s5 + $0x8] sm:$0xff]
    %v235 = vld [vmem:[%s6] sm:$0x1]
    %v237 = vlaneseq
    %v238 = vshrl.u32 %v237, 7
    %v239 = vsub.s32 0, %v238
    %v240 = vrot.slane %v235, %v239
    %v243 = vsel %vm158, %v232, 0
    %245 = vmatprep.subr.mxu0 0.0
    %246 = vmatpush1.msra.mxu0 %v233
    %247 = vmatprep.subr.mxu0 0.0
    %248 = vmatpush1.msra.mxu0 %v234
    %249 = vmatprep.subr.mxu0 0.0
    %250 = vmatpush1.msra.mxu0 0.0
    %251 = vmatprep.subr.mxu0 0.0
    %252 = vmatpush1.msra.mxu0 0.0
    %253 = vmatprep.subr.mxu0 0.0
    %254 = vmatpush1.msra.mxu0 0.0
    %255 = vmatprep.subr.mxu0 0.0
    %256 = vmatpush1.msra.mxu0 0.0
    %257 = vmatprep.subr.mxu0 0.0
    %258 = vmatpush1.msra.mxu0 0.0
    %259 = vmatprep.subr.mxu0 0.0
    %260 = vmatpush1.msra.mxu0 0.0
    %261 = vmatprep.subr.mxu0 0.0
    %262 = vmatpush1.msra.mxu0 0.0
    %263 = vmatprep.subr.mxu0 0.0
    %264 = vmatpush1.msra.mxu0 0.0
    %265 = vmatprep.subr.mxu0 0.0
    %266 = vmatpush1.msra.mxu0 0.0
    %267 = vmatprep.subr.mxu0 0.0
    %268 = vmatpush1.msra.mxu0 0.0
    %269 = vmatprep.subr.mxu0 0.0
    %270 = vmatpush1.msra.mxu0 0.0
    %271 = vmatprep.subr.mxu0 0.0
    %272 = vmatpush1.msra.mxu0 0.0
    %273 = vmatprep.subr.mxu0 0.0
    %274 = vmatpush1.msra.mxu0 0.0
    %275 = vmatprep.subr.mxu0 0.0
    %276 = vmatpush1.msra.mxu0 0.0
    %277 = vmatprep.subr.mxu0 0.0
    %278 = vmatpush1.msra.mxu0 0.0
    %279 = vmatprep.subr.mxu0 0.0
    %280 = vmatpush1.msra.mxu0 0.0
    %281 = vmatprep.subr.mxu0 0.0
    %282 = vmatpush1.msra.mxu0 0.0
    %283 = vmatprep.subr.mxu0 0.0
    %284 = vmatpush1.msra.mxu0 0.0
    %285 = vmatprep.subr.mxu0 0.0
    %286 = vmatpush1.msra.mxu0 0.0
    %287 = vmatprep.subr.mxu0 0.0
    %288 = vmatpush1.msra.mxu0 0.0
    %289 = vmatprep.subr.mxu0 0.0
    %290 = vmatpush1.msra.mxu0 0.0
    %291 = vmatprep.subr.mxu0 0.0
    %292 = vmatpush1.msra.mxu0 0.0
    %293 = vmatprep.subr.mxu0 0.0
    %294 = vmatpush1.msra.mxu0 0.0
    %295 = vmatprep.subr.mxu0 0.0
    %296 = vmatpush1.msra.mxu0 0.0
    %297 = vmatprep.subr.mxu0 0.0
    %298 = vmatpush1.msra.mxu0 0.0
    %299 = vmatprep.subr.mxu0 0.0
    %300 = vmatpush1.msra.mxu0 0.0
    %301 = vmatprep.subr.mxu0 0.0
    %302 = vmatpush1.msra.mxu0 0.0
    %303 = vmatprep.subr.mxu0 0.0
    %304 = vmatpush1.msra.mxu0 0.0
    %305 = vmatprep.subr.mxu0 0.0
    %306 = vmatpush1.msra.mxu0 0.0
    %307 = vmatprep.subr.mxu0 0.0
    %308 = vmatpush1.msra.mxu0 0.0
    %309 = vmatprep.mubr.f32.mxu0 0.0
    %310 = vmatmul.mubr.f32.gmra.mrb[0].mxu0 %v243
    %v311 = vpop.f32.mrb[0].mxu0
    %v312 = vadd.f32 %v240, %v311
    %v313 = vpop.f32.mrb[0].mxu0
    %314 = vdwg.mxu0
    %v315 = vmax.f32 %v312, 0.0
    %v316 = vld [vmem:[%s7] sm:$0xff]
    %v317 = vld [vmem:[%s8] sm:$0x1]
    %v319 = vlaneseq
    %v320 = vshrl.u32 %v319, 7
    %v321 = vsub.s32 0, %v320
    %v322 = vrot.slane %v317, %v321
    %vm324 = vcmask 64512
    %v326 = vsel %vm324, %v315, 0
    %328 = vmatprep.subr.mxu0 0.0
    %329 = vmatpush1.msra.mxu0 %v316
    %330 = vmatprep.subr.mxu0 0.0
    %331 = vmatpush1.msra.mxu0 0.0
    %332 = vmatprep.subr.mxu0 0.0
    %333 = vmatpush1.msra.mxu0 0.0
    %334 = vmatprep.subr.mxu0 0.0
    %335 = vmatpush1.msra.mxu0 0.0
    %336 = vmatprep.subr.mxu0 0.0
    %337 = vmatpush1.msra.mxu0 0.0
    %338 = vmatprep.subr.mxu0 0.0
    %339 = vmatpush1.msra.mxu0 0.0
    %340 = vmatprep.subr.mxu0 0.0
    %341 = vmatpush1.msra.mxu0 0.0
    %342 = vmatprep.subr.mxu0 0.0
    %343 = vmatpush1.msra.mxu0 0.0
    %344 = vmatprep.subr.mxu0 0.0
    %345 = vmatpush1.msra.mxu0 0.0
    %346 = vmatprep.subr.mxu0 0.0
    %347 = vmatpush1.msra.mxu0 0.0
    %348 = vmatprep.subr.mxu0 0.0
    %349 = vmatpush1.msra.mxu0 0.0
    %350 = vmatprep.subr.mxu0 0.0
    %351 = vmatpush1.msra.mxu0 0.0
    %352 = vmatprep.subr.mxu0 0.0
    %353 = vmatpush1.msra.mxu0 0.0
    %354 = vmatprep.subr.mxu0 0.0
    %355 = vmatpush1.msra.mxu0 0.0
    %356 = vmatprep.subr.mxu0 0.0
    %357 = vmatpush1.msra.mxu0 0.0
    %358 = vmatprep.subr.mxu0 0.0
    %359 = vmatpush1.msra.mxu0 0.0
    %360 = vmatprep.subr.mxu0 0.0
    %361 = vmatpush1.msra.mxu0 0.0
    %362 = vmatprep.subr.mxu0 0.0
    %363 = vmatpush1.msra.mxu0 0.0
    %364 = vmatprep.subr.mxu0 0.0
    %365 = vmatpush1.msra.mxu0 0.0
    %366 = vmatprep.subr.mxu0 0.0
    %367 = vmatpush1.msra.mxu0 0.0
    %368 = vmatprep.subr.mxu0 0.0
    %369 = vmatpush1.msra.mxu0 0.0
    %370 = vmatprep.subr.mxu0 0.0
    %371 = vmatpush1.msra.mxu0 0.0
    %372 = vmatprep.subr.mxu0 0.0
    %373 = vmatpush1.msra.mxu0 0.0
    %374 = vmatprep.subr.mxu0 0.0
    %375 = vmatpush1.msra.mxu0 0.0
    %376 = vmatprep.subr.mxu0 0.0
    %377 = vmatpush1.msra.mxu0 0.0
    %378 = vmatprep.subr.mxu0 0.0
    %379 = vmatpush1.msra.mxu0 0.0
    %380 = vmatprep.subr.mxu0 0.0
    %381 = vmatpush1.msra.mxu0 0.0
    %382 = vmatprep.subr.mxu0 0.0
    %383 = vmatpush1.msra.mxu0 0.0
    %384 = vmatprep.subr.mxu0 0.0
    %385 = vmatpush1.msra.mxu0 0.0
    %386 = vmatprep.subr.mxu0 0.0
    %387 = vmatpush1.msra.mxu0 0.0
    %388 = vmatprep.subr.mxu0 0.0
    %389 = vmatpush1.msra.mxu0 0.0
    %390 = vmatprep.subr.mxu0 0.0
    %391 = vmatpush1.msra.mxu0 0.0
    %392 = vmatprep.mubr.f32.mxu0 0.0
    %393 = vmatmul.mubr.f32.gmra.mrb[0].mxu0 %v326
    %v394 = vpop.f32.mrb[0].mxu0
    %v395 = vadd.f32 %v322, %v394
    %v396 = vpop.f32.mrb[0].mxu0
    %397 = vdwg.mxu0
    %vm398 = vcmask 33792
    %399 = vst.msk [vmem:[#allocation2] sm:$0x3] %vm398, %v395
    // Predicated region
    $region38: #{model_forward.5} parent=1 // pred_check
      _
    $region39: #{model_forward.5} parent=1 // pred_check_branch
      %401 = sbr.rel (0) target = $region41
    $region40: #{model_forward.5} parent=1 // pred_region
      %s403 = ssub.s32 32, 32
      %404 = vsyncadd [#allocation3], %s403
      %s406 = sshll.u32 [#allocation2], 4
      %s407 = int_to_ptr.vmem [resolvable:$true] %s406
      %409 = dma.vmem_to_hbm [thread:$0]  %s407, 32, %s9, [#allocation3]
    $region41: #{model_forward.5} parent=1 // pred_fallthru
      _
    // Predicated region
    $region42: #{model_forward.5} parent=1 // pred_check
      _
    $region43: #{model_forward.5} parent=1 // pred_check_branch
      %411 = sbr.rel (0) target = $region45
    $region44: #{model_forward.5} parent=1 // pred_region
      %412 = dma.done [#allocation3], 32
    $region45: #{model_forward.5} parent=1 // pred_fallthru
      _
    %413 = vsyncpa [#allocation3], 1

</llo_original>
